<compile_context>
chip_gen: v5e
topology: v5e:2x2
jax: 0.10.0
libtpu: 0.0.40
codegen_flags: <defaults>
</compile_context>

<pallas_src>
import functools
import math

import jax
import jax.numpy as jnp
from jax import lax
from jax.experimental import pallas as pl
from jax.experimental.pallas import tpu as pltpu


_MASK = -0.7 * float(jnp.finfo(jnp.float32).max)   # finite mask value: no -inf / NaN paths


# ------------------------------ small helpers --------------------------------

def _rup(v, m):
    return -(-v // m) * m


def _vmem_budget_and_multicore():
    """(usable VMEM budget bytes, likely multi-TensorCore chip?).

    ~96 MiB on 128 MiB parts (v5e/v6e), ~48 MiB on 64 MiB parts (v7x, which also has two
    TensorCores per chip sharing the "parallel" grid axes)."""
    try:
        phys = int(pltpu.get_tpu_info().vmem_capacity_bytes)
    except Exception:
        phys = 128 << 20
    return (phys * 3) // 4, phys <= (64 << 20)


def _pick_tile(dim, target, gran):
    """Largest tile <= target that divides `dim` and is a multiple of `gran`; else full dim."""
    if dim <= target:
        return dim
    cand = (target // gran) * gran
    while cand >= gran:
        if dim % cand == 0:
            return cand
        cand -= gran
    return dim


def _shrink_tile(dim, cur, gran):
    """Strictly smaller legal tile than `cur`, or `cur` if impossible."""
    cand = ((cur // 2) // gran) * gran
    while cand >= gran:
        if dim % cand == 0:
            return cand
        cand -= gran
    return cur


# ------------------------- tiled linear (x @ W + b) ---------------------------

def _linear_kernel(x_ref, w_ref, b_ref, o_ref, acc_ref):
    k = pl.program_id(2)

    @pl.when(k == 0)
    def _init():
        acc_ref[...] = jnp.zeros_like(acc_ref)

    # Cast tiles to bf16 inside the kernel (no separate HBM cast pass in the wrapper).
    acc_ref[...] += jnp.dot(x_ref[...].astype(jnp.bfloat16),
                            w_ref[...].astype(jnp.bfloat16),
                            preferred_element_type=jnp.float32)

    @pl.when(k == pl.num_programs(2) - 1)
    def _finalize():
        o_ref[...] = (acc_ref[...] + b_ref[...]).astype(o_ref.dtype)


def _linear(x, w, b, *, out_dtype):
    """y = x @ w + b: output-stationary (M, N, K) tiling, bf16 MXU, f32 accumulator."""
    M, K = x.shape
    K2, N = w.shape
    assert K == K2 and b.shape == (N,)
    budget, multi_tc = _vmem_budget_and_multicore()

    # Output-stationary defaults: big M/N tiles, full K when it fits (K is the streamed axis).
    tm = _pick_tile(M, 512, 8)
    tn = _pick_tile(N, 512, 128)
    tk = _pick_tile(K, 1024, 128)
    if multi_tc and (M // tm) * (N // tn) < 2:
        # v7x: 2 TensorCores shard the "parallel" axes -- keep >= 2 output blocks if possible.
        tm2 = _shrink_tile(M, tm, 8)
        if tm2 != tm:
            tm = tm2
        else:
            tn2 = _shrink_tile(N, tn, 128)
            if tn2 != tn:
                tn = tn2

    x_isz = x.dtype.itemsize
    w_isz = w.dtype.itemsize
    o_isz = jnp.dtype(out_dtype).itemsize

    def _need(tm_, tn_, tk_):
        tk_l, tn_l = _rup(tk_, 128), _rup(tn_, 128)
        tm_s, tk_s = _rup(tm_, 8), _rup(tk_, 8)
        return (2 * (tm_s * tk_l * x_isz + tk_s * tn_l * w_isz + 8 * tn_l * 4)  # dbl-buf inputs
                + 2 * tm_s * tn_l * o_isz                                       # dbl-buf output
                + tm_s * tn_l * 4                                               # f32 acc scratch
                + (2 << 20))                                                    # temp headroom

    while _need(tm, tn, tk) > budget:
        nk, nn, nm = _shrink_tile(K, tk, 128), _shrink_tile(N, tn, 128), _shrink_tile(M, tm, 8)
        if nk != tk:
            tk = nk
        elif nn != tn:
            tn = nn
        elif nm != tm:
            tm = nm
        else:
            break

    grid = (M // tm, N // tn, K // tk)
    vmem_limit = int(min(max(_need(tm, tn, tk), 32 << 20), budget))

    return pl.pallas_call(
        _linear_kernel,
        out_shape=jax.ShapeDtypeStruct((M, N), out_dtype),
        grid_spec=pltpu.PrefetchScalarGridSpec(
            num_scalar_prefetch=0,
            grid=grid,
            in_specs=[
                pl.BlockSpec((tm, tk), lambda i, j, k: (i, k)),
                pl.BlockSpec((tk, tn), lambda i, j, k: (k, j)),
                pl.BlockSpec((1, tn), lambda i, j, k: (0, j)),
            ],
            out_specs=pl.BlockSpec((tm, tn), lambda i, j, k: (i, j)),
            scratch_shapes=[pltpu.VMEM((tm, tn), jnp.float32)],
        ),
        compiler_params=pltpu.CompilerParams(
            dimension_semantics=("parallel", "parallel", "arbitrary"),
            vmem_limit_bytes=vmem_limit,
        ),
    )(x, w, b.reshape(1, N).astype(jnp.float32))


# ----------------------- causal flash attention -------------------------------

def _flash_attn_kernel(qi_tab, ki_tab, q_ref, k_ref, v_ref, o_ref,
                       m_sc, l_sc, acc_sc, *, tq, tkv, n_head, head_dim):
    t = pl.program_id(1)
    qi = qi_tab[t]
    ki = ki_tab[t]
    q_start = qi * tq
    kv_start = ki * tkv

    @pl.when(ki == 0)
    def _init():
        m_sc[...] = jnp.full_like(m_sc, _MASK)
        l_sc[...] = jnp.zeros_like(l_sc)
        acc_sc[...] = jnp.zeros_like(acc_sc)

    def _update(mask):
        # Online-softmax update, statically unrolled over heads.  acc_sc is lane-dense
        # (tq, H*D); per-head writes use pl.ds lane slices.
        # TODO(synk): switch to lax.fori_loop over heads if bundle dumps show vreg spills.
        for h in range(n_head):
            sl = pl.ds(h * head_dim, head_dim)
            q_h = q_ref[:, h, :]                     # (tq, D) bf16; 1/sqrt(D) folded into W_q
            k_h = k_ref[:, h, :]                     # (tkv, D) bf16
            v_h = v_ref[:, h, :]                     # (tkv, D) bf16
            # Contract the head dim on both operands -> no per-head XLU transpose of k.
            s = lax.dot_general(q_h, k_h, (((1,), (1,)), ((), ())),
                                preferred_element_type=jnp.float32)   # (tq, tkv) f32
            if mask is not None:
                s = jnp.where(mask, s, _MASK)
            m_prev = m_sc[h]                                          # (tq, 1) f32
            m_new = jnp.maximum(m_prev, jnp.max(s, axis=-1, keepdims=True))
            alpha = jnp.exp(m_prev - m_new)
            p = jnp.exp(s - m_new)
            l_sc[h] = alpha * l_sc[h] + jnp.sum(p, axis=-1, keepdims=True)
            acc_sc[:, sl] = alpha * acc_sc[:, sl] + jnp.dot(
                p.astype(v_h.dtype), v_h, preferred_element_type=jnp.float32)
            m_sc[h] = m_new

    # Only diagonal-touching tiles pay for iotas + selects; interior tiles are mask-free.
    needs_mask = kv_start + tkv - 1 > q_start

    @pl.when(needs_mask)
    def _masked():
        row = q_start + lax.broadcasted_iota(jnp.int32, (tq, tkv), 0)
        col = kv_start + lax.broadcasted_iota(jnp.int32, (tq, tkv), 1)
        _update(col <= row)

    @pl.when(jnp.logical_not(needs_mask))
    def _unmasked():
        _update(None)

    # Last KV tile for this q tile (triangular grid guarantees kv_start <= q_start + tq - 1).
    is_last = kv_start + tkv >= q_start + tq

    @pl.when(is_last)
    def _finalize():
        for h in range(n_head):
            sl = pl.ds(h * head_dim, head_dim)
            acc_sc[:, sl] = acc_sc[:, sl] * pl.reciprocal(l_sc[h], approx=True)
        o_ref[...] = acc_sc[...].astype(o_ref.dtype)   # ONE lane-dense (tq, H*D) store


def _attention(qkv, n_head):
    """Causal flash attention over qkv of shape (B, T, 3, H, D); returns (B, T, H*D)."""
    B, T, _, H, D = qkv.shape
    assert H == n_head
    C = H * D
    budget, _ = _vmem_budget_and_multicore()

    tq = _pick_tile(T, 256, 8)
    tkv = _pick_tile(T, 256, 128)    # lane dim of the (tq, tkv) score tile: keep 128-aligned
    isz = qkv.dtype.itemsize
    d_pad, c_pad, h_pad = _rup(D, 128), _rup(C, 128), _rup(H, 16)

    def _need(tq_, tkv_):
        return (2 * (tq_ + 2 * tkv_) * h_pad * d_pad * isz     # double-buffered q, k, v blocks
                + 2 * tq_ * c_pad * isz                        # double-buffered output block
                + tq_ * c_pad * 4                              # f32 lane-dense accumulator
                + 2 * H * tq_ * 128 * 4                        # m / l scratch (lane-padded)
                + 2 * H * tq_ * _rup(tkv_, 128) * 4            # in-kernel f32 s/p temporaries
                + (2 << 20))

    while _need(tq, tkv) > budget:
        nkv, nq = _shrink_tile(T, tkv, 128), _shrink_tile(T, tq, 8)
        if nkv != tkv:
            tkv = nkv
        elif nq != tq:
            tq = nq
        else:
            break

    nq_tiles = T // tq
    # Triangular grid: only (qi, ki) pairs at/below the causal diagonal exist as grid steps.
    pairs = [(qi, ki) for qi in range(nq_tiles)
             for ki in range(((qi + 1) * tq - 1) // tkv + 1)]
    qi_tab = jnp.asarray([p[0] for p in pairs], jnp.int32)
    ki_tab = jnp.asarray([p[1] for p in pairs], jnp.int32)

    kernel = functools.partial(_flash_attn_kernel, tq=tq, tkv=tkv,
                               n_head=H, head_dim=D)

    # TODO(synk): q/k/v input blocks are (t, H, D) (lane-padded when D < 128); a fully
    # lane-dense (t, H*D) input packing would need a repacked qkv layout in HBM.
    return pl.pallas_call(
        kernel,
        out_shape=jax.ShapeDtypeStruct((B, T, C), qkv.dtype),
        grid_spec=pltpu.PrefetchScalarGridSpec(
            num_scalar_prefetch=2,
            grid=(B, len(pairs)),
            in_specs=[
                pl.BlockSpec((None, tq, None, H, D),
                             lambda b, t, qt, kt: (b, qt[t], 0, 0, 0)),   # q plane
                pl.BlockSpec((None, tkv, None, H, D),
                             lambda b, t, qt, kt: (b, kt[t], 1, 0, 0)),   # k plane
                pl.BlockSpec((None, tkv, None, H, D),
                             lambda b, t, qt, kt: (b, kt[t], 2, 0, 0)),   # v plane
            ],
            out_specs=pl.BlockSpec((None, tq, C), lambda b, t, qt, kt: (b, qt[t], 0)),
            scratch_shapes=[
                pltpu.VMEM((H, tq, 1), jnp.float32),   # m: running max
                pltpu.VMEM((H, tq, 1), jnp.float32),   # l: running denominator
                pltpu.VMEM((tq, C), jnp.float32),      # acc: lane-dense running PV product
            ],
        ),
        compiler_params=pltpu.CompilerParams(
            dimension_semantics=("parallel", "arbitrary"),
            vmem_limit_bytes=int(min(max(_need(tq, tkv), 32 << 20), budget)),
        ),
    )(qi_tab, ki_tab, qkv, qkv, qkv)


# ----------------------------- module wrapper ---------------------------------

def prepare_params(params, n_head, compute_dtype=jnp.bfloat16):
    """One-time parameter prep (run OUTSIDE the per-step forward):
       - fold 1/sqrt(head_dim) into the Q third of c_attn (weight AND bias),
       - cast weights to the MXU compute dtype so no per-call HBM cast pass is needed."""
    C = params["w_proj"].shape[0]
    D = C // n_head
    scale = 1.0 / math.sqrt(D)
    col_scale = jnp.concatenate(
        [jnp.full((C,), scale, jnp.float32), jnp.ones((2 * C,), jnp.float32)])
    # TODO(synk): on v7x, fp8 storage for w_attn/w_proj (keeping QK^T/PV in bf16) would halve
    # weight DMA traffic if accuracy allows.
    return {
        "w_attn": (params["w_attn"] * col_scale[None, :]).astype(compute_dtype),
        "b_attn": (params["b_attn"] * col_scale).astype(jnp.float32),
        "w_proj": params["w_proj"].astype(compute_dtype),
        "b_proj": params["b_proj"].astype(jnp.float32),
    }


def causal_self_attention(x, prepared, n_head):
    """Forward pass of CausalSelfAttention (eval mode: attn/resid dropout are identity)."""
    B, T, C = x.shape
    assert C % n_head == 0
    D = C // n_head
    cdt = jnp.bfloat16

    # qkv projection; the x tile is cast to bf16 inside the kernel (no extra HBM cast pass).
    qkv = _linear(x.reshape(B * T, C), prepared["w_attn"], prepared["b_attn"], out_dtype=cdt)
    qkv = qkv.reshape(B, T, 3, n_head, D)       # free reshape, no HBM transpose

    y = _attention(qkv, n_head)                 # (B, T, C), already lane-dense
    y = y.reshape(B * T, C)                     # free reshape

    y = _linear(y, prepared["w_proj"], prepared["b_proj"], out_dtype=x.dtype)
    # TODO(synk): attn_dropout / resid_dropout omitted (identity at inference, p = 0).
    return y.reshape(B, T, C)


def init_params(key, n_embd):
    k1, k2, k3, k4 = jax.random.split(key, 4)
    s = 0.02
    return {
        "w_attn": s * jax.random.normal(k1, (n_embd, 3 * n_embd), jnp.float32),
        "b_attn": s * jax.random.normal(k2, (3 * n_embd,), jnp.float32),
        "w_proj": s * jax.random.normal(k3, (n_embd, n_embd), jnp.float32),
        "b_proj": s * jax.random.normal(k4, (n_embd,), jnp.float32),
    }


def _reference(x, params, n_head):
    B, T, C = x.shape
    D = C // n_head
    qkv = x.reshape(B * T, C) @ params["w_attn"] + params["b_attn"]
    qkv = qkv.reshape(B, T, 3, n_head, D)
    q = qkv[:, :, 0].transpose(0, 2, 1, 3)
    k = qkv[:, :, 1].transpose(0, 2, 1, 3)
    v = qkv[:, :, 2].transpose(0, 2, 1, 3)
    s = jnp.einsum("bhqd,bhkd->bhqk", q, k) / jnp.sqrt(D)
    mask = jnp.tril(jnp.ones((T, T), bool))
    s = jnp.where(mask, s, -jnp.inf)
    p = jax.nn.softmax(s, axis=-1)
    y = jnp.einsum("bhqk,bhkd->bhqd", p, v)
    y = y.transpose(0, 2, 1, 3).reshape(B * T, C)
    y = y @ params["w_proj"] + params["b_proj"]
    return y.reshape(B, T, C)


if __name__ == "__main__":
    B, T, C, H = 2, 8, 32, 4
    key = jax.random.PRNGKey(0)
    kx, kp = jax.random.split(key)
    x = jax.random.normal(kx, (B, T, C), jnp.float32)
    params = init_params(kp, C)
    prepared = prepare_params(params, H)        # one-time prep: scale fold + bf16 weights

    fwd = jax.jit(causal_self_attention, static_argnames=("n_head",))
    y = fwd(x, prepared, n_head=H)
    jax.block_until_ready(y)

    assert y.shape == (B, T, C) and y.dtype == x.dtype
    y_ref = _reference(x, params, H)
    err = float(jnp.max(jnp.abs(y - y_ref)))
    assert jnp.allclose(y, y_ref, atol=1e-2, rtol=1e-2), err
    print("KERNEL_OK")
</pallas_src>

<mosaic_0001>
module attributes {stable_mosaic.version = 11 : i64} {
  func.func @_linear_kernel(%arg0: i32, %arg1: i32, %arg2: i32, %arg3: memref<16x32xf32, #tpu.memory_space<vmem>>, %arg4: memref<32x96xbf16, #tpu.memory_space<vmem>>, %arg5: memref<1x96xf32, #tpu.memory_space<vmem>>, %arg6: memref<16x96xbf16, #tpu.memory_space<vmem>>, %arg7: memref<16x96xf32, #tpu.memory_space<vmem>>) attributes {dimension_semantics = [#tpu.dimension_semantics<parallel>, #tpu.dimension_semantics<parallel>, #tpu.dimension_semantics<arbitrary>], iteration_bounds = array<i64: 1, 1, 1>, scalar_prefetch = 0 : i64, scratch_operands = 1 : i64, tpu.core_type = #tpu.core_type<tc>, window_params = [{transform_indices = @transform_0, window_bounds = array<i64: 16, 32>}, {transform_indices = @transform_1, window_bounds = array<i64: 32, 96>}, {transform_indices = @transform_2, window_bounds = array<i64: 1, 96>}, {transform_indices = @transform_3, window_bounds = array<i64: 16, 96>}]} {
    %c0_i32 = arith.constant 0 : i32
    %0 = arith.cmpi eq, %arg2, %c0_i32 : i32
    %1 = arith.extui %0 : i1 to i32
    %c0_i32_0 = arith.constant 0 : i32
    %2 = arith.cmpi ne, %1, %c0_i32_0 : i32
    scf.if %2 {
      %cst_10 = arith.constant 0.000000e+00 : f32
      %13 = vector.broadcast %cst_10 : f32 to vector<16x96xf32>
      %c0_11 = arith.constant 0 : index
      %c0_12 = arith.constant 0 : index
      %14 = vector.load %arg7[%c0_11, %c0_12] : memref<16x96xf32, #tpu.memory_space<vmem>>, vector<16x96xf32>
      tpu.vector_store %arg7[%c0_11, %c0_12], %13 {strides = array<i32>} : memref<16x96xf32, #tpu.memory_space<vmem>>, vector<16x96xf32>,
    } else {
    }
    %c0 = arith.constant 0 : index
    %c0_1 = arith.constant 0 : index
    %3 = vector.load %arg7[%c0, %c0_1] : memref<16x96xf32, #tpu.memory_space<vmem>>, vector<16x96xf32>
    %c0_2 = arith.constant 0 : index
    %c0_3 = arith.constant 0 : index
    %4 = vector.load %arg3[%c0_2, %c0_3] : memref<16x32xf32, #tpu.memory_space<vmem>>, vector<16x32xf32>
    %5 = arith.truncf %4 : vector<16x32xf32> to vector<16x32xbf16>
    %c0_4 = arith.constant 0 : index
    %c0_5 = arith.constant 0 : index
    %6 = vector.load %arg4[%c0_4, %c0_5] : memref<32x96xbf16, #tpu.memory_space<vmem>>, vector<32x96xbf16>
    %cst = arith.constant dense<0.000000e+00> : vector<16x96xf32>
    %7 = tpu.matmul %5, %6, %cst {dimension_numbers = #tpu.dot_dimension_numbers<[1], [0], [0], [1], [0, 0, 1, 1], [], []>} : vector<16x32xbf16>, vector<32x96xbf16>, vector<16x96xf32> -> vector<16x96xf32>
    %8 = arith.addf %3, %7 : vector<16x96xf32>
    %c0_6 = arith.constant 0 : index
    %c0_7 = arith.constant 0 : index
    %9 = vector.load %arg7[%c0_6, %c0_7] : memref<16x96xf32, #tpu.memory_space<vmem>>, vector<16x96xf32>
    tpu.vector_store %arg7[%c0_6, %c0_7], %8 {strides = array<i32>} : memref<16x96xf32, #tpu.memory_space<vmem>>, vector<16x96xf32>,
    %c0_i32_8 = arith.constant 0 : i32
    %10 = arith.cmpi eq, %arg2, %c0_i32_8 : i32
    %11 = arith.extui %10 : i1 to i32
    %c0_i32_9 = arith.constant 0 : i32
    %12 = arith.cmpi ne, %11, %c0_i32_9 : i32
    scf.if %12 {
      %c0_10 = arith.constant 0 : index
      %c0_11 = arith.constant 0 : index
      %13 = vector.load %arg7[%c0_10, %c0_11] : memref<16x96xf32, #tpu.memory_space<vmem>>, vector<16x96xf32>
      %c0_12 = arith.constant 0 : index
      %c0_13 = arith.constant 0 : index
      %14 = vector.load %arg5[%c0_12, %c0_13] : memref<1x96xf32, #tpu.memory_space<vmem>>, vector<1x96xf32>
      %15 = vector.broadcast %14 : vector<1x96xf32> to vector<16x96xf32>
      %16 = arith.addf %13, %15 : vector<16x96xf32>
      %17 = arith.truncf %16 : vector<16x96xf32> to vector<16x96xbf16>
      %c0_14 = arith.constant 0 : index
      %c0_15 = arith.constant 0 : index
      %18 = vector.load %arg6[%c0_14, %c0_15] : memref<16x96xbf16, #tpu.memory_space<vmem>>, vector<16x96xbf16>
      tpu.vector_store %arg6[%c0_14, %c0_15], %17 {strides = array<i32>} : memref<16x96xbf16, #tpu.memory_space<vmem>>, vector<16x96xbf16>,
    } else {
    }
    return
  }
  func.func @transform_0(%arg0: i32, %arg1: i32, %arg2: i32) -> (i32, i32) {
    %c0_i32 = arith.constant 0 : i32
    return %arg0, %arg2 : i32, i32
  }
  func.func @transform_1(%arg0: i32, %arg1: i32, %arg2: i32) -> (i32, i32) {
    %c0_i32 = arith.constant 0 : i32
    return %arg2, %arg1 : i32, i32
  }
  func.func @transform_2(%arg0: i32, %arg1: i32, %arg2: i32) -> (i32, i32) {
    %c0_i32 = arith.constant 0 : i32
    %c0_i32_0 = arith.constant 0 : i32
    return %c0_i32, %arg1 : i32, i32
  }
  func.func @transform_3(%arg0: i32, %arg1: i32, %arg2: i32) -> (i32, i32) {
    %c0_i32 = arith.constant 0 : i32
    return %arg0, %arg1 : i32, i32
  }
}

module attributes {stable_mosaic.version = 11 : i64} {
  func.func @_linear_kernel(%arg0: i32, %arg1: i32, %arg2: i32, %arg3: memref<16x32xbf16, #tpu.memory_space<vmem>>, %arg4: memref<32x32xbf16, #tpu.memory_space<vmem>>, %arg5: memref<1x32xf32, #tpu.memory_space<vmem>>, %arg6: memref<16x32xf32, #tpu.memory_space<vmem>>, %arg7: memref<16x32xf32, #tpu.memory_space<vmem>>) attributes {dimension_semantics = [#tpu.dimension_semantics<parallel>, #tpu.dimension_semantics<parallel>, #tpu.dimension_semantics<arbitrary>], iteration_bounds = array<i64: 1, 1, 1>, scalar_prefetch = 0 : i64, scratch_operands = 1 : i64, tpu.core_type = #tpu.core_type<tc>, window_params = [{transform_indices = @transform_0, window_bounds = array<i64: 16, 32>}, {transform_indices = @transform_1, window_bounds = array<i64: 32, 32>}, {transform_indices = @transform_2, window_bounds = array<i64: 1, 32>}, {transform_indices = @transform_3, window_bounds = array<i64: 16, 32>}]} {
    %c0_i32 = arith.constant 0 : i32
    %0 = arith.cmpi eq, %arg2, %c0_i32 : i32
    %1 = arith.extui %0 : i1 to i32
    %c0_i32_0 = arith.constant 0 : i32
    %2 = arith.cmpi ne, %1, %c0_i32_0 : i32
    scf.if %2 {
      %cst_10 = arith.constant 0.000000e+00 : f32
      %12 = vector.broadcast %cst_10 : f32 to vector<16x32xf32>
      %c0_11 = arith.constant 0 : index
      %c0_12 = arith.constant 0 : index
      %13 = vector.load %arg7[%c0_11, %c0_12] : memref<16x32xf32, #tpu.memory_space<vmem>>, vector<16x32xf32>
      tpu.vector_store %arg7[%c0_11, %c0_12], %12 {strides = array<i32>} : memref<16x32xf32, #tpu.memory_space<vmem>>, vector<16x32xf32>,
    } else {
    }
    %c0 = arith.constant 0 : index
    %c0_1 = arith.constant 0 : index
    %3 = vector.load %arg7[%c0, %c0_1] : memref<16x32xf32, #tpu.memory_space<vmem>>, vector<16x32xf32>
    %c0_2 = arith.constant 0 : index
    %c0_3 = arith.constant 0 : index
    %4 = vector.load %arg3[%c0_2, %c0_3] : memref<16x32xbf16, #tpu.memory_space<vmem>>, vector<16x32xbf16>
    %c0_4 = arith.constant 0 : index
    %c0_5 = arith.constant 0 : index
    %5 = vector.load %arg4[%c0_4, %c0_5] : memref<32x32xbf16, #tpu.memory_space<vmem>>, vector<32x32xbf16>
    %cst = arith.constant dense<0.000000e+00> : vector<16x32xf32>
    %6 = tpu.matmul %4, %5, %cst {dimension_numbers = #tpu.dot_dimension_numbers<[1], [0], [0], [1], [0, 0, 1, 1], [], []>} : vector<16x32xbf16>, vector<32x32xbf16>, vector<16x32xf32> -> vector<16x32xf32>
    %7 = arith.addf %3, %6 : vector<16x32xf32>
    %c0_6 = arith.constant 0 : index
    %c0_7 = arith.constant 0 : index
    %8 = vector.load %arg7[%c0_6, %c0_7] : memref<16x32xf32, #tpu.memory_space<vmem>>, vector<16x32xf32>
    tpu.vector_store %arg7[%c0_6, %c0_7], %7 {strides = array<i32>} : memref<16x32xf32, #tpu.memory_space<vmem>>, vector<16x32xf32>,
    %c0_i32_8 = arith.constant 0 : i32
    %9 = arith.cmpi eq, %arg2, %c0_i32_8 : i32
    %10 = arith.extui %9 : i1 to i32
    %c0_i32_9 = arith.constant 0 : i32
    %11 = arith.cmpi ne, %10, %c0_i32_9 : i32
    scf.if %11 {
      %c0_10 = arith.constant 0 : index
      %c0_11 = arith.constant 0 : index
      %12 = vector.load %arg7[%c0_10, %c0_11] : memref<16x32xf32, #tpu.memory_space<vmem>>, vector<16x32xf32>
      %c0_12 = arith.constant 0 : index
      %c0_13 = arith.constant 0 : index
      %13 = vector.load %arg5[%c0_12, %c0_13] : memref<1x32xf32, #tpu.memory_space<vmem>>, vector<1x32xf32>
      %14 = vector.broadcast %13 : vector<1x32xf32> to vector<16x32xf32>
      %15 = arith.addf %12, %14 : vector<16x32xf32>
      %c0_14 = arith.constant 0 : index
      %c0_15 = arith.constant 0 : index
      %16 = vector.load %arg6[%c0_14, %c0_15] : memref<16x32xf32, #tpu.memory_space<vmem>>, vector<16x32xf32>
      tpu.vector_store %arg6[%c0_14, %c0_15], %15 {strides = array<i32>} : memref<16x32xf32, #tpu.memory_space<vmem>>, vector<16x32xf32>,
    } else {
    }
    return
  }
  func.func @transform_0(%arg0: i32, %arg1: i32, %arg2: i32) -> (i32, i32) {
    %c0_i32 = arith.constant 0 : i32
    return %arg0, %arg2 : i32, i32
  }
  func.func @transform_1(%arg0: i32, %arg1: i32, %arg2: i32) -> (i32, i32) {
    %c0_i32 = arith.constant 0 : i32
    return %arg2, %arg1 : i32, i32
  }
  func.func @transform_2(%arg0: i32, %arg1: i32, %arg2: i32) -> (i32, i32) {
    %c0_i32 = arith.constant 0 : i32
    %c0_i32_0 = arith.constant 0 : i32
    return %c0_i32, %arg1 : i32, i32
  }
  func.func @transform_3(%arg0: i32, %arg1: i32, %arg2: i32) -> (i32, i32) {
    %c0_i32 = arith.constant 0 : i32
    return %arg0, %arg1 : i32, i32
  }
}

module attributes {stable_mosaic.version = 11 : i64} {
  func.func @_flash_attn_kernel(%arg0: i32, %arg1: i32, %arg2: memref<1xi32, #tpu.memory_space<smem>>, %arg3: memref<1xi32, #tpu.memory_space<smem>>, %arg4: memref<1x8x1x4x8xbf16, #tpu.memory_space<vmem>>, %arg5: memref<1x8x1x4x8xbf16, #tpu.memory_space<vmem>>, %arg6: memref<1x8x1x4x8xbf16, #tpu.memory_space<vmem>>, %arg7: memref<1x8x32xbf16, #tpu.memory_space<vmem>>, %arg8: memref<4x8x1xf32, #tpu.memory_space<vmem>>, %arg9: memref<4x8x1xf32, #tpu.memory_space<vmem>>, %arg10: memref<8x32xf32, #tpu.memory_space<vmem>>) attributes {dimension_semantics = [#tpu.dimension_semantics<parallel>, #tpu.dimension_semantics<arbitrary>], iteration_bounds = array<i64: 2, 1>, scalar_prefetch = 2 : i64, scratch_operands = 3 : i64, tpu.core_type = #tpu.core_type<tc>, window_params = [{transform_indices = @transform_0, window_bounds = array<i64: 1, 8, 1, 4, 8>}, {transform_indices = @transform_1, window_bounds = array<i64: 1, 8, 1, 4, 8>}, {transform_indices = @transform_2, window_bounds = array<i64: 1, 8, 1, 4, 8>}, {transform_indices = @transform_3, window_bounds = array<i64: 1, 8, 32>}]} {
    %0 = arith.index_cast %arg1 : i32 to index
    %1 = memref.load %arg2[%0] : memref<1xi32, #tpu.memory_space<smem>>
    %2 = arith.index_cast %arg1 : i32 to index
    %3 = memref.load %arg3[%2] : memref<1xi32, #tpu.memory_space<smem>>
    %c8_i32 = arith.constant 8 : i32
    %4 = arith.muli %1, %c8_i32 : i32
    %c8_i32_0 = arith.constant 8 : i32
    %5 = arith.muli %3, %c8_i32_0 : i32
    %c0_i32 = arith.constant 0 : i32
    %6 = arith.cmpi eq, %3, %c0_i32 : i32
    %7 = arith.extui %6 : i1 to i32
    %c0_i32_1 = arith.constant 0 : i32
    %8 = arith.cmpi ne, %7, %c0_i32_1 : i32
    scf.if %8 {
      %cst = arith.constant -2.38197633E+38 : f32
      %22 = vector.broadcast %cst : f32 to vector<4x8x1xf32>
      %c0 = arith.constant 0 : index
      %c0_8 = arith.constant 0 : index
      %c0_9 = arith.constant 0 : index
      %23 = vector.load %arg8[%c0, %c0_8, %c0_9] : memref<4x8x1xf32, #tpu.memory_space<vmem>>, vector<4x8x1xf32>
      tpu.vector_store %arg8[%c0, %c0_8, %c0_9], %22 {strides = array<i32>} : memref<4x8x1xf32, #tpu.memory_space<vmem>>, vector<4x8x1xf32>,
      %cst_10 = arith.constant 0.000000e+00 : f32
      %24 = vector.broadcast %cst_10 : f32 to vector<4x8x1xf32>
      %c0_11 = arith.constant 0 : index
      %c0_12 = arith.constant 0 : index
      %c0_13 = arith.constant 0 : index
      %25 = vector.load %arg9[%c0_11, %c0_12, %c0_13] : memref<4x8x1xf32, #tpu.memory_space<vmem>>, vector<4x8x1xf32>
      tpu.vector_store %arg9[%c0_11, %c0_12, %c0_13], %24 {strides = array<i32>} : memref<4x8x1xf32, #tpu.memory_space<vmem>>, vector<4x8x1xf32>,
      %cst_14 = arith.constant 0.000000e+00 : f32
      %26 = vector.broadcast %cst_14 : f32 to vector<8x32xf32>
      %c0_15 = arith.constant 0 : index
      %c0_16 = arith.constant 0 : index
      %27 = vector.load %arg10[%c0_15, %c0_16] : memref<8x32xf32, #tpu.memory_space<vmem>>, vector<8x32xf32>
      tpu.vector_store %arg10[%c0_15, %c0_16], %26 {strides = array<i32>} : memref<8x32xf32, #tpu.memory_space<vmem>>, vector<8x32xf32>,
    } else {
    }
    %c8_i32_2 = arith.constant 8 : i32
    %9 = arith.addi %5, %c8_i32_2 : i32
    %c1_i32 = arith.constant 1 : i32
    %10 = arith.subi %9, %c1_i32 : i32
    %11 = arith.cmpi sgt, %10, %4 : i32
    %12 = arith.extui %11 : i1 to i32
    %c0_i32_3 = arith.constant 0 : i32
    %13 = arith.cmpi ne, %12, %c0_i32_3 : i32
    scf.if %13 {
      %22 = tpu.iota {dimensions = array<i32: 0>} : vector<8x8xi32>
      %23 = vector.broadcast %4 : i32 to vector<8x8xi32>
      %24 = arith.addi %23, %22 : vector<8x8xi32>
      %25 = tpu.iota {dimensions = array<i32: 1>} : vector<8x8xi32>
      %26 = vector.broadcast %5 : i32 to vector<8x8xi32>
      %27 = arith.addi %26, %25 : vector<8x8xi32>
      %28 = arith.cmpi sle, %27, %24 : vector<8x8xi32>
      %c0 = arith.constant 0 : index
      %c0_8 = arith.constant 0 : index
      %c0_9 = arith.constant 0 : index
      %c0_10 = arith.constant 0 : index
      %c0_11 = arith.constant 0 : index
      %29 = vector.load %arg4[%c0, %c0_8, %c0_9, %c0_10, %c0_11] : memref<1x8x1x4x8xbf16, #tpu.memory_space<vmem>>, vector<1x8x1x1x8xbf16>
      %30 = vector.shape_cast %29 : vector<1x8x1x1x8xbf16> to vector<8x8xbf16>
      %c0_12 = arith.constant 0 : index
      %c0_13 = arith.constant 0 : index
      %c0_14 = arith.constant 0 : index
      %c0_15 = arith.constant 0 : index
      %c0_16 = arith.constant 0 : index
      %31 = vector.load %arg5[%c0_12, %c0_13, %c0_14, %c0_15, %c0_16] : memref<1x8x1x4x8xbf16, #tpu.memory_space<vmem>>, vector<1x8x1x1x8xbf16>
      %32 = vector.shape_cast %31 : vector<1x8x1x1x8xbf16> to vector<8x8xbf16>
      %c0_17 = arith.constant 0 : index
      %c0_18 = arith.constant 0 : index
      %c0_19 = arith.constant 0 : index
      %c0_20 = arith.constant 0 : index
      %c0_21 = arith.constant 0 : index
      %33 = vector.load %arg6[%c0_17, %c0_18, %c0_19, %c0_20, %c0_21] : memref<1x8x1x4x8xbf16, #tpu.memory_space<vmem>>, vector<1x8x1x1x8xbf16>
      %34 = vector.shape_cast %33 : vector<1x8x1x1x8xbf16> to vector<8x8xbf16>
      %cst = arith.constant dense<0.000000e+00> : vector<8x8xf32>
      %35 = tpu.matmul %30, %32, %cst {dimension_numbers = #tpu.dot_dimension_numbers<[1], [1], [0], [0], [0, 0, 1, 0], [], []>} : vector<8x8xbf16>, vector<8x8xbf16>, vector<8x8xf32> -> vector<8x8xf32>
      %cst_22 = arith.constant -2.38197633E+38 : f32
      %36 = vector.broadcast %cst_22 : f32 to vector<8x8xf32>
      %37 = arith.select %28, %35, %36 : vector<8x8xi1>, vector<8x8xf32>
      %c0_23 = arith.constant 0 : index
      %c0_24 = arith.constant 0 : index
      %c0_25 = arith.constant 0 : index
      %38 = vector.load %arg8[%c0_23, %c0_24, %c0_25] : memref<4x8x1xf32, #tpu.memory_space<vmem>>, vector<1x8x1xf32>
      %39 = vector.shape_cast %38 : vector<1x8x1xf32> to vector<8x1xf32>
      %cst_26 = arith.constant dense<0xFF800000> : vector<8xf32>
      %40 = vector.multi_reduction <maximumf>, %37, %cst_26 [1] : vector<8x8xf32> to vector<8xf32>
      %41 = vector.shape_cast %40 : vector<8xf32> to vector<8x1xf32>
      %42 = arith.maximumf %39, %41 : vector<8x1xf32>
      %43 = arith.subf %39, %42 : vector<8x1xf32>
      %44 = math.exp %43 : vector<8x1xf32>
      %45 = vector.broadcast %42 : vector<8x1xf32> to vector<8x8xf32>
      %46 = arith.subf %37, %45 : vector<8x8xf32>
      %47 = math.exp %46 : vector<8x8xf32>
      %c0_27 = arith.constant 0 : index
      %c0_28 = arith.constant 0 : index
      %c0_29 = arith.constant 0 : index
      %48 = vector.load %arg9[%c0_27, %c0_28, %c0_29] : memref<4x8x1xf32, #tpu.memory_space<vmem>>, vector<1x8x1xf32>
      %49 = vector.shape_cast %48 : vector<1x8x1xf32> to vector<8x1xf32>
      %50 = arith.mulf %44, %49 : vector<8x1xf32>
      %cst_30 = arith.constant dense<0.000000e+00> : vector<8xf32>
      %51 = vector.multi_reduction <add>, %47, %cst_30 [1] : vector<8x8xf32> to vector<8xf32>
      %52 = vector.shape_cast %51 : vector<8xf32> to vector<8x1xf32>
      %53 = arith.addf %50, %52 : vector<8x1xf32>
      %c0_31 = arith.constant 0 : index
      %c0_32 = arith.constant 0 : index
      %c0_33 = arith.constant 0 : index
      %54 = vector.load %arg9[%c0_31, %c0_32, %c0_33] : memref<4x8x1xf32, #tpu.memory_space<vmem>>, vector<1x8x1xf32>
      %55 = vector.shape_cast %54 : vector<1x8x1xf32> to vector<8x1xf32>
      %56 = vector.shape_cast %53 : vector<8x1xf32> to vector<1x8x1xf32>
      tpu.vector_store %arg9[%c0_31, %c0_32, %c0_33], %56 {strides = array<i32>} : memref<4x8x1xf32, #tpu.memory_space<vmem>>, vector<1x8x1xf32>,
      %c0_34 = arith.constant 0 : index
      %c0_35 = arith.constant 0 : index
      %57 = vector.load %arg10[%c0_34, %c0_35] : memref<8x32xf32, #tpu.memory_space<vmem>>, vector<8x8xf32>
      %58 = vector.broadcast %44 : vector<8x1xf32> to vector<8x8xf32>
      %59 = arith.mulf %58, %57 : vector<8x8xf32>
      %60 = arith.truncf %47 : vector<8x8xf32> to vector<8x8xbf16>
      %cst_36 = arith.constant dense<0.000000e+00> : vector<8x8xf32>
      %61 = tpu.matmul %60, %34, %cst_36 {dimension_numbers = #tpu.dot_dimension_numbers<[1], [0], [0], [1], [0, 0, 1, 1], [], []>} : vector<8x8xbf16>, vector<8x8xbf16>, vector<8x8xf32> -> vector<8x8xf32>
      %62 = arith.addf %59, %61 : vector<8x8xf32>
      %c0_37 = arith.constant 0 : index
      %c0_38 = arith.constant 0 : index
      %63 = vector.load %arg10[%c0_37, %c0_38] : memref<8x32xf32, #tpu.memory_space<vmem>>, vector<8x8xf32>
      tpu.vector_store %arg10[%c0_37, %c0_38], %62 {strides = array<i32>} : memref<8x32xf32, #tpu.memory_space<vmem>>, vector<8x8xf32>,
      %c0_39 = arith.constant 0 : index
      %c0_40 = arith.constant 0 : index
      %c0_41 = arith.constant 0 : index
      %64 = vector.load %arg8[%c0_39, %c0_40, %c0_41] : memref<4x8x1xf32, #tpu.memory_space<vmem>>, vector<1x8x1xf32>
      %65 = vector.shape_cast %64 : vector<1x8x1xf32> to vector<8x1xf32>
      %66 = vector.shape_cast %42 : vector<8x1xf32> to vector<1x8x1xf32>
      tpu.vector_store %arg8[%c0_39, %c0_40, %c0_41], %66 {strides = array<i32>} : memref<4x8x1xf32, #tpu.memory_space<vmem>>, vector<1x8x1xf32>,
      %c0_42 = arith.constant 0 : index
      %c0_43 = arith.constant 0 : index
      %c0_44 = arith.constant 0 : index
      %c1 = arith.constant 1 : index
      %c0_45 = arith.constant 0 : index
      %67 = vector.load %arg4[%c0_42, %c0_43, %c0_44, %c1, %c0_45] : memref<1x8x1x4x8xbf16, #tpu.memory_space<vmem>>, vector<1x8x1x1x8xbf16>
      %68 = vector.shape_cast %67 : vector<1x8x1x1x8xbf16> to vector<8x8xbf16>
      %c0_46 = arith.constant 0 : index
      %c0_47 = arith.constant 0 : index
      %c0_48 = arith.constant 0 : index
      %c1_49 = arith.constant 1 : index
      %c0_50 = arith.constant 0 : index
      %69 = vector.load %arg5[%c0_46, %c0_47, %c0_48, %c1_49, %c0_50] : memref<1x8x1x4x8xbf16, #tpu.memory_space<vmem>>, vector<1x8x1x1x8xbf16>
      %70 = vector.shape_cast %69 : vector<1x8x1x1x8xbf16> to vector<8x8xbf16>
      %c0_51 = arith.constant 0 : index
      %c0_52 = arith.constant 0 : index
      %c0_53 = arith.constant 0 : index
      %c1_54 = arith.constant 1 : index
      %c0_55 = arith.constant 0 : index
      %71 = vector.load %arg6[%c0_51, %c0_52, %c0_53, %c1_54, %c0_55] : memref<1x8x1x4x8xbf16, #tpu.memory_space<vmem>>, vector<1x8x1x1x8xbf16>
      %72 = vector.shape_cast %71 : vector<1x8x1x1x8xbf16> to vector<8x8xbf16>
      %cst_56 = arith.constant dense<0.000000e+00> : vector<8x8xf32>
      %73 = tpu.matmul %68, %70, %cst_56 {dimension_numbers = #tpu.dot_dimension_numbers<[1], [1], [0], [0], [0, 0, 1, 0], [], []>} : vector<8x8xbf16>, vector<8x8xbf16>, vector<8x8xf32> -> vector<8x8xf32>
      %cst_57 = arith.constant -2.38197633E+38 : f32
      %74 = vector.broadcast %cst_57 : f32 to vector<8x8xf32>
      %75 = arith.select %28, %73, %74 : vector<8x8xi1>, vector<8x8xf32>
      %c1_58 = arith.constant 1 : index
      %c0_59 = arith.constant 0 : index
      %c0_60 = arith.constant 0 : index
      %76 = vector.load %arg8[%c1_58, %c0_59, %c0_60] : memref<4x8x1xf32, #tpu.memory_space<vmem>>, vector<1x8x1xf32>
      %77 = vector.shape_cast %76 : vector<1x8x1xf32> to vector<8x1xf32>
      %cst_61 = arith.constant dense<0xFF800000> : vector<8xf32>
      %78 = vector.multi_reduction <maximumf>, %75, %cst_61 [1] : vector<8x8xf32> to vector<8xf32>
      %79 = vector.shape_cast %78 : vector<8xf32> to vector<8x1xf32>
      %80 = arith.maximumf %77, %79 : vector<8x1xf32>
      %81 = arith.subf %77, %80 : vector<8x1xf32>
      %82 = math.exp %81 : vector<8x1xf32>
      %83 = vector.broadcast %80 : vector<8x1xf32> to vector<8x8xf32>
      %84 = arith.subf %75, %83 : vector<8x8xf32>
      %85 = math.exp %84 : vector<8x8xf32>
      %c1_62 = arith.constant 1 : index
      %c0_63 = arith.constant 0 : index
      %c0_64 = arith.constant 0 : index
      %86 = vector.load %arg9[%c1_62, %c0_63, %c0_64] : memref<4x8x1xf32, #tpu.memory_space<vmem>>, vector<1x8x1xf32>
      %87 = vector.shape_cast %86 : vector<1x8x1xf32> to vector<8x1xf32>
      %88 = arith.mulf %82, %87 : vector<8x1xf32>
      %cst_65 = arith.constant dense<0.000000e+00> : vector<8xf32>
      %89 = vector.multi_reduction <add>, %85, %cst_65 [1] : vector<8x8xf32> to vector<8xf32>
      %90 = vector.shape_cast %89 : vector<8xf32> to vector<8x1xf32>
      %91 = arith.addf %88, %90 : vector<8x1xf32>
      %c1_66 = arith.constant 1 : index
      %c0_67 = arith.constant 0 : index
      %c0_68 = arith.constant 0 : index
      %92 = vector.load %arg9[%c1_66, %c0_67, %c0_68] : memref<4x8x1xf32, #tpu.memory_space<vmem>>, vector<1x8x1xf32>
      %93 = vector.shape_cast %92 : vector<1x8x1xf32> to vector<8x1xf32>
      %94 = vector.shape_cast %91 : vector<8x1xf32> to vector<1x8x1xf32>
      tpu.vector_store %arg9[%c1_66, %c0_67, %c0_68], %94 {strides = array<i32>} : memref<4x8x1xf32, #tpu.memory_space<vmem>>, vector<1x8x1xf32>,
      %c0_69 = arith.constant 0 : index
      %c8 = arith.constant 8 : index
      %95 = vector.load %arg10[%c0_69, %c8] : memref<8x32xf32, #tpu.memory_space<vmem>>, vector<8x8xf32>
      %96 = vector.broadcast %82 : vector<8x1xf32> to vector<8x8xf32>
      %97 = arith.mulf %96, %95 : vector<8x8xf32>
      %98 = arith.truncf %85 : vector<8x8xf32> to vector<8x8xbf16>
      %cst_70 = arith.constant dense<0.000000e+00> : vector<8x8xf32>
      %99 = tpu.matmul %98, %72, %cst_70 {dimension_numbers = #tpu.dot_dimension_numbers<[1], [0], [0], [1], [0, 0, 1, 1], [], []>} : vector<8x8xbf16>, vector<8x8xbf16>, vector<8x8xf32> -> vector<8x8xf32>
      %100 = arith.addf %97, %99 : vector<8x8xf32>
      %c0_71 = arith.constant 0 : index
      %c8_72 = arith.constant 8 : index
      %101 = vector.load %arg10[%c0_71, %c8_72] : memref<8x32xf32, #tpu.memory_space<vmem>>, vector<8x8xf32>
      tpu.vector_store %arg10[%c0_71, %c8_72], %100 {strides = array<i32>} : memref<8x32xf32, #tpu.memory_space<vmem>>, vector<8x8xf32>,
      %c1_73 = arith.constant 1 : index
      %c0_74 = arith.constant 0 : index
      %c0_75 = arith.constant 0 : index
      %102 = vector.load %arg8[%c1_73, %c0_74, %c0_75] : memref<4x8x1xf32, #tpu.memory_space<vmem>>, vector<1x8x1xf32>
      %103 = vector.shape_cast %102 : vector<1x8x1xf32> to vector<8x1xf32>
      %104 = vector.shape_cast %80 : vector<8x1xf32> to vector<1x8x1xf32>
      tpu.vector_store %arg8[%c1_73, %c0_74, %c0_75], %104 {strides = array<i32>} : memref<4x8x1xf32, #tpu.memory_space<vmem>>, vector<1x8x1xf32>,
      %c0_76 = arith.constant 0 : index
      %c0_77 = arith.constant 0 : index
      %c0_78 = arith.constant 0 : index
      %c2 = arith.constant 2 : index
      %c0_79 = arith.constant 0 : index
      %105 = vector.load %arg4[%c0_76, %c0_77, %c0_78, %c2, %c0_79] : memref<1x8x1x4x8xbf16, #tpu.memory_space<vmem>>, vector<1x8x1x1x8xbf16>
      %106 = vector.shape_cast %105 : vector<1x8x1x1x8xbf16> to vector<8x8xbf16>
      %c0_80 = arith.constant 0 : index
      %c0_81 = arith.constant 0 : index
      %c0_82 = arith.constant 0 : index
      %c2_83 = arith.constant 2 : index
      %c0_84 = arith.constant 0 : index
      %107 = vector.load %arg5[%c0_80, %c0_81, %c0_82, %c2_83, %c0_84] : memref<1x8x1x4x8xbf16, #tpu.memory_space<vmem>>, vector<1x8x1x1x8xbf16>
      %108 = vector.shape_cast %107 : vector<1x8x1x1x8xbf16> to vector<8x8xbf16>
      %c0_85 = arith.constant 0 : index
      %c0_86 = arith.constant 0 : index
      %c0_87 = arith.constant 0 : index
      %c2_88 = arith.constant 2 : index
      %c0_89 = arith.constant 0 : index
      %109 = vector.load %arg6[%c0_85, %c0_86, %c0_87, %c2_88, %c0_89] : memref<1x8x1x4x8xbf16, #tpu.memory_space<vmem>>, vector<1x8x1x1x8xbf16>
      %110 = vector.shape_cast %109 : vector<1x8x1x1x8xbf16> to vector<8x8xbf16>
      %cst_90 = arith.constant dense<0.000000e+00> : vector<8x8xf32>
      %111 = tpu.matmul %106, %108, %cst_90 {dimension_numbers = #tpu.dot_dimension_numbers<[1], [1], [0], [0], [0, 0, 1, 0], [], []>} : vector<8x8xbf16>, vector<8x8xbf16>, vector<8x8xf32> -> vector<8x8xf32>
      %cst_91 = arith.constant -2.38197633E+38 : f32
      %112 = vector.broadcast %cst_91 : f32 to vector<8x8xf32>
      %113 = arith.select %28, %111, %112 : vector<8x8xi1>, vector<8x8xf32>
      %c2_92 = arith.constant 2 : index
      %c0_93 = arith.constant 0 : index
      %c0_94 = arith.constant 0 : index
      %114 = vector.load %arg8[%c2_92, %c0_93, %c0_94] : memref<4x8x1xf32, #tpu.memory_space<vmem>>, vector<1x8x1xf32>
      %115 = vector.shape_cast %114 : vector<1x8x1xf32> to vector<8x1xf32>
      %cst_95 = arith.constant dense<0xFF800000> : vector<8xf32>
      %116 = vector.multi_reduction <maximumf>, %113, %cst_95 [1] : vector<8x8xf32> to vector<8xf32>
      %117 = vector.shape_cast %116 : vector<8xf32> to vector<8x1xf32>
      %118 = arith.maximumf %115, %117 : vector<8x1xf32>
      %119 = arith.subf %115, %118 : vector<8x1xf32>
      %120 = math.exp %119 : vector<8x1xf32>
      %121 = vector.broadcast %118 : vector<8x1xf32> to vector<8x8xf32>
      %122 = arith.subf %113, %121 : vector<8x8xf32>
      %123 = math.exp %122 : vector<8x8xf32>
      %c2_96 = arith.constant 2 : index
      %c0_97 = arith.constant 0 : index
      %c0_98 = arith.constant 0 : index
      %124 = vector.load %arg9[%c2_96, %c0_97, %c0_98] : memref<4x8x1xf32, #tpu.memory_space<vmem>>, vector<1x8x1xf32>
      %125 = vector.shape_cast %124 : vector<1x8x1xf32> to vector<8x1xf32>
      %126 = arith.mulf %120, %125 : vector<8x1xf32>
      %cst_99 = arith.constant dense<0.000000e+00> : vector<8xf32>
      %127 = vector.multi_reduction <add>, %123, %cst_99 [1] : vector<8x8xf32> to vector<8xf32>
      %128 = vector.shape_cast %127 : vector<8xf32> to vector<8x1xf32>
      %129 = arith.addf %126, %128 : vector<8x1xf32>
      %c2_100 = arith.constant 2 : index
      %c0_101 = arith.constant 0 : index
      %c0_102 = arith.constant 0 : index
      %130 = vector.load %arg9[%c2_100, %c0_101, %c0_102] : memref<4x8x1xf32, #tpu.memory_space<vmem>>, vector<1x8x1xf32>
      %131 = vector.shape_cast %130 : vector<1x8x1xf32> to vector<8x1xf32>
      %132 = vector.shape_cast %129 : vector<8x1xf32> to vector<1x8x1xf32>
      tpu.vector_store %arg9[%c2_100, %c0_101, %c0_102], %132 {strides = array<i32>} : memref<4x8x1xf32, #tpu.memory_space<vmem>>, vector<1x8x1xf32>,
      %c0_103 = arith.constant 0 : index
      %c16 = arith.constant 16 : index
      %133 = vector.load %arg10[%c0_103, %c16] : memref<8x32xf32, #tpu.memory_space<vmem>>, vector<8x8xf32>
      %134 = vector.broadcast %120 : vector<8x1xf32> to vector<8x8xf32>
      %135 = arith.mulf %134, %133 : vector<8x8xf32>
      %136 = arith.truncf %123 : vector<8x8xf32> to vector<8x8xbf16>
      %cst_104 = arith.constant dense<0.000000e+00> : vector<8x8xf32>
      %137 = tpu.matmul %136, %110, %cst_104 {dimension_numbers = #tpu.dot_dimension_numbers<[1], [0], [0], [1], [0, 0, 1, 1], [], []>} : vector<8x8xbf16>, vector<8x8xbf16>, vector<8x8xf32> -> vector<8x8xf32>
      %138 = arith.addf %135, %137 : vector<8x8xf32>
      %c0_105 = arith.constant 0 : index
      %c16_106 = arith.constant 16 : index
      %139 = vector.load %arg10[%c0_105, %c16_106] : memref<8x32xf32, #tpu.memory_space<vmem>>, vector<8x8xf32>
      tpu.vector_store %arg10[%c0_105, %c16_106], %138 {strides = array<i32>} : memref<8x32xf32, #tpu.memory_space<vmem>>, vector<8x8xf32>,
      %c2_107 = arith.constant 2 : index
      %c0_108 = arith.constant 0 : index
      %c0_109 = arith.constant 0 : index
      %140 = vector.load %arg8[%c2_107, %c0_108, %c0_109] : memref<4x8x1xf32, #tpu.memory_space<vmem>>, vector<1x8x1xf32>
      %141 = vector.shape_cast %140 : vector<1x8x1xf32> to vector<8x1xf32>
      %142 = vector.shape_cast %118 : vector<8x1xf32> to vector<1x8x1xf32>
      tpu.vector_store %arg8[%c2_107, %c0_108, %c0_109], %142 {strides = array<i32>} : memref<4x8x1xf32, #tpu.memory_space<vmem>>, vector<1x8x1xf32>,
      %c0_110 = arith.constant 0 : index
      %c0_111 = arith.constant 0 : index
      %c0_112 = arith.constant 0 : index
      %c3 = arith.constant 3 : index
      %c0_113 = arith.constant 0 : index
      %143 = vector.load %arg4[%c0_110, %c0_111, %c0_112, %c3, %c0_113] : memref<1x8x1x4x8xbf16, #tpu.memory_space<vmem>>, vector<1x8x1x1x8xbf16>
      %144 = vector.shape_cast %143 : vector<1x8x1x1x8xbf16> to vector<8x8xbf16>
      %c0_114 = arith.constant 0 : index
      %c0_115 = arith.constant 0 : index
      %c0_116 = arith.constant 0 : index
      %c3_117 = arith.constant 3 : index
      %c0_118 = arith.constant 0 : index
      %145 = vector.load %arg5[%c0_114, %c0_115, %c0_116, %c3_117, %c0_118] : memref<1x8x1x4x8xbf16, #tpu.memory_space<vmem>>, vector<1x8x1x1x8xbf16>
      %146 = vector.shape_cast %145 : vector<1x8x1x1x8xbf16> to vector<8x8xbf16>
      %c0_119 = arith.constant 0 : index
      %c0_120 = arith.constant 0 : index
      %c0_121 = arith.constant 0 : index
      %c3_122 = arith.constant 3 : index
      %c0_123 = arith.constant 0 : index
      %147 = vector.load %arg6[%c0_119, %c0_120, %c0_121, %c3_122, %c0_123] : memref<1x8x1x4x8xbf16, #tpu.memory_space<vmem>>, vector<1x8x1x1x8xbf16>
      %148 = vector.shape_cast %147 : vector<1x8x1x1x8xbf16> to vector<8x8xbf16>
      %cst_124 = arith.constant dense<0.000000e+00> : vector<8x8xf32>
      %149 = tpu.matmul %144, %146, %cst_124 {dimension_numbers = #tpu.dot_dimension_numbers<[1], [1], [0], [0], [0, 0, 1, 0], [], []>} : vector<8x8xbf16>, vector<8x8xbf16>, vector<8x8xf32> -> vector<8x8xf32>
      %cst_125 = arith.constant -2.38197633E+38 : f32
      %150 = vector.broadcast %cst_125 : f32 to vector<8x8xf32>
      %151 = arith.select %28, %149, %150 : vector<8x8xi1>, vector<8x8xf32>
      %c3_126 = arith.constant 3 : index
      %c0_127 = arith.constant 0 : index
      %c0_128 = arith.constant 0 : index
      %152 = vector.load %arg8[%c3_126, %c0_127, %c0_128] : memref<4x8x1xf32, #tpu.memory_space<vmem>>, vector<1x8x1xf32>
      %153 = vector.shape_cast %152 : vector<1x8x1xf32> to vector<8x1xf32>
      %cst_129 = arith.constant dense<0xFF800000> : vector<8xf32>
      %154 = vector.multi_reduction <maximumf>, %151, %cst_129 [1] : vector<8x8xf32> to vector<8xf32>
      %155 = vector.shape_cast %154 : vector<8xf32> to vector<8x1xf32>
      %156 = arith.maximumf %153, %155 : vector<8x1xf32>
      %157 = arith.subf %153, %156 : vector<8x1xf32>
      %158 = math.exp %157 : vector<8x1xf32>
      %159 = vector.broadcast %156 : vector<8x1xf32> to vector<8x8xf32>
      %160 = arith.subf %151, %159 : vector<8x8xf32>
      %161 = math.exp %160 : vector<8x8xf32>
      %c3_130 = arith.constant 3 : index
      %c0_131 = arith.constant 0 : index
      %c0_132 = arith.constant 0 : index
      %162 = vector.load %arg9[%c3_130, %c0_131, %c0_132] : memref<4x8x1xf32, #tpu.memory_space<vmem>>, vector<1x8x1xf32>
      %163 = vector.shape_cast %162 : vector<1x8x1xf32> to vector<8x1xf32>
      %164 = arith.mulf %158, %163 : vector<8x1xf32>
      %cst_133 = arith.constant dense<0.000000e+00> : vector<8xf32>
      %165 = vector.multi_reduction <add>, %161, %cst_133 [1] : vector<8x8xf32> to vector<8xf32>
      %166 = vector.shape_cast %165 : vector<8xf32> to vector<8x1xf32>
      %167 = arith.addf %164, %166 : vector<8x1xf32>
      %c3_134 = arith.constant 3 : index
      %c0_135 = arith.constant 0 : index
      %c0_136 = arith.constant 0 : index
      %168 = vector.load %arg9[%c3_134, %c0_135, %c0_136] : memref<4x8x1xf32, #tpu.memory_space<vmem>>, vector<1x8x1xf32>
      %169 = vector.shape_cast %168 : vector<1x8x1xf32> to vector<8x1xf32>
      %170 = vector.shape_cast %167 : vector<8x1xf32> to vector<1x8x1xf32>
      tpu.vector_store %arg9[%c3_134, %c0_135, %c0_136], %170 {strides = array<i32>} : memref<4x8x1xf32, #tpu.memory_space<vmem>>, vector<1x8x1xf32>,
      %c0_137 = arith.constant 0 : index
      %c24 = arith.constant 24 : index
      %171 = vector.load %arg10[%c0_137, %c24] : memref<8x32xf32, #tpu.memory_space<vmem>>, vector<8x8xf32>
      %172 = vector.broadcast %158 : vector<8x1xf32> to vector<8x8xf32>
      %173 = arith.mulf %172, %171 : vector<8x8xf32>
      %174 = arith.truncf %161 : vector<8x8xf32> to vector<8x8xbf16>
      %cst_138 = arith.constant dense<0.000000e+00> : vector<8x8xf32>
      %175 = tpu.matmul %174, %148, %cst_138 {dimension_numbers = #tpu.dot_dimension_numbers<[1], [0], [0], [1], [0, 0, 1, 1], [], []>} : vector<8x8xbf16>, vector<8x8xbf16>, vector<8x8xf32> -> vector<8x8xf32>
      %176 = arith.addf %173, %175 : vector<8x8xf32>
      %c0_139 = arith.constant 0 : index
      %c24_140 = arith.constant 24 : index
      %177 = vector.load %arg10[%c0_139, %c24_140] : memref<8x32xf32, #tpu.memory_space<vmem>>, vector<8x8xf32>
      tpu.vector_store %arg10[%c0_139, %c24_140], %176 {strides = array<i32>} : memref<8x32xf32, #tpu.memory_space<vmem>>, vector<8x8xf32>,
      %c3_141 = arith.constant 3 : index
      %c0_142 = arith.constant 0 : index
      %c0_143 = arith.constant 0 : index
      %178 = vector.load %arg8[%c3_141, %c0_142, %c0_143] : memref<4x8x1xf32, #tpu.memory_space<vmem>>, vector<1x8x1xf32>
      %179 = vector.shape_cast %178 : vector<1x8x1xf32> to vector<8x1xf32>
      %180 = vector.shape_cast %156 : vector<8x1xf32> to vector<1x8x1xf32>
      tpu.vector_store %arg8[%c3_141, %c0_142, %c0_143], %180 {strides = array<i32>} : memref<4x8x1xf32, #tpu.memory_space<vmem>>, vector<1x8x1xf32>,
    } else {
    }
    %true = arith.constant true
    %14 = arith.xori %11, %true : i1
    %15 = arith.extui %14 : i1 to i32
    %c0_i32_4 = arith.constant 0 : i32
    %16 = arith.cmpi ne, %15, %c0_i32_4 : i32
    scf.if %16 {
      %c0 = arith.constant 0 : index
      %c0_8 = arith.constant 0 : index
      %c0_9 = arith.constant 0 : index
      %c0_10 = arith.constant 0 : index
      %c0_11 = arith.constant 0 : index
      %22 = vector.load %arg4[%c0, %c0_8, %c0_9, %c0_10, %c0_11] : memref<1x8x1x4x8xbf16, #tpu.memory_space<vmem>>, vector<1x8x1x1x8xbf16>
      %23 = vector.shape_cast %22 : vector<1x8x1x1x8xbf16> to vector<8x8xbf16>
      %c0_12 = arith.constant 0 : index
      %c0_13 = arith.constant 0 : index
      %c0_14 = arith.constant 0 : index
      %c0_15 = arith.constant 0 : index
      %c0_16 = arith.constant 0 : index
      %24 = vector.load %arg5[%c0_12, %c0_13, %c0_14, %c0_15, %c0_16] : memref<1x8x1x4x8xbf16, #tpu.memory_space<vmem>>, vector<1x8x1x1x8xbf16>
      %25 = vector.shape_cast %24 : vector<1x8x1x1x8xbf16> to vector<8x8xbf16>
      %c0_17 = arith.constant 0 : index
      %c0_18 = arith.constant 0 : index
      %c0_19 = arith.constant 0 : index
      %c0_20 = arith.constant 0 : index
      %c0_21 = arith.constant 0 : index
      %26 = vector.load %arg6[%c0_17, %c0_18, %c0_19, %c0_20, %c0_21] : memref<1x8x1x4x8xbf16, #tpu.memory_space<vmem>>, vector<1x8x1x1x8xbf16>
      %27 = vector.shape_cast %26 : vector<1x8x1x1x8xbf16> to vector<8x8xbf16>
      %cst = arith.constant dense<0.000000e+00> : vector<8x8xf32>
      %28 = tpu.matmul %23, %25, %cst {dimension_numbers = #tpu.dot_dimension_numbers<[1], [1], [0], [0], [0, 0, 1, 0], [], []>} : vector<8x8xbf16>, vector<8x8xbf16>, vector<8x8xf32> -> vector<8x8xf32>
      %c0_22 = arith.constant 0 : index
      %c0_23 = arith.constant 0 : index
      %c0_24 = arith.constant 0 : index
      %29 = vector.load %arg8[%c0_22, %c0_23, %c0_24] : memref<4x8x1xf32, #tpu.memory_space<vmem>>, vector<1x8x1xf32>
      %30 = vector.shape_cast %29 : vector<1x8x1xf32> to vector<8x1xf32>
      %cst_25 = arith.constant dense<0xFF800000> : vector<8xf32>
      %31 = vector.multi_reduction <maximumf>, %28, %cst_25 [1] : vector<8x8xf32> to vector<8xf32>
      %32 = vector.shape_cast %31 : vector<8xf32> to vector<8x1xf32>
      %33 = arith.maximumf %30, %32 : vector<8x1xf32>
      %34 = arith.subf %30, %33 : vector<8x1xf32>
      %35 = math.exp %34 : vector<8x1xf32>
      %36 = vector.broadcast %33 : vector<8x1xf32> to vector<8x8xf32>
      %37 = arith.subf %28, %36 : vector<8x8xf32>
      %38 = math.exp %37 : vector<8x8xf32>
      %c0_26 = arith.constant 0 : index
      %c0_27 = arith.constant 0 : index
      %c0_28 = arith.constant 0 : index
      %39 = vector.load %arg9[%c0_26, %c0_27, %c0_28] : memref<4x8x1xf32, #tpu.memory_space<vmem>>, vector<1x8x1xf32>
      %40 = vector.shape_cast %39 : vector<1x8x1xf32> to vector<8x1xf32>
      %41 = arith.mulf %35, %40 : vector<8x1xf32>
      %cst_29 = arith.constant dense<0.000000e+00> : vector<8xf32>
      %42 = vector.multi_reduction <add>, %38, %cst_29 [1] : vector<8x8xf32> to vector<8xf32>
      %43 = vector.shape_cast %42 : vector<8xf32> to vector<8x1xf32>
      %44 = arith.addf %41, %43 : vector<8x1xf32>
      %c0_30 = arith.constant 0 : index
      %c0_31 = arith.constant 0 : index
      %c0_32 = arith.constant 0 : index
      %45 = vector.load %arg9[%c0_30, %c0_31, %c0_32] : memref<4x8x1xf32, #tpu.memory_space<vmem>>, vector<1x8x1xf32>
      %46 = vector.shape_cast %45 : vector<1x8x1xf32> to vector<8x1xf32>
      %47 = vector.shape_cast %44 : vector<8x1xf32> to vector<1x8x1xf32>
      tpu.vector_store %arg9[%c0_30, %c0_31, %c0_32], %47 {strides = array<i32>} : memref<4x8x1xf32, #tpu.memory_space<vmem>>, vector<1x8x1xf32>,
      %c0_33 = arith.constant 0 : index
      %c0_34 = arith.constant 0 : index
      %48 = vector.load %arg10[%c0_33, %c0_34] : memref<8x32xf32, #tpu.memory_space<vmem>>, vector<8x8xf32>
      %49 = vector.broadcast %35 : vector<8x1xf32> to vector<8x8xf32>
      %50 = arith.mulf %49, %48 : vector<8x8xf32>
      %51 = arith.truncf %38 : vector<8x8xf32> to vector<8x8xbf16>
      %cst_35 = arith.constant dense<0.000000e+00> : vector<8x8xf32>
      %52 = tpu.matmul %51, %27, %cst_35 {dimension_numbers = #tpu.dot_dimension_numbers<[1], [0], [0], [1], [0, 0, 1, 1], [], []>} : vector<8x8xbf16>, vector<8x8xbf16>, vector<8x8xf32> -> vector<8x8xf32>
      %53 = arith.addf %50, %52 : vector<8x8xf32>
      %c0_36 = arith.constant 0 : index
      %c0_37 = arith.constant 0 : index
      %54 = vector.load %arg10[%c0_36, %c0_37] : memref<8x32xf32, #tpu.memory_space<vmem>>, vector<8x8xf32>
      tpu.vector_store %arg10[%c0_36, %c0_37], %53 {strides = array<i32>} : memref<8x32xf32, #tpu.memory_space<vmem>>, vector<8x8xf32>,
      %c0_38 = arith.constant 0 : index
      %c0_39 = arith.constant 0 : index
      %c0_40 = arith.constant 0 : index
      %55 = vector.load %arg8[%c0_38, %c0_39, %c0_40] : memref<4x8x1xf32, #tpu.memory_space<vmem>>, vector<1x8x1xf32>
      %56 = vector.shape_cast %55 : vector<1x8x1xf32> to vector<8x1xf32>
      %57 = vector.shape_cast %33 : vector<8x1xf32> to vector<1x8x1xf32>
      tpu.vector_store %arg8[%c0_38, %c0_39, %c0_40], %57 {strides = array<i32>} : memref<4x8x1xf32, #tpu.memory_space<vmem>>, vector<1x8x1xf32>,
      %c0_41 = arith.constant 0 : index
      %c0_42 = arith.constant 0 : index
      %c0_43 = arith.constant 0 : index
      %c1 = arith.constant 1 : index
      %c0_44 = arith.constant 0 : index
      %58 = vector.load %arg4[%c0_41, %c0_42, %c0_43, %c1, %c0_44] : memref<1x8x1x4x8xbf16, #tpu.memory_space<vmem>>, vector<1x8x1x1x8xbf16>
      %59 = vector.shape_cast %58 : vector<1x8x1x1x8xbf16> to vector<8x8xbf16>
      %c0_45 = arith.constant 0 : index
      %c0_46 = arith.constant 0 : index
      %c0_47 = arith.constant 0 : index
      %c1_48 = arith.constant 1 : index
      %c0_49 = arith.constant 0 : index
      %60 = vector.load %arg5[%c0_45, %c0_46, %c0_47, %c1_48, %c0_49] : memref<1x8x1x4x8xbf16, #tpu.memory_space<vmem>>, vector<1x8x1x1x8xbf16>
      %61 = vector.shape_cast %60 : vector<1x8x1x1x8xbf16> to vector<8x8xbf16>
      %c0_50 = arith.constant 0 : index
      %c0_51 = arith.constant 0 : index
      %c0_52 = arith.constant 0 : index
      %c1_53 = arith.constant 1 : index
      %c0_54 = arith.constant 0 : index
      %62 = vector.load %arg6[%c0_50, %c0_51, %c0_52, %c1_53, %c0_54] : memref<1x8x1x4x8xbf16, #tpu.memory_space<vmem>>, vector<1x8x1x1x8xbf16>
      %63 = vector.shape_cast %62 : vector<1x8x1x1x8xbf16> to vector<8x8xbf16>
      %cst_55 = arith.constant dense<0.000000e+00> : vector<8x8xf32>
      %64 = tpu.matmul %59, %61, %cst_55 {dimension_numbers = #tpu.dot_dimension_numbers<[1], [1], [0], [0], [0, 0, 1, 0], [], []>} : vector<8x8xbf16>, vector<8x8xbf16>, vector<8x8xf32> -> vector<8x8xf32>
      %c1_56 = arith.constant 1 : index
      %c0_57 = arith.constant 0 : index
      %c0_58 = arith.constant 0 : index
      %65 = vector.load %arg8[%c1_56, %c0_57, %c0_58] : memref<4x8x1xf32, #tpu.memory_space<vmem>>, vector<1x8x1xf32>
      %66 = vector.shape_cast %65 : vector<1x8x1xf32> to vector<8x1xf32>
      %cst_59 = arith.constant dense<0xFF800000> : vector<8xf32>
      %67 = vector.multi_reduction <maximumf>, %64, %cst_59 [1] : vector<8x8xf32> to vector<8xf32>
      %68 = vector.shape_cast %67 : vector<8xf32> to vector<8x1xf32>
      %69 = arith.maximumf %66, %68 : vector<8x1xf32>
      %70 = arith.subf %66, %69 : vector<8x1xf32>
      %71 = math.exp %70 : vector<8x1xf32>
      %72 = vector.broadcast %69 : vector<8x1xf32> to vector<8x8xf32>
      %73 = arith.subf %64, %72 : vector<8x8xf32>
      %74 = math.exp %73 : vector<8x8xf32>
      %c1_60 = arith.constant 1 : index
      %c0_61 = arith.constant 0 : index
      %c0_62 = arith.constant 0 : index
      %75 = vector.load %arg9[%c1_60, %c0_61, %c0_62] : memref<4x8x1xf32, #tpu.memory_space<vmem>>, vector<1x8x1xf32>
      %76 = vector.shape_cast %75 : vector<1x8x1xf32> to vector<8x1xf32>
      %77 = arith.mulf %71, %76 : vector<8x1xf32>
      %cst_63 = arith.constant dense<0.000000e+00> : vector<8xf32>
      %78 = vector.multi_reduction <add>, %74, %cst_63 [1] : vector<8x8xf32> to vector<8xf32>
      %79 = vector.shape_cast %78 : vector<8xf32> to vector<8x1xf32>
      %80 = arith.addf %77, %79 : vector<8x1xf32>
      %c1_64 = arith.constant 1 : index
      %c0_65 = arith.constant 0 : index
      %c0_66 = arith.constant 0 : index
      %81 = vector.load %arg9[%c1_64, %c0_65, %c0_66] : memref<4x8x1xf32, #tpu.memory_space<vmem>>, vector<1x8x1xf32>
      %82 = vector.shape_cast %81 : vector<1x8x1xf32> to vector<8x1xf32>
      %83 = vector.shape_cast %80 : vector<8x1xf32> to vector<1x8x1xf32>
      tpu.vector_store %arg9[%c1_64, %c0_65, %c0_66], %83 {strides = array<i32>} : memref<4x8x1xf32, #tpu.memory_space<vmem>>, vector<1x8x1xf32>,
      %c0_67 = arith.constant 0 : index
      %c8 = arith.constant 8 : index
      %84 = vector.load %arg10[%c0_67, %c8] : memref<8x32xf32, #tpu.memory_space<vmem>>, vector<8x8xf32>
      %85 = vector.broadcast %71 : vector<8x1xf32> to vector<8x8xf32>
      %86 = arith.mulf %85, %84 : vector<8x8xf32>
      %87 = arith.truncf %74 : vector<8x8xf32> to vector<8x8xbf16>
      %cst_68 = arith.constant dense<0.000000e+00> : vector<8x8xf32>
      %88 = tpu.matmul %87, %63, %cst_68 {dimension_numbers = #tpu.dot_dimension_numbers<[1], [0], [0], [1], [0, 0, 1, 1], [], []>} : vector<8x8xbf16>, vector<8x8xbf16>, vector<8x8xf32> -> vector<8x8xf32>
      %89 = arith.addf %86, %88 : vector<8x8xf32>
      %c0_69 = arith.constant 0 : index
      %c8_70 = arith.constant 8 : index
      %90 = vector.load %arg10[%c0_69, %c8_70] : memref<8x32xf32, #tpu.memory_space<vmem>>, vector<8x8xf32>
      tpu.vector_store %arg10[%c0_69, %c8_70], %89 {strides = array<i32>} : memref<8x32xf32, #tpu.memory_space<vmem>>, vector<8x8xf32>,
      %c1_71 = arith.constant 1 : index
      %c0_72 = arith.constant 0 : index
      %c0_73 = arith.constant 0 : index
      %91 = vector.load %arg8[%c1_71, %c0_72, %c0_73] : memref<4x8x1xf32, #tpu.memory_space<vmem>>, vector<1x8x1xf32>
      %92 = vector.shape_cast %91 : vector<1x8x1xf32> to vector<8x1xf32>
      %93 = vector.shape_cast %69 : vector<8x1xf32> to vector<1x8x1xf32>
      tpu.vector_store %arg8[%c1_71, %c0_72, %c0_73], %93 {strides = array<i32>} : memref<4x8x1xf32, #tpu.memory_space<vmem>>, vector<1x8x1xf32>,
      %c0_74 = arith.constant 0 : index
      %c0_75 = arith.constant 0 : index
      %c0_76 = arith.constant 0 : index
      %c2 = arith.constant 2 : index
      %c0_77 = arith.constant 0 : index
      %94 = vector.load %arg4[%c0_74, %c0_75, %c0_76, %c2, %c0_77] : memref<1x8x1x4x8xbf16, #tpu.memory_space<vmem>>, vector<1x8x1x1x8xbf16>
      %95 = vector.shape_cast %94 : vector<1x8x1x1x8xbf16> to vector<8x8xbf16>
      %c0_78 = arith.constant 0 : index
      %c0_79 = arith.constant 0 : index
      %c0_80 = arith.constant 0 : index
      %c2_81 = arith.constant 2 : index
      %c0_82 = arith.constant 0 : index
      %96 = vector.load %arg5[%c0_78, %c0_79, %c0_80, %c2_81, %c0_82] : memref<1x8x1x4x8xbf16, #tpu.memory_space<vmem>>, vector<1x8x1x1x8xbf16>
      %97 = vector.shape_cast %96 : vector<1x8x1x1x8xbf16> to vector<8x8xbf16>
      %c0_83 = arith.constant 0 : index
      %c0_84 = arith.constant 0 : index
      %c0_85 = arith.constant 0 : index
      %c2_86 = arith.constant 2 : index
      %c0_87 = arith.constant 0 : index
      %98 = vector.load %arg6[%c0_83, %c0_84, %c0_85, %c2_86, %c0_87] : memref<1x8x1x4x8xbf16, #tpu.memory_space<vmem>>, vector<1x8x1x1x8xbf16>
      %99 = vector.shape_cast %98 : vector<1x8x1x1x8xbf16> to vector<8x8xbf16>
      %cst_88 = arith.constant dense<0.000000e+00> : vector<8x8xf32>
      %100 = tpu.matmul %95, %97, %cst_88 {dimension_numbers = #tpu.dot_dimension_numbers<[1], [1], [0], [0], [0, 0, 1, 0], [], []>} : vector<8x8xbf16>, vector<8x8xbf16>, vector<8x8xf32> -> vector<8x8xf32>
      %c2_89 = arith.constant 2 : index
      %c0_90 = arith.constant 0 : index
      %c0_91 = arith.constant 0 : index
      %101 = vector.load %arg8[%c2_89, %c0_90, %c0_91] : memref<4x8x1xf32, #tpu.memory_space<vmem>>, vector<1x8x1xf32>
      %102 = vector.shape_cast %101 : vector<1x8x1xf32> to vector<8x1xf32>
      %cst_92 = arith.constant dense<0xFF800000> : vector<8xf32>
      %103 = vector.multi_reduction <maximumf>, %100, %cst_92 [1] : vector<8x8xf32> to vector<8xf32>
      %104 = vector.shape_cast %103 : vector<8xf32> to vector<8x1xf32>
      %105 = arith.maximumf %102, %104 : vector<8x1xf32>
      %106 = arith.subf %102, %105 : vector<8x1xf32>
      %107 = math.exp %106 : vector<8x1xf32>
      %108 = vector.broadcast %105 : vector<8x1xf32> to vector<8x8xf32>
      %109 = arith.subf %100, %108 : vector<8x8xf32>
      %110 = math.exp %109 : vector<8x8xf32>
      %c2_93 = arith.constant 2 : index
      %c0_94 = arith.constant 0 : index
      %c0_95 = arith.constant 0 : index
      %111 = vector.load %arg9[%c2_93, %c0_94, %c0_95] : memref<4x8x1xf32, #tpu.memory_space<vmem>>, vector<1x8x1xf32>
      %112 = vector.shape_cast %111 : vector<1x8x1xf32> to vector<8x1xf32>
      %113 = arith.mulf %107, %112 : vector<8x1xf32>
      %cst_96 = arith.constant dense<0.000000e+00> : vector<8xf32>
      %114 = vector.multi_reduction <add>, %110, %cst_96 [1] : vector<8x8xf32> to vector<8xf32>
      %115 = vector.shape_cast %114 : vector<8xf32> to vector<8x1xf32>
      %116 = arith.addf %113, %115 : vector<8x1xf32>
      %c2_97 = arith.constant 2 : index
      %c0_98 = arith.constant 0 : index
      %c0_99 = arith.constant 0 : index
      %117 = vector.load %arg9[%c2_97, %c0_98, %c0_99] : memref<4x8x1xf32, #tpu.memory_space<vmem>>, vector<1x8x1xf32>
      %118 = vector.shape_cast %117 : vector<1x8x1xf32> to vector<8x1xf32>
      %119 = vector.shape_cast %116 : vector<8x1xf32> to vector<1x8x1xf32>
      tpu.vector_store %arg9[%c2_97, %c0_98, %c0_99], %119 {strides = array<i32>} : memref<4x8x1xf32, #tpu.memory_space<vmem>>, vector<1x8x1xf32>,
      %c0_100 = arith.constant 0 : index
      %c16 = arith.constant 16 : index
      %120 = vector.load %arg10[%c0_100, %c16] : memref<8x32xf32, #tpu.memory_space<vmem>>, vector<8x8xf32>
      %121 = vector.broadcast %107 : vector<8x1xf32> to vector<8x8xf32>
      %122 = arith.mulf %121, %120 : vector<8x8xf32>
      %123 = arith.truncf %110 : vector<8x8xf32> to vector<8x8xbf16>
      %cst_101 = arith.constant dense<0.000000e+00> : vector<8x8xf32>
      %124 = tpu.matmul %123, %99, %cst_101 {dimension_numbers = #tpu.dot_dimension_numbers<[1], [0], [0], [1], [0, 0, 1, 1], [], []>} : vector<8x8xbf16>, vector<8x8xbf16>, vector<8x8xf32> -> vector<8x8xf32>
      %125 = arith.addf %122, %124 : vector<8x8xf32>
      %c0_102 = arith.constant 0 : index
      %c16_103 = arith.constant 16 : index
      %126 = vector.load %arg10[%c0_102, %c16_103] : memref<8x32xf32, #tpu.memory_space<vmem>>, vector<8x8xf32>
      tpu.vector_store %arg10[%c0_102, %c16_103], %125 {strides = array<i32>} : memref<8x32xf32, #tpu.memory_space<vmem>>, vector<8x8xf32>,
      %c2_104 = arith.constant 2 : index
      %c0_105 = arith.constant 0 : index
      %c0_106 = arith.constant 0 : index
      %127 = vector.load %arg8[%c2_104, %c0_105, %c0_106] : memref<4x8x1xf32, #tpu.memory_space<vmem>>, vector<1x8x1xf32>
      %128 = vector.shape_cast %127 : vector<1x8x1xf32> to vector<8x1xf32>
      %129 = vector.shape_cast %105 : vector<8x1xf32> to vector<1x8x1xf32>
      tpu.vector_store %arg8[%c2_104, %c0_105, %c0_106], %129 {strides = array<i32>} : memref<4x8x1xf32, #tpu.memory_space<vmem>>, vector<1x8x1xf32>,
      %c0_107 = arith.constant 0 : index
      %c0_108 = arith.constant 0 : index
      %c0_109 = arith.constant 0 : index
      %c3 = arith.constant 3 : index
      %c0_110 = arith.constant 0 : index
      %130 = vector.load %arg4[%c0_107, %c0_108, %c0_109, %c3, %c0_110] : memref<1x8x1x4x8xbf16, #tpu.memory_space<vmem>>, vector<1x8x1x1x8xbf16>
      %131 = vector.shape_cast %130 : vector<1x8x1x1x8xbf16> to vector<8x8xbf16>
      %c0_111 = arith.constant 0 : index
      %c0_112 = arith.constant 0 : index
      %c0_113 = arith.constant 0 : index
      %c3_114 = arith.constant 3 : index
      %c0_115 = arith.constant 0 : index
      %132 = vector.load %arg5[%c0_111, %c0_112, %c0_113, %c3_114, %c0_115] : memref<1x8x1x4x8xbf16, #tpu.memory_space<vmem>>, vector<1x8x1x1x8xbf16>
      %133 = vector.shape_cast %132 : vector<1x8x1x1x8xbf16> to vector<8x8xbf16>
      %c0_116 = arith.constant 0 : index
      %c0_117 = arith.constant 0 : index
      %c0_118 = arith.constant 0 : index
      %c3_119 = arith.constant 3 : index
      %c0_120 = arith.constant 0 : index
      %134 = vector.load %arg6[%c0_116, %c0_117, %c0_118, %c3_119, %c0_120] : memref<1x8x1x4x8xbf16, #tpu.memory_space<vmem>>, vector<1x8x1x1x8xbf16>
      %135 = vector.shape_cast %134 : vector<1x8x1x1x8xbf16> to vector<8x8xbf16>
      %cst_121 = arith.constant dense<0.000000e+00> : vector<8x8xf32>
      %136 = tpu.matmul %131, %133, %cst_121 {dimension_numbers = #tpu.dot_dimension_numbers<[1], [1], [0], [0], [0, 0, 1, 0], [], []>} : vector<8x8xbf16>, vector<8x8xbf16>, vector<8x8xf32> -> vector<8x8xf32>
      %c3_122 = arith.constant 3 : index
      %c0_123 = arith.constant 0 : index
      %c0_124 = arith.constant 0 : index
      %137 = vector.load %arg8[%c3_122, %c0_123, %c0_124] : memref<4x8x1xf32, #tpu.memory_space<vmem>>, vector<1x8x1xf32>
      %138 = vector.shape_cast %137 : vector<1x8x1xf32> to vector<8x1xf32>
      %cst_125 = arith.constant dense<0xFF800000> : vector<8xf32>
      %139 = vector.multi_reduction <maximumf>, %136, %cst_125 [1] : vector<8x8xf32> to vector<8xf32>
      %140 = vector.shape_cast %139 : vector<8xf32> to vector<8x1xf32>
      %141 = arith.maximumf %138, %140 : vector<8x1xf32>
      %142 = arith.subf %138, %141 : vector<8x1xf32>
      %143 = math.exp %142 : vector<8x1xf32>
      %144 = vector.broadcast %141 : vector<8x1xf32> to vector<8x8xf32>
      %145 = arith.subf %136, %144 : vector<8x8xf32>
      %146 = math.exp %145 : vector<8x8xf32>
      %c3_126 = arith.constant 3 : index
      %c0_127 = arith.constant 0 : index
      %c0_128 = arith.constant 0 : index
      %147 = vector.load %arg9[%c3_126, %c0_127, %c0_128] : memref<4x8x1xf32, #tpu.memory_space<vmem>>, vector<1x8x1xf32>
      %148 = vector.shape_cast %147 : vector<1x8x1xf32> to vector<8x1xf32>
      %149 = arith.mulf %143, %148 : vector<8x1xf32>
      %cst_129 = arith.constant dense<0.000000e+00> : vector<8xf32>
      %150 = vector.multi_reduction <add>, %146, %cst_129 [1] : vector<8x8xf32> to vector<8xf32>
      %151 = vector.shape_cast %150 : vector<8xf32> to vector<8x1xf32>
      %152 = arith.addf %149, %151 : vector<8x1xf32>
      %c3_130 = arith.constant 3 : index
      %c0_131 = arith.constant 0 : index
      %c0_132 = arith.constant 0 : index
      %153 = vector.load %arg9[%c3_130, %c0_131, %c0_132] : memref<4x8x1xf32, #tpu.memory_space<vmem>>, vector<1x8x1xf32>
      %154 = vector.shape_cast %153 : vector<1x8x1xf32> to vector<8x1xf32>
      %155 = vector.shape_cast %152 : vector<8x1xf32> to vector<1x8x1xf32>
      tpu.vector_store %arg9[%c3_130, %c0_131, %c0_132], %155 {strides = array<i32>} : memref<4x8x1xf32, #tpu.memory_space<vmem>>, vector<1x8x1xf32>,
      %c0_133 = arith.constant 0 : index
      %c24 = arith.constant 24 : index
      %156 = vector.load %arg10[%c0_133, %c24] : memref<8x32xf32, #tpu.memory_space<vmem>>, vector<8x8xf32>
      %157 = vector.broadcast %143 : vector<8x1xf32> to vector<8x8xf32>
      %158 = arith.mulf %157, %156 : vector<8x8xf32>
      %159 = arith.truncf %146 : vector<8x8xf32> to vector<8x8xbf16>
      %cst_134 = arith.constant dense<0.000000e+00> : vector<8x8xf32>
      %160 = tpu.matmul %159, %135, %cst_134 {dimension_numbers = #tpu.dot_dimension_numbers<[1], [0], [0], [1], [0, 0, 1, 1], [], []>} : vector<8x8xbf16>, vector<8x8xbf16>, vector<8x8xf32> -> vector<8x8xf32>
      %161 = arith.addf %158, %160 : vector<8x8xf32>
      %c0_135 = arith.constant 0 : index
      %c24_136 = arith.constant 24 : index
      %162 = vector.load %arg10[%c0_135, %c24_136] : memref<8x32xf32, #tpu.memory_space<vmem>>, vector<8x8xf32>
      tpu.vector_store %arg10[%c0_135, %c24_136], %161 {strides = array<i32>} : memref<8x32xf32, #tpu.memory_space<vmem>>, vector<8x8xf32>,
      %c3_137 = arith.constant 3 : index
      %c0_138 = arith.constant 0 : index
      %c0_139 = arith.constant 0 : index
      %163 = vector.load %arg8[%c3_137, %c0_138, %c0_139] : memref<4x8x1xf32, #tpu.memory_space<vmem>>, vector<1x8x1xf32>
      %164 = vector.shape_cast %163 : vector<1x8x1xf32> to vector<8x1xf32>
      %165 = vector.shape_cast %141 : vector<8x1xf32> to vector<1x8x1xf32>
      tpu.vector_store %arg8[%c3_137, %c0_138, %c0_139], %165 {strides = array<i32>} : memref<4x8x1xf32, #tpu.memory_space<vmem>>, vector<1x8x1xf32>,
    } else {
    }
    %c8_i32_5 = arith.constant 8 : i32
    %17 = arith.addi %5, %c8_i32_5 : i32
    %c8_i32_6 = arith.constant 8 : i32
    %18 = arith.addi %4, %c8_i32_6 : i32
    %19 = arith.cmpi sge, %17, %18 : i32
    %20 = arith.extui %19 : i1 to i32
    %c0_i32_7 = arith.constant 0 : i32
    %21 = arith.cmpi ne, %20, %c0_i32_7 : i32
    scf.if %21 {
      %c0 = arith.constant 0 : index
      %c0_8 = arith.constant 0 : index
      %22 = vector.load %arg10[%c0, %c0_8] : memref<8x32xf32, #tpu.memory_space<vmem>>, vector<8x8xf32>
      %c0_9 = arith.constant 0 : index
      %c0_10 = arith.constant 0 : index
      %c0_11 = arith.constant 0 : index
      %23 = vector.load %arg9[%c0_9, %c0_10, %c0_11] : memref<4x8x1xf32, #tpu.memory_space<vmem>>, vector<1x8x1xf32>
      %24 = vector.shape_cast %23 : vector<1x8x1xf32> to vector<8x1xf32>
      %25 = tpu.reciprocal %24 {approx = true} : vector<8x1xf32> -> vector<8x1xf32>
      %26 = vector.broadcast %25 : vector<8x1xf32> to vector<8x8xf32>
      %27 = arith.mulf %22, %26 : vector<8x8xf32>
      %c0_12 = arith.constant 0 : index
      %c0_13 = arith.constant 0 : index
      %28 = vector.load %arg10[%c0_12, %c0_13] : memref<8x32xf32, #tpu.memory_space<vmem>>, vector<8x8xf32>
      tpu.vector_store %arg10[%c0_12, %c0_13], %27 {strides = array<i32>} : memref<8x32xf32, #tpu.memory_space<vmem>>, vector<8x8xf32>,
      %c0_14 = arith.constant 0 : index
      %c8 = arith.constant 8 : index
      %29 = vector.load %arg10[%c0_14, %c8] : memref<8x32xf32, #tpu.memory_space<vmem>>, vector<8x8xf32>
      %c1 = arith.constant 1 : index
      %c0_15 = arith.constant 0 : index
      %c0_16 = arith.constant 0 : index
      %30 = vector.load %arg9[%c1, %c0_15, %c0_16] : memref<4x8x1xf32, #tpu.memory_space<vmem>>, vector<1x8x1xf32>
      %31 = vector.shape_cast %30 : vector<1x8x1xf32> to vector<8x1xf32>
      %32 = tpu.reciprocal %31 {approx = true} : vector<8x1xf32> -> vector<8x1xf32>
      %33 = vector.broadcast %32 : vector<8x1xf32> to vector<8x8xf32>
      %34 = arith.mulf %29, %33 : vector<8x8xf32>
      %c0_17 = arith.constant 0 : index
      %c8_18 = arith.constant 8 : index
      %35 = vector.load %arg10[%c0_17, %c8_18] : memref<8x32xf32, #tpu.memory_space<vmem>>, vector<8x8xf32>
      tpu.vector_store %arg10[%c0_17, %c8_18], %34 {strides = array<i32>} : memref<8x32xf32, #tpu.memory_space<vmem>>, vector<8x8xf32>,
      %c0_19 = arith.constant 0 : index
      %c16 = arith.constant 16 : index
      %36 = vector.load %arg10[%c0_19, %c16] : memref<8x32xf32, #tpu.memory_space<vmem>>, vector<8x8xf32>
      %c2 = arith.constant 2 : index
      %c0_20 = arith.constant 0 : index
      %c0_21 = arith.constant 0 : index
      %37 = vector.load %arg9[%c2, %c0_20, %c0_21] : memref<4x8x1xf32, #tpu.memory_space<vmem>>, vector<1x8x1xf32>
      %38 = vector.shape_cast %37 : vector<1x8x1xf32> to vector<8x1xf32>
      %39 = tpu.reciprocal %38 {approx = true} : vector<8x1xf32> -> vector<8x1xf32>
      %40 = vector.broadcast %39 : vector<8x1xf32> to vector<8x8xf32>
      %41 = arith.mulf %36, %40 : vector<8x8xf32>
      %c0_22 = arith.constant 0 : index
      %c16_23 = arith.constant 16 : index
      %42 = vector.load %arg10[%c0_22, %c16_23] : memref<8x32xf32, #tpu.memory_space<vmem>>, vector<8x8xf32>
      tpu.vector_store %arg10[%c0_22, %c16_23], %41 {strides = array<i32>} : memref<8x32xf32, #tpu.memory_space<vmem>>, vector<8x8xf32>,
      %c0_24 = arith.constant 0 : index
      %c24 = arith.constant 24 : index
      %43 = vector.load %arg10[%c0_24, %c24] : memref<8x32xf32, #tpu.memory_space<vmem>>, vector<8x8xf32>
      %c3 = arith.constant 3 : index
      %c0_25 = arith.constant 0 : index
      %c0_26 = arith.constant 0 : index
      %44 = vector.load %arg9[%c3, %c0_25, %c0_26] : memref<4x8x1xf32, #tpu.memory_space<vmem>>, vector<1x8x1xf32>
      %45 = vector.shape_cast %44 : vector<1x8x1xf32> to vector<8x1xf32>
      %46 = tpu.reciprocal %45 {approx = true} : vector<8x1xf32> -> vector<8x1xf32>
      %47 = vector.broadcast %46 : vector<8x1xf32> to vector<8x8xf32>
      %48 = arith.mulf %43, %47 : vector<8x8xf32>
      %c0_27 = arith.constant 0 : index
      %c24_28 = arith.constant 24 : index
      %49 = vector.load %arg10[%c0_27, %c24_28] : memref<8x32xf32, #tpu.memory_space<vmem>>, vector<8x8xf32>
      tpu.vector_store %arg10[%c0_27, %c24_28], %48 {strides = array<i32>} : memref<8x32xf32, #tpu.memory_space<vmem>>, vector<8x8xf32>,
      %c0_29 = arith.constant 0 : index
      %c0_30 = arith.constant 0 : index
      %50 = vector.load %arg10[%c0_29, %c0_30] : memref<8x32xf32, #tpu.memory_space<vmem>>, vector<8x32xf32>
      %51 = arith.truncf %50 : vector<8x32xf32> to vector<8x32xbf16>
      %c0_31 = arith.constant 0 : index
      %c0_32 = arith.constant 0 : index
      %c0_33 = arith.constant 0 : index
      %52 = vector.load %arg7[%c0_31, %c0_32, %c0_33] : memref<1x8x32xbf16, #tpu.memory_space<vmem>>, vector<1x8x32xbf16>
      %53 = vector.shape_cast %52 : vector<1x8x32xbf16> to vector<8x32xbf16>
      %54 = vector.shape_cast %51 : vector<8x32xbf16> to vector<1x8x32xbf16>
      tpu.vector_store %arg7[%c0_31, %c0_32, %c0_33], %54 {strides = array<i32>} : memref<1x8x32xbf16, #tpu.memory_space<vmem>>, vector<1x8x32xbf16>,
    } else {
    }
    return
  }
  func.func @transform_0(%arg0: i32, %arg1: i32, %arg2: memref<1xi32, #tpu.memory_space<smem>>, %arg3: memref<1xi32, #tpu.memory_space<smem>>) -> (i32, i32, i32, i32, i32) {
    %0 = arith.index_cast %arg1 : i32 to index
    %1 = memref.load %arg2[%0] : memref<1xi32, #tpu.memory_space<smem>>
    %c0_i32 = arith.constant 0 : i32
    %c0_i32_0 = arith.constant 0 : i32
    %c0_i32_1 = arith.constant 0 : i32
    %c0_i32_2 = arith.constant 0 : i32
    return %arg0, %1, %c0_i32, %c0_i32_0, %c0_i32_1 : i32, i32, i32, i32, i32
  }
  func.func @transform_1(%arg0: i32, %arg1: i32, %arg2: memref<1xi32, #tpu.memory_space<smem>>, %arg3: memref<1xi32, #tpu.memory_space<smem>>) -> (i32, i32, i32, i32, i32) {
    %0 = arith.index_cast %arg1 : i32 to index
    %1 = memref.load %arg3[%0] : memref<1xi32, #tpu.memory_space<smem>>
    %c1_i32 = arith.constant 1 : i32
    %c0_i32 = arith.constant 0 : i32
    %c0_i32_0 = arith.constant 0 : i32
    %c0_i32_1 = arith.constant 0 : i32
    return %arg0, %1, %c1_i32, %c0_i32, %c0_i32_0 : i32, i32, i32, i32, i32
  }
  func.func @transform_2(%arg0: i32, %arg1: i32, %arg2: memref<1xi32, #tpu.memory_space<smem>>, %arg3: memref<1xi32, #tpu.memory_space<smem>>) -> (i32, i32, i32, i32, i32) {
    %0 = arith.index_cast %arg1 : i32 to index
    %1 = memref.load %arg3[%0] : memref<1xi32, #tpu.memory_space<smem>>
    %c2_i32 = arith.constant 2 : i32
    %c0_i32 = arith.constant 0 : i32
    %c0_i32_0 = arith.constant 0 : i32
    %c0_i32_1 = arith.constant 0 : i32
    return %arg0, %1, %c2_i32, %c0_i32, %c0_i32_0 : i32, i32, i32, i32, i32
  }
  func.func @transform_3(%arg0: i32, %arg1: i32, %arg2: memref<1xi32, #tpu.memory_space<smem>>, %arg3: memref<1xi32, #tpu.memory_space<smem>>) -> (i32, i32, i32) {
    %0 = arith.index_cast %arg1 : i32 to index
    %1 = memref.load %arg2[%0] : memref<1xi32, #tpu.memory_space<smem>>
    %c0_i32 = arith.constant 0 : i32
    %c0_i32_0 = arith.constant 0 : i32
    return %arg0, %1, %c0_i32 : i32, i32, i32
  }
}

</mosaic_0001>

<llo_original>
// kernel: causal_self_attention.5
$region0: #{causal_self_attention.5}
  #allocation0 [shape = 'u32[]', space=smem, size = 0x4, offset = 0x4, fixed_abs, tag = 'smem constant byte address 0x4 - core index']
  #allocation1 [shape = 'u32[72,128]{1,0:T(1,128)}', space=vmem, size = 0x9000, scoped, tag = 'internal scratch']
  #allocation2 [shape = 'f32[16,32]{1,0:T(8,128)}', space=vmem, size = 0x2000, scoped, tag = 'scratch operand']
  %s0 = inlined_call_operand.vmem [shape: bf16[16,32], index: 0, kind: input, shape index: {}]
  %s1 = inlined_call_operand.vmem [shape: bf16[32,32], index: 1, kind: input, shape index: {}]
  %s2 = inlined_call_operand.vmem [shape: f32[1,32], index: 2, kind: input, shape index: {}]
  %s3 = inlined_call_operand.hbm [shape: f32[16,32], index: 3, kind: output, shape index: {}]
  %s4 = sld [smem:[#allocation0]]
  $region30: #{causal_self_attention.5} parent=0
    _
  %s6 = ssub.s32 1, %s4
  %s7 = scalar_select 0, %s6, %s4
  $region1: #{causal_self_attention.5} parent=0
    #allocation3 [shape = 'u8[8192]{0}', space=vmem, size = 0x2000, scoped, tag = 'output window, operand 0, single buffered']
    #allocation4 [shape = 's32[1]{0}', space=sflag, size = 0x4, scoped, tag = 'scoped memory for causal_self_attention.5']
    %8 = vsyncpa [#allocation4], 0
    // Predicated region
    $region2: #{causal_self_attention.5} parent=1 // pred_check
      _
    $region3: #{causal_self_attention.5} parent=1 // pred_check_branch
      %10 = sbr.rel (0) target = $region5
    $region4: #{causal_self_attention.5} parent=1 // pred_region
      _
    $region5: #{causal_self_attention.5} parent=1 // pred_fallthru
      _
    // Predicated region
    $region6: #{causal_self_attention.5} parent=1 // pred_check
      _
    $region7: #{causal_self_attention.5} parent=1 // pred_check_branch
      %12 = sbr.rel (0) target = $region9
    $region8: #{causal_self_attention.5} parent=1 // pred_region
      _
    $region9: #{causal_self_attention.5} parent=1 // pred_fallthru
      _
    // Predicated region
    $region10: #{causal_self_attention.5} parent=1 // pred_check
      _
    $region11: #{causal_self_attention.5} parent=1 // pred_check_branch
      %14 = sbr.rel (0) target = $region13
    $region12: #{causal_self_attention.5} parent=1 // pred_region
      _
    $region13: #{causal_self_attention.5} parent=1 // pred_fallthru
      _
    %p16 = scmp.eq.s32.totalorder 0, 0
    // Predicated region
    $region14: #{causal_self_attention.5} parent=1 // pred_check
      %p17 = pneg %p16
    $region15: #{causal_self_attention.5} parent=1 // pred_check_branch
      %19 = sbr.rel (%p17) target = $region17
    $region16: #{causal_self_attention.5} parent=1 // pred_region
      %vm20 = vcmask 261120
      %21 = vst.msk [vmem:[#allocation2] sm:$0xff] %vm20, 0.0
      %22 = vst.msk [vmem:[#allocation2 + $0x8] sm:$0xff] %vm20, 0.0
    $region17: #{causal_self_attention.5} parent=1 // pred_fallthru
      _
    %v23 = vld [vmem:[#allocation2] sm:$0xff]
    %v24 = vld [vmem:[#allocation2 + $0x8] sm:$0xff]
    %v25 = vld [vmem:[%s0] sm:$0xf]
    %v26 = vld [vmem:[%s0 + $0x4] sm:$0xf]
    %v27 = vld [vmem:[%s1] sm:$0xf]
    %v28 = vld [vmem:[%s1 + $0x4] sm:$0xf]
    %v29 = vld [vmem:[%s1 + $0x8] sm:$0xf]
    %v30 = vld [vmem:[%s1 + $0xc] sm:$0xf]
    %v33 = vunpack.c.l.b16 %v25
    %v34 = vunpack.c.l.b16 %v26
    %v35 = vpack.c.b16 %v34, %v33
    %v40 = vunpack.c.l.b16 %v27
    %v41 = vunpack.c.l.b16 %v28
    %v42 = vunpack.c.l.b16 %v29
    %v43 = vunpack.c.l.b16 %v30
    %v44 = vpack.c.b16 %v41, %v40
    %v45 = vpack.c.b16 %v43, %v42
    %vm48 = vcmask 261120
    %v50 = vsel %vm48, %v35, 0
    %52 = vmatpush.bf16.msra.mxu0 0
    %53 = vmatpush.bf16.msra.mxu0 0
    %54 = vmatpush.bf16.msra.mxu0 0
    %55 = vmatpush.bf16.msra.mxu0 0
    %56 = vmatpush.bf16.msra.mxu0 0
    %57 = vmatpush.bf16.msra.mxu0 0
    %58 = vmatpush.bf16.msra.mxu0 %v45
    %59 = vmatpush.bf16.msra.mxu0 %v44
    %60 = vmatmul.bf16.gmra.mxu0 %v50
    %v61 = vpop.f32.mrf.mxu0
    %v62 = vadd.f32 0.0, %v61
    %v63 = vpop.f32.mrf.mxu0
    %v64 = vadd.f32 0.0, %v63
    %65 = vdwg.mxu0
    %v66 = vadd.f32 %v23, %v62
    %v67 = vadd.f32 %v24, %v64
    %68 = vst.msk [vmem:[#allocation2] sm:$0xff] %vm48, %v66
    %69 = vst.msk [vmem:[#allocation2 + $0x8] sm:$0xff] %vm48, %v67
    // Predicated region
    $region18: #{causal_self_attention.5} parent=1 // pred_check
      %p70 = pneg %p16
    $region19: #{causal_self_attention.5} parent=1 // pred_check_branch
      %72 = sbr.rel (%p70) target = $region21
    $region20: #{causal_self_attention.5} parent=1 // pred_region
      %v73 = vld [vmem:[#allocation2] sm:$0xff]
      %v74 = vld [vmem:[#allocation2 + $0x8] sm:$0xff]
      %v75 = vld [vmem:[%s2] sm:$0x1]
      %v77 = vperm.slane %v75, 0
      %v79 = vadd.f32 %v73, %v77
      %v80 = vadd.f32 %v74, %v77
      %81 = vst.msk [vmem:[#allocation3] sm:$0xff] %vm48, %v79
      %82 = vst.msk [vmem:[#allocation3 + $0x8] sm:$0xff] %vm48, %v80
    $region21: #{causal_self_attention.5} parent=1 // pred_fallthru
      _
    // Predicated region
    $region22: #{causal_self_attention.5} parent=1 // pred_check
      _
    $region23: #{causal_self_attention.5} parent=1 // pred_check_branch
      %84 = sbr.rel (0) target = $region25
    $region24: #{causal_self_attention.5} parent=1 // pred_region
      %86 = vsyncadd [#allocation4], 0
      %s87 = sshll.u32 [#allocation3], 4
      %s88 = int_to_ptr.vmem [resolvable:$true] %s87
      %s89 = sshll.u32 %s3, 4
      %s90 = int_to_ptr.hbm [resolvable:$true] %s89
      %95 = dma.vmem_to_hbm [thread:$0]  %s88, 256, %s90, [#allocation4], 128, 128, 8
    $region25: #{causal_self_attention.5} parent=1 // pred_fallthru
      _
    // Predicated region
    $region26: #{causal_self_attention.5} parent=1 // pred_check
      _
    $region27: #{causal_self_attention.5} parent=1 // pred_check_branch
      %97 = sbr.rel (0) target = $region29
    $region28: #{causal_self_attention.5} parent=1 // pred_region
      %99 = dma.done [#allocation4], 256
    $region29: #{causal_self_attention.5} parent=1 // pred_fallthru
      _
    %100 = vsyncpa [#allocation4], 1

// kernel: causal_self_attention.3
$region0: #{causal_self_attention.3}
  #allocation0 [shape = 'u32[]', space=smem, size = 0x4, offset = 0x4, fixed_abs, tag = 'smem constant byte address 0x4 - core index']
  #allocation1 [shape = 'u32[72,128]{1,0:T(1,128)}', space=vmem, size = 0x9000, scoped, tag = 'internal scratch']
  #allocation2 [shape = 'f32[16,96]{1,0:T(8,128)}', space=vmem, size = 0x2000, scoped, tag = 'scratch operand']
  %s0 = inlined_call_operand.hbm [shape: f32[16,32], index: 0, kind: input, shape index: {}]
  %s1 = inlined_call_operand.hbm [shape: bf16[32,96], index: 1, kind: input, shape index: {}]
  %s2 = inlined_call_operand.vmem [shape: f32[1,96], index: 2, kind: input, shape index: {}]
  %s3 = inlined_call_operand.vmem [shape: bf16[16,96], index: 3, kind: output, shape index: {}]
  %s4 = sld [smem:[#allocation0]]
  $region38: #{causal_self_attention.3} parent=0
    _
  %s6 = ssub.s32 1, %s4
  %s7 = scalar_select 0, %s6, %s4
  $region1: #{causal_self_attention.3} parent=0
    #allocation3 [shape = 'u8[8192]{0}', space=vmem, size = 0x2000, scoped, tag = 'input window, operand 0, single buffered']
    #allocation4 [shape = 's32[1]{0}', space=sflag, size = 0x4, scoped, tag = 'scoped memory for causal_self_attention.3']
    #allocation5 [shape = 'u8[8192]{0}', space=vmem, size = 0x2000, scoped, tag = 'input window, operand 1, single buffered']
    #allocation6 [shape = 's32[1]{0}', space=sflag, size = 0x4, scoped, tag = 'scoped memory for causal_self_attention.3']
    %8 = vsyncpa [#allocation4], 0
    %9 = vsyncpa [#allocation6], 0
    // Predicated region
    $region2: #{causal_self_attention.3} parent=1 // pred_check
      _
    $region3: #{causal_self_attention.3} parent=1 // pred_check_branch
      %11 = sbr.rel (0) target = $region5
    $region4: #{causal_self_attention.3} parent=1 // pred_region
      %13 = vsyncadd [#allocation4], 0
      %s14 = sshll.u32 %s0, 4
      %s15 = int_to_ptr.hbm [resolvable:$true] %s14
      %s16 = sshll.u32 [#allocation3], 4
      %s17 = int_to_ptr.vmem [resolvable:$true] %s16
      %22 = dma.hbm_to_vmem [thread:$0]  %s15, 256, %s17, [#allocation4], 128, 128, 8
    $region5: #{causal_self_attention.3} parent=1 // pred_fallthru
      _
    // Predicated region
    $region6: #{causal_self_attention.3} parent=1 // pred_check
      _
    $region7: #{causal_self_attention.3} parent=1 // pred_check_branch
      %24 = sbr.rel (0) target = $region9
    $region8: #{causal_self_attention.3} parent=1 // pred_region
      %26 = vsyncadd [#allocation6], 0
      %s27 = sshll.u32 %s1, 4
      %s28 = int_to_ptr.hbm [resolvable:$true] %s27
      %s29 = sshll.u32 [#allocation5], 4
      %s30 = int_to_ptr.vmem [resolvable:$true] %s29
      %35 = dma.hbm_to_vmem [thread:$0]  %s28, 256, %s30, [#allocation6], 64, 64, 4
    $region9: #{causal_self_attention.3} parent=1 // pred_fallthru
      _
    // Predicated region
    $region10: #{causal_self_attention.3} parent=1 // pred_check
      _
    $region11: #{causal_self_attention.3} parent=1 // pred_check_branch
      %37 = sbr.rel (0) target = $region13
    $region12: #{causal_self_attention.3} parent=1 // pred_region
      _
    $region13: #{causal_self_attention.3} parent=1 // pred_fallthru
      _
    // Predicated region
    $region14: #{causal_self_attention.3} parent=1 // pred_check
      _
    $region15: #{causal_self_attention.3} parent=1 // pred_check_branch
      %39 = sbr.rel (0) target = $region17
    $region16: #{causal_self_attention.3} parent=1 // pred_region
      %41 = dma.done [#allocation4], 256
    $region17: #{causal_self_attention.3} parent=1 // pred_fallthru
      _
    // Predicated region
    $region18: #{causal_self_attention.3} parent=1 // pred_check
      _
    $region19: #{causal_self_attention.3} parent=1 // pred_check_branch
      %43 = sbr.rel (0) target = $region21
    $region20: #{causal_self_attention.3} parent=1 // pred_region
      %45 = dma.done [#allocation6], 256
    $region21: #{causal_self_attention.3} parent=1 // pred_fallthru
      _
    %p47 = scmp.eq.s32.totalorder 0, 0
    // Predicated region
    $region22: #{causal_self_attention.3} parent=1 // pred_check
      %p48 = pneg %p47
    $region23: #{causal_self_attention.3} parent=1 // pred_check_branch
      %50 = sbr.rel (%p48) target = $region25
    $region24: #{causal_self_attention.3} parent=1 // pred_region
      %vm51 = vcmask 785408
      %52 = vst.msk [vmem:[#allocation2] sm:$0xff] %vm51, 0.0
      %53 = vst.msk [vmem:[#allocation2 + $0x8] sm:$0xff] %vm51, 0.0
    $region25: #{causal_self_attention.3} parent=1 // pred_fallthru
      _
    %v54 = vld [vmem:[#allocation2] sm:$0xff]
    %v55 = vld [vmem:[#allocation2 + $0x8] sm:$0xff]
    %v56 = vld [vmem:[#allocation3] sm:$0xff]
    %v57 = vld [vmem:[#allocation3 + $0x8] sm:$0xff]
    %v58 = vpack.c.bf16 %v57, %v56
    %v59 = vld [vmem:[#allocation5] sm:$0xf]
    %v60 = vld [vmem:[#allocation5 + $0x4] sm:$0xf]
    %v61 = vld [vmem:[#allocation5 + $0x8] sm:$0xf]
    %v62 = vld [vmem:[#allocation5 + $0xc] sm:$0xf]
    %v67 = vunpack.c.l.b16 %v59
    %v68 = vunpack.c.l.b16 %v60
    %v69 = vunpack.c.l.b16 %v61
    %v70 = vunpack.c.l.b16 %v62
    %v71 = vpack.c.b16 %v68, %v67
    %v72 = vpack.c.b16 %v70, %v69
    %vm75 = vcmask 261120
    %v77 = vsel %vm75, %v58, 0
    %79 = vmatpush.bf16.msra.mxu0 0
    %80 = vmatpush.bf16.msra.mxu0 0
    %81 = vmatpush.bf16.msra.mxu0 0
    %82 = vmatpush.bf16.msra.mxu0 0
    %83 = vmatpush.bf16.msra.mxu0 0
    %84 = vmatpush.bf16.msra.mxu0 0
    %85 = vmatpush.bf16.msra.mxu0 %v72
    %86 = vmatpush.bf16.msra.mxu0 %v71
    %87 = vmatmul.bf16.gmra.mxu0 %v77
    %v88 = vpop.f32.mrf.mxu0
    %v89 = vadd.f32 0.0, %v88
    %v90 = vpop.f32.mrf.mxu0
    %v91 = vadd.f32 0.0, %v90
    %92 = vdwg.mxu0
    %v93 = vadd.f32 %v54, %v89
    %v94 = vadd.f32 %v55, %v91
    %vm95 = vcmask 785408
    %96 = vst.msk [vmem:[#allocation2] sm:$0xff] %vm95, %v93
    %97 = vst.msk [vmem:[#allocation2 + $0x8] sm:$0xff] %vm95, %v94
    // Predicated region
    $region26: #{causal_self_attention.3} parent=1 // pred_check
      %p98 = pneg %p47
    $region27: #{causal_self_attention.3} parent=1 // pred_check_branch
      %100 = sbr.rel (%p98) target = $region29
    $region28: #{causal_self_attention.3} parent=1 // pred_region
      %v101 = vld [vmem:[#allocation2] sm:$0xff]
      %v102 = vld [vmem:[#allocation2 + $0x8] sm:$0xff]
      %v103 = vld [vmem:[%s2] sm:$0x1]
      %v105 = vperm.slane %v103, 0
      %v107 = vadd.f32 %v101, %v105
      %v108 = vadd.f32 %v102, %v105
      %v109 = vpack.c.bf16 %v107, %v107
      %v110 = vpack.c.bf16 %v108, %v108
      %vm111 = vcmask 781312
      %112 = vst.msk [vmem:[%s3] sm:$0xf] %vm111, %v109
      %113 = vst.msk [vmem:[%s3 + $0x4] sm:$0xf] %vm111, %v110
    $region29: #{causal_self_attention.3} parent=1 // pred_fallthru
      _
    // Predicated region
    $region30: #{causal_self_attention.3} parent=1 // pred_check
      _
    $region31: #{causal_self_attention.3} parent=1 // pred_check_branch
      %115 = sbr.rel (0) target = $region33
    $region32: #{causal_self_attention.3} parent=1 // pred_region
      _
    $region33: #{causal_self_attention.3} parent=1 // pred_fallthru
      _
    // Predicated region
    $region34: #{causal_self_attention.3} parent=1 // pred_check
      _
    $region35: #{causal_self_attention.3} parent=1 // pred_check_branch
      %117 = sbr.rel (0) target = $region37
    $region36: #{causal_self_attention.3} parent=1 // pred_region
      _
    $region37: #{causal_self_attention.3} parent=1 // pred_fallthru
      _
    %118 = vsyncpa [#allocation4], 1
    %119 = vsyncpa [#allocation6], 1

// kernel: causal_self_attention.4
$region0: #{causal_self_attention.4}
  #allocation0 [shape = 'u32[]', space=smem, size = 0x4, offset = 0x4, fixed_abs, tag = 'smem constant byte address 0x4 - core index']
  #allocation1 [shape = 'u32[72,128]{1,0:T(1,128)}', space=vmem, size = 0x9000, scoped, tag = 'internal scratch']
  #allocation2 [shape = 'f32[4,8,1]{2,1,0:T(8,128)}', space=vmem, size = 0x4000, scoped, tag = 'scratch operand']
  #allocation3 [shape = 'f32[4,8,1]{2,1,0:T(8,128)}', space=vmem, size = 0x4000, scoped, tag = 'scratch operand']
  #allocation4 [shape = 'f32[8,32]{1,0:T(8,128)}', space=vmem, size = 0x1000, scoped, tag = 'scratch operand']
  #allocation5 [shape = 's32[1]{0}', space=sflag, size = 0x4, scoped, tag = 'scoped memory for causal_self_attention.4']
  #allocation6 [shape = 's32[1]{0:T(128)S(6)}', space=smem, size = 0x200, scoped, tag = 'prefetched SMEM operand 0']
  #allocation7 [shape = 's32[1]{0:T(128)S(6)}', space=smem, size = 0x200, scoped, tag = 'prefetched SMEM operand 1']
  %s0 = inlined_call_operand.<no memory space> [shape: s32[1], index: 0, kind: input, shape index: {}, may-alias: {0,1}]
  %s1 = inlined_call_operand.<no memory space> [shape: s32[1], index: 1, kind: input, shape index: {}, may-alias: {0,1}]
  %s2 = inlined_call_operand.vmem [shape: bf16[2,8,3,4,8], index: 2, kind: input, shape index: {}, may-alias: {2,3,4}]
  %s3 = inlined_call_operand.vmem [shape: bf16[2,8,3,4,8], index: 3, kind: input, shape index: {}, may-alias: {2,3,4}]
  %s4 = inlined_call_operand.vmem [shape: bf16[2,8,3,4,8], index: 4, kind: input, shape index: {}, may-alias: {2,3,4}]
  %s5 = inlined_call_operand.vmem [shape: bf16[2,8,32], index: 5, kind: output, shape index: {}]
  %s6 = sld [smem:[#allocation0]]
  $region184: #{causal_self_attention.4} parent=0
    _
  %s8 = ssub.s32 1, %s6
  %s9 = scalar_select 0, %s8, %s6
  %10 = sst [smem:[#allocation6]] %s0
  %11 = sst [smem:[#allocation7]] %s1
  $region1: #{causal_self_attention.4} parent=0
    #allocation8 [shape = 'u8[16384]{0}', space=vmem, size = 0x4000, scoped, tag = 'input window, operand 2']
    #allocation9 [shape = 'u8[16384]{0}', space=vmem, size = 0x4000, scoped, tag = 'input window, operand 3']
    #allocation10 [shape = 'u8[16384]{0}', space=vmem, size = 0x4000, scoped, tag = 'input window, operand 4']
    loop: start=0, step=1, limit=4
    $region2: #{causal_self_attention.4} parent=1 // loop_pre_header
      _
    $region3: #{causal_self_attention.4} parent=1 // loop_header
      %s13 = sphi 0, %s17
      %p14 = scmp.ge.s32.totalorder %s13, 4
      %s20 = sphi 0, %s32
      %s21 = sphi 0, %s28
      %s22 = sphi 0, %s20
      %s23 = sphi 0, %s21
      %s24 = sphi 0, %s22
      %s25 = sphi 0, %s23
      %s39 = sphi 0, %s41
      %s42 = sphi 0, %s39
      %s43 = sphi 0, %s42
      %s59 = sphi 0, %s43
      %s69 = sphi 0, %s71
      %s72 = sphi 0, %s69
      %s73 = sphi 0, %s72
      %s89 = sphi 0, %s73
      %s99 = sphi 0, %s101
      %s102 = sphi 0, %s99
      %s103 = sphi 0, %s102
      %s119 = sphi 0, %s103
      %s129 = sphi 0, %s131
      %s132 = sphi 0, %s129
      %s133 = sphi 0, %s132
      %s149 = sphi 0, %s133
    $region4: #{causal_self_attention.4} parent=1 // loop_header_branch
      %16 = sbr.rel (%p14) target = $region8
    $region5: #{causal_self_attention.4} parent=1 // loop_body
      %s18 = ssub.s32 %s13, 1
      %s19 = ssub.s32 %s13, 2
      %s26 = sadd.s32 1, %s21
      %p27 = scmp.ge.s32.totalorder %s26, 1
      %s28 = scalar_select %p27, 0, %s26
      %s29 = sadd.s32 1, %s20
      %s30 = scalar_select %p27, %s29, %s20
      %p31 = scmp.ge.s32.totalorder %s30, 2
      %s32 = scalar_select %p31, 0, %s30
      %s33 = sld [smem:[#allocation6 + %s21]]
      %s34 = sld [smem:[#allocation6 + %s28]]
      %s35 = ssub.s32 %s20, %s32
      %s36 = ssub.s32 %s33, %s34
      %s37 = sor.u32 %s35, %s36
      %p38 = scmp.eq.s32.totalorder %s37, 0
      %s40 = sadd.s32 %s39, 1
      %s41 = scalar_select %p38, %s39, %s40
      %p44 = pneg %p38
      %p45 = scmp.eq.s32.totalorder %s13, 1
      %p46 = por %p44, %p45
      %p47 = scmp.ne.s32.totalorder %s39, %s42
      %p48 = scmp.eq.s32.totalorder %s13, 0
      %p49 = por %p47, %p48
      %p50 = scmp.ne.s32.totalorder %s39, %s42
      %p51 = scmp.eq.s32.totalorder %s18, 1
      %p52 = por %p50, %p51
      %p53 = scmp.ne.s32.totalorder %s42, %s43
      %p54 = scmp.eq.s32.totalorder %s18, 0
      %p55 = por %p53, %p54
      %p56 = scmp.ne.s32.totalorder %s42, %s43
      %p57 = scmp.eq.s32.totalorder %s19, 1
      %p58 = por %p56, %p57
      %p60 = scmp.ne.s32.totalorder %s43, %s59
      %p61 = scmp.eq.s32.totalorder %s19, 0
      %p62 = por %p60, %p61
      %s63 = sld [smem:[#allocation7 + %s21]]
      %s64 = sld [smem:[#allocation7 + %s28]]
      %s65 = ssub.s32 %s20, %s32
      %s66 = ssub.s32 %s63, %s64
      %s67 = sor.u32 %s65, %s66
      %p68 = scmp.eq.s32.totalorder %s67, 0
      %s70 = sadd.s32 %s69, 1
      %s71 = scalar_select %p68, %s69, %s70
      %p74 = pneg %p68
      %p75 = scmp.eq.s32.totalorder %s13, 1
      %p76 = por %p74, %p75
      %p77 = scmp.ne.s32.totalorder %s69, %s72
      %p78 = scmp.eq.s32.totalorder %s13, 0
      %p79 = por %p77, %p78
      %p80 = scmp.ne.s32.totalorder %s69, %s72
      %p81 = scmp.eq.s32.totalorder %s18, 1
      %p82 = por %p80, %p81
      %p83 = scmp.ne.s32.totalorder %s72, %s73
      %p84 = scmp.eq.s32.totalorder %s18, 0
      %p85 = por %p83, %p84
      %p86 = scmp.ne.s32.totalorder %s72, %s73
      %p87 = scmp.eq.s32.totalorder %s19, 1
      %p88 = por %p86, %p87
      %p90 = scmp.ne.s32.totalorder %s73, %s89
      %p91 = scmp.eq.s32.totalorder %s19, 0
      %p92 = por %p90, %p91
      %s93 = sld [smem:[#allocation7 + %s21]]
      %s94 = sld [smem:[#allocation7 + %s28]]
      %s95 = ssub.s32 %s20, %s32
      %s96 = ssub.s32 %s93, %s94
      %s97 = sor.u32 %s95, %s96
      %p98 = scmp.eq.s32.totalorder %s97, 0
      %s100 = sadd.s32 %s99, 1
      %s101 = scalar_select %p98, %s99, %s100
      %p104 = pneg %p98
      %p105 = scmp.eq.s32.totalorder %s13, 1
      %p106 = por %p104, %p105
      %p107 = scmp.ne.s32.totalorder %s99, %s102
      %p108 = scmp.eq.s32.totalorder %s13, 0
      %p109 = por %p107, %p108
      %p110 = scmp.ne.s32.totalorder %s99, %s102
      %p111 = scmp.eq.s32.totalorder %s18, 1
      %p112 = por %p110, %p111
      %p113 = scmp.ne.s32.totalorder %s102, %s103
      %p114 = scmp.eq.s32.totalorder %s18, 0
      %p115 = por %p113, %p114
      %p116 = scmp.ne.s32.totalorder %s102, %s103
      %p117 = scmp.eq.s32.totalorder %s19, 1
      %p118 = por %p116, %p117
      %p120 = scmp.ne.s32.totalorder %s103, %s119
      %p121 = scmp.eq.s32.totalorder %s19, 0
      %p122 = por %p120, %p121
      %s123 = sld [smem:[#allocation6 + %s21]]
      %s124 = sld [smem:[#allocation6 + %s28]]
      %s125 = ssub.s32 %s20, %s32
      %s126 = ssub.s32 %s123, %s124
      %s127 = sor.u32 %s125, %s126
      %p128 = scmp.eq.s32.totalorder %s127, 0
      %s130 = sadd.s32 %s129, 1
      %s131 = scalar_select %p128, %s129, %s130
      %p134 = pneg %p128
      %p135 = scmp.eq.s32.totalorder %s13, 1
      %p136 = por %p134, %p135
      %p137 = scmp.ne.s32.totalorder %s129, %s132
      %p138 = scmp.eq.s32.totalorder %s13, 0
      %p139 = por %p137, %p138
      %p140 = scmp.ne.s32.totalorder %s129, %s132
      %p141 = scmp.eq.s32.totalorder %s18, 1
      %p142 = por %p140, %p141
      %p143 = scmp.ne.s32.totalorder %s132, %s133
      %p144 = scmp.eq.s32.totalorder %s18, 0
      %p145 = por %p143, %p144
      %p146 = scmp.ne.s32.totalorder %s132, %s133
      %p147 = scmp.eq.s32.totalorder %s19, 1
      %p148 = por %p146, %p147
      %p150 = scmp.ne.s32.totalorder %s133, %s149
      %p151 = scmp.eq.s32.totalorder %s19, 0
      %p152 = por %p150, %p151
      %p153 = scmp.le.s32.totalorder 1, %s13
      %p154 = scmp.lt.s32.totalorder %s13, 3
      %p155 = pnand %p153, %p154
      %p156 = pneg %p155
      // Predicated region
      $region9: #{causal_self_attention.4} parent=5 // pred_check
        _
      $region10: #{causal_self_attention.4} parent=5 // pred_check_branch
        %158 = sbr.rel (%p155) target = $region12
      $region11: #{causal_self_attention.4} parent=5 // pred_region
        %s159 = ssub.s32 %s13, 1
      $region12: #{causal_self_attention.4} parent=5 // pred_fallthru
        _
      %p160 = scmp.lt.s32.totalorder %s13, 2
      // Predicated region
      $region13: #{causal_self_attention.4} parent=5 // pred_check
        %p161 = pneg %p160
      $region14: #{causal_self_attention.4} parent=5 // pred_check_branch
        %163 = sbr.rel (%p161) target = $region16
      $region15: #{causal_self_attention.4} parent=5 // pred_region
        // Predicated region
        $region17: #{causal_self_attention.4} parent=15 // pred_check
          %p164 = pneg %p49
        $region18: #{causal_self_attention.4} parent=15 // pred_check_branch
          %166 = sbr.rel (%p164) target = $region20
        $region19: #{causal_self_attention.4} parent=15 // pred_region
          %s167 = sand.u32 %s39, 1
          %s168 = sand.u32 %s39, 1
          %s169 = smul.addr %s168, 16
          %s170 = scalar_lea.vmem [#allocation8], %s169
          %s171 = sld [smem:[#allocation6 + %s21]]
          %s172 = smul.u32 8, %s171
          %s173 = smul.addr %s172, 3
          %s174 = smul.addr %s20, 24
          %s175 = sadd.s32 %s173, %s174
          %s176 = smul.addr %s175, 2
          %s177 = scalar_lea.vmem %s2, %s176
          // Predicated region
          $region21: #{causal_self_attention.4} parent=19 // pred_check
            _
          $region22: #{causal_self_attention.4} parent=19 // pred_check_branch
            %179 = sbr.rel (0) target = $region24
          $region23: #{causal_self_attention.4} parent=19 // pred_region
            // Predicated region
            $region25: #{causal_self_attention.4} parent=23 // pred_check
              _
            $region26: #{causal_self_attention.4} parent=23 // pred_check_branch
              %181 = sbr.rel target = $region28
            $region27: #{causal_self_attention.4} parent=23 // pred_region
              // Predicated region
              $region40: #{causal_self_attention.4} parent=27 // pred_check
                _
              $region41: #{causal_self_attention.4} parent=27 // pred_check_branch
                %211 = sbr.rel (0) target = $region43
              $region42: #{causal_self_attention.4} parent=27 // pred_region
                loop: start=0, step=1, limit=1
                $region44: #{causal_self_attention.4} parent=42 // loop_pre_header
                  _
                $region45: #{causal_self_attention.4} parent=42 // loop_header
                  %s213 = sphi 0, %s217
                  %p214 = scmp.ge.s32.totalorder %s213, 1
                  %s218 = sphi %s177, %s177
                  %s219 = sphi %s170, %s170
                $region46: #{causal_self_attention.4} parent=42 // loop_header_branch
                  %216 = sbr.rel (%p214) target = $region50
                $region47: #{causal_self_attention.4} parent=42 // loop_body
                  _
                $region48: #{causal_self_attention.4} parent=42 // loop_footer
                  %s217 = sadd.s32 1, %s213
                $region49: #{causal_self_attention.4} parent=42 // loop_footer_branch
                  %212 = sbr.rel target = $region45
                $region50: #{causal_self_attention.4} parent=42 // loop_exit
                  _
                %s221 = ssub.s32 4, 1
                loop: start=0, step=1, limit=1
                $region51: #{causal_self_attention.4} parent=42 // loop_pre_header
                  _
                $region52: #{causal_self_attention.4} parent=42 // loop_header
                  %s223 = sphi 0, %s227
                  %p224 = scmp.ge.s32.totalorder %s223, 1
                  %s228 = sphi %s177, %s177
                  %s229 = sphi %s170, %s170
                $region53: #{causal_self_attention.4} parent=42 // loop_header_branch
                  %226 = sbr.rel (%p224) target = $region57
                $region54: #{causal_self_attention.4} parent=42 // loop_body
                  %v230 = vld [vmem:[%s228] sm:%s221]
                  %231 = vst [vmem:[%s229] sm:%s221] %v230
                  %v232 = vld [vmem:[%s228 + $0x6] sm:%s221]
                  %233 = vst [vmem:[%s229 + $0x2] sm:%s221] %v232
                  %v234 = vld [vmem:[%s228 + $0xc] sm:%s221]
                  %235 = vst [vmem:[%s229 + $0x4] sm:%s221] %v234
                  %v236 = vld [vmem:[%s228 + $0x12] sm:%s221]
                  %237 = vst [vmem:[%s229 + $0x6] sm:%s221] %v236
                  %v238 = vld [vmem:[%s228 + $0x18] sm:%s221]
                  %239 = vst [vmem:[%s229 + $0x8] sm:%s221] %v238
                  %v240 = vld [vmem:[%s228 + $0x1e] sm:%s221]
                  %241 = vst [vmem:[%s229 + $0xa] sm:%s221] %v240
                  %v242 = vld [vmem:[%s228 + $0x24] sm:%s221]
                  %243 = vst [vmem:[%s229 + $0xc] sm:%s221] %v242
                  %v244 = vld [vmem:[%s228 + $0x2a] sm:%s221]
                  %245 = vst [vmem:[%s229 + $0xe] sm:%s221] %v244
                $region55: #{causal_self_attention.4} parent=42 // loop_footer
                  %s227 = sadd.s32 1, %s223
                $region56: #{causal_self_attention.4} parent=42 // loop_footer_branch
                  %222 = sbr.rel target = $region52
                $region57: #{causal_self_attention.4} parent=42 // loop_exit
                  _
              $region43: #{causal_self_attention.4} parent=27 // pred_fallthru
                _
            $region28: #{causal_self_attention.4} parent=23 // pred_fallthru
              _
            // Predicated region
            $region29: #{causal_self_attention.4} parent=23 // pred_check
              _
            $region30: #{causal_self_attention.4} parent=23 // pred_check_branch
              %183 = sbr.rel (0) target = $region32
            $region31: #{causal_self_attention.4} parent=23 // pred_region
              %s185 = ssub.s32 4, 1
              loop: start=0, step=1, limit=1
              $region33: #{causal_self_attention.4} parent=31 // loop_pre_header
                _
              $region34: #{causal_self_attention.4} parent=31 // loop_header
                %s187 = sphi 0, %s191
                %p188 = scmp.ge.s32.totalorder %s187, 1
                %s192 = sphi %s177, %s177
                %s193 = sphi %s170, %s170
              $region35: #{causal_self_attention.4} parent=31 // loop_header_branch
                %190 = sbr.rel (%p188) target = $region39
              $region36: #{causal_self_attention.4} parent=31 // loop_body
                %v194 = vld [vmem:[%s192] sm:%s185]
                %195 = vst [vmem:[%s193] sm:%s185] %v194
                %v196 = vld [vmem:[%s192 + $0x6] sm:%s185]
                %197 = vst [vmem:[%s193 + $0x2] sm:%s185] %v196
                %v198 = vld [vmem:[%s192 + $0xc] sm:%s185]
                %199 = vst [vmem:[%s193 + $0x4] sm:%s185] %v198
                %v200 = vld [vmem:[%s192 + $0x12] sm:%s185]
                %201 = vst [vmem:[%s193 + $0x6] sm:%s185] %v200
                %v202 = vld [vmem:[%s192 + $0x18] sm:%s185]
                %203 = vst [vmem:[%s193 + $0x8] sm:%s185] %v202
                %v204 = vld [vmem:[%s192 + $0x1e] sm:%s185]
                %205 = vst [vmem:[%s193 + $0xa] sm:%s185] %v204
                %v206 = vld [vmem:[%s192 + $0x24] sm:%s185]
                %207 = vst [vmem:[%s193 + $0xc] sm:%s185] %v206
                %v208 = vld [vmem:[%s192 + $0x2a] sm:%s185]
                %209 = vst [vmem:[%s193 + $0xe] sm:%s185] %v208
              $region37: #{causal_self_attention.4} parent=31 // loop_footer
                %s191 = sadd.s32 1, %s187
              $region38: #{causal_self_attention.4} parent=31 // loop_footer_branch
                %186 = sbr.rel target = $region34
              $region39: #{causal_self_attention.4} parent=31 // loop_exit
                _
            $region32: #{causal_self_attention.4} parent=23 // pred_fallthru
              _
          $region24: #{causal_self_attention.4} parent=19 // pred_fallthru
            _
          %246 = vnop
        $region20: #{causal_self_attention.4} parent=15 // pred_fallthru
          _
        // Predicated region
        $region58: #{causal_self_attention.4} parent=15 // pred_check
          %p247 = pneg %p79
        $region59: #{causal_self_attention.4} parent=15 // pred_check_branch
          %249 = sbr.rel (%p247) target = $region61
        $region60: #{causal_self_attention.4} parent=15 // pred_region
          %s250 = sand.u32 %s69, 1
          %s251 = sand.u32 %s69, 1
          %s252 = smul.addr %s251, 16
          %s253 = scalar_lea.vmem [#allocation9], %s252
          %s254 = sld [smem:[#allocation7 + %s21]]
          %s255 = smul.u32 8, %s254
          %s256 = smul.addr %s255, 3
          %s257 = sadd.s32 1, %s256
          %s258 = smul.addr %s20, 24
          %s259 = sadd.s32 %s257, %s258
          %s260 = smul.addr %s259, 2
          %s261 = scalar_lea.vmem %s3, %s260
          // Predicated region
          $region62: #{causal_self_attention.4} parent=60 // pred_check
            _
          $region63: #{causal_self_attention.4} parent=60 // pred_check_branch
            %263 = sbr.rel (0) target = $region65
          $region64: #{causal_self_attention.4} parent=60 // pred_region
            // Predicated region
            $region66: #{causal_self_attention.4} parent=64 // pred_check
              _
            $region67: #{causal_self_attention.4} parent=64 // pred_check_branch
              %265 = sbr.rel target = $region69
            $region68: #{causal_self_attention.4} parent=64 // pred_region
              // Predicated region
              $region81: #{causal_self_attention.4} parent=68 // pred_check
                _
              $region82: #{causal_self_attention.4} parent=68 // pred_check_branch
                %295 = sbr.rel (0) target = $region84
              $region83: #{causal_self_attention.4} parent=68 // pred_region
                loop: start=0, step=1, limit=1
                $region85: #{causal_self_attention.4} parent=83 // loop_pre_header
                  _
                $region86: #{causal_self_attention.4} parent=83 // loop_header
                  %s297 = sphi 0, %s301
                  %p298 = scmp.ge.s32.totalorder %s297, 1
                  %s302 = sphi %s261, %s261
                  %s303 = sphi %s253, %s253
                $region87: #{causal_self_attention.4} parent=83 // loop_header_branch
                  %300 = sbr.rel (%p298) target = $region91
                $region88: #{causal_self_attention.4} parent=83 // loop_body
                  _
                $region89: #{causal_self_attention.4} parent=83 // loop_footer
                  %s301 = sadd.s32 1, %s297
                $region90: #{causal_self_attention.4} parent=83 // loop_footer_branch
                  %296 = sbr.rel target = $region86
                $region91: #{causal_self_attention.4} parent=83 // loop_exit
                  _
                %s305 = ssub.s32 4, 1
                loop: start=0, step=1, limit=1
                $region92: #{causal_self_attention.4} parent=83 // loop_pre_header
                  _
                $region93: #{causal_self_attention.4} parent=83 // loop_header
                  %s307 = sphi 0, %s311
                  %p308 = scmp.ge.s32.totalorder %s307, 1
                  %s312 = sphi %s261, %s261
                  %s313 = sphi %s253, %s253
                $region94: #{causal_self_attention.4} parent=83 // loop_header_branch
                  %310 = sbr.rel (%p308) target = $region98
                $region95: #{causal_self_attention.4} parent=83 // loop_body
                  %v314 = vld [vmem:[%s312] sm:%s305]
                  %315 = vst [vmem:[%s313] sm:%s305] %v314
                  %v316 = vld [vmem:[%s312 + $0x6] sm:%s305]
                  %317 = vst [vmem:[%s313 + $0x2] sm:%s305] %v316
                  %v318 = vld [vmem:[%s312 + $0xc] sm:%s305]
                  %319 = vst [vmem:[%s313 + $0x4] sm:%s305] %v318
                  %v320 = vld [vmem:[%s312 + $0x12] sm:%s305]
                  %321 = vst [vmem:[%s313 + $0x6] sm:%s305] %v320
                  %v322 = vld [vmem:[%s312 + $0x18] sm:%s305]
                  %323 = vst [vmem:[%s313 + $0x8] sm:%s305] %v322
                  %v324 = vld [vmem:[%s312 + $0x1e] sm:%s305]
                  %325 = vst [vmem:[%s313 + $0xa] sm:%s305] %v324
                  %v326 = vld [vmem:[%s312 + $0x24] sm:%s305]
                  %327 = vst [vmem:[%s313 + $0xc] sm:%s305] %v326
                  %v328 = vld [vmem:[%s312 + $0x2a] sm:%s305]
                  %329 = vst [vmem:[%s313 + $0xe] sm:%s305] %v328
                $region96: #{causal_self_attention.4} parent=83 // loop_footer
                  %s311 = sadd.s32 1, %s307
                $region97: #{causal_self_attention.4} parent=83 // loop_footer_branch
                  %306 = sbr.rel target = $region93
                $region98: #{causal_self_attention.4} parent=83 // loop_exit
                  _
              $region84: #{causal_self_attention.4} parent=68 // pred_fallthru
                _
            $region69: #{causal_self_attention.4} parent=64 // pred_fallthru
              _
            // Predicated region
            $region70: #{causal_self_attention.4} parent=64 // pred_check
              _
            $region71: #{causal_self_attention.4} parent=64 // pred_check_branch
              %267 = sbr.rel (0) target = $region73
            $region72: #{causal_self_attention.4} parent=64 // pred_region
              %s269 = ssub.s32 4, 1
              loop: start=0, step=1, limit=1
              $region74: #{causal_self_attention.4} parent=72 // loop_pre_header
                _
              $region75: #{causal_self_attention.4} parent=72 // loop_header
                %s271 = sphi 0, %s275
                %p272 = scmp.ge.s32.totalorder %s271, 1
                %s276 = sphi %s261, %s261
                %s277 = sphi %s253, %s253
              $region76: #{causal_self_attention.4} parent=72 // loop_header_branch
                %274 = sbr.rel (%p272) target = $region80
              $region77: #{causal_self_attention.4} parent=72 // loop_body
                %v278 = vld [vmem:[%s276] sm:%s269]
                %279 = vst [vmem:[%s277] sm:%s269] %v278
                %v280 = vld [vmem:[%s276 + $0x6] sm:%s269]
                %281 = vst [vmem:[%s277 + $0x2] sm:%s269] %v280
                %v282 = vld [vmem:[%s276 + $0xc] sm:%s269]
                %283 = vst [vmem:[%s277 + $0x4] sm:%s269] %v282
                %v284 = vld [vmem:[%s276 + $0x12] sm:%s269]
                %285 = vst [vmem:[%s277 + $0x6] sm:%s269] %v284
                %v286 = vld [vmem:[%s276 + $0x18] sm:%s269]
                %287 = vst [vmem:[%s277 + $0x8] sm:%s269] %v286
                %v288 = vld [vmem:[%s276 + $0x1e] sm:%s269]
                %289 = vst [vmem:[%s277 + $0xa] sm:%s269] %v288
                %v290 = vld [vmem:[%s276 + $0x24] sm:%s269]
                %291 = vst [vmem:[%s277 + $0xc] sm:%s269] %v290
                %v292 = vld [vmem:[%s276 + $0x2a] sm:%s269]
                %293 = vst [vmem:[%s277 + $0xe] sm:%s269] %v292
              $region78: #{causal_self_attention.4} parent=72 // loop_footer
                %s275 = sadd.s32 1, %s271
              $region79: #{causal_self_attention.4} parent=72 // loop_footer_branch
                %270 = sbr.rel target = $region75
              $region80: #{causal_self_attention.4} parent=72 // loop_exit
                _
            $region73: #{causal_self_attention.4} parent=64 // pred_fallthru
              _
          $region65: #{causal_self_attention.4} parent=60 // pred_fallthru
            _
          %330 = vnop
        $region61: #{causal_self_attention.4} parent=15 // pred_fallthru
          _
        // Predicated region
        $region99: #{causal_self_attention.4} parent=15 // pred_check
          %p331 = pneg %p109
        $region100: #{causal_self_attention.4} parent=15 // pred_check_branch
          %333 = sbr.rel (%p331) target = $region102
        $region101: #{causal_self_attention.4} parent=15 // pred_region
          %s334 = sand.u32 %s99, 1
          %s335 = sand.u32 %s99, 1
          %s336 = smul.addr %s335, 16
          %s337 = scalar_lea.vmem [#allocation10], %s336
          %s338 = sld [smem:[#allocation7 + %s21]]
          %s339 = smul.u32 8, %s338
          %s340 = smul.addr %s339, 3
          %s341 = sadd.s32 2, %s340
          %s342 = smul.addr %s20, 24
          %s343 = sadd.s32 %s341, %s342
          %s344 = smul.addr %s343, 2
          %s345 = scalar_lea.vmem %s4, %s344
          // Predicated region
          $region103: #{causal_self_attention.4} parent=101 // pred_check
            _
          $region104: #{causal_self_attention.4} parent=101 // pred_check_branch
            %347 = sbr.rel (0) target = $region106
          $region105: #{causal_self_attention.4} parent=101 // pred_region
            // Predicated region
            $region107: #{causal_self_attention.4} parent=105 // pred_check
              _
            $region108: #{causal_self_attention.4} parent=105 // pred_check_branch
              %349 = sbr.rel target = $region110
            $region109: #{causal_self_attention.4} parent=105 // pred_region
              // Predicated region
              $region122: #{causal_self_attention.4} parent=109 // pred_check
                _
              $region123: #{causal_self_attention.4} parent=109 // pred_check_branch
                %379 = sbr.rel (0) target = $region125
              $region124: #{causal_self_attention.4} parent=109 // pred_region
                loop: start=0, step=1, limit=1
                $region126: #{causal_self_attention.4} parent=124 // loop_pre_header
                  _
                $region127: #{causal_self_attention.4} parent=124 // loop_header
                  %s381 = sphi 0, %s385
                  %p382 = scmp.ge.s32.totalorder %s381, 1
                  %s386 = sphi %s345, %s345
                  %s387 = sphi %s337, %s337
                $region128: #{causal_self_attention.4} parent=124 // loop_header_branch
                  %384 = sbr.rel (%p382) target = $region132
                $region129: #{causal_self_attention.4} parent=124 // loop_body
                  _
                $region130: #{causal_self_attention.4} parent=124 // loop_footer
                  %s385 = sadd.s32 1, %s381
                $region131: #{causal_self_attention.4} parent=124 // loop_footer_branch
                  %380 = sbr.rel target = $region127
                $region132: #{causal_self_attention.4} parent=124 // loop_exit
                  _
                %s389 = ssub.s32 4, 1
                loop: start=0, step=1, limit=1
                $region133: #{causal_self_attention.4} parent=124 // loop_pre_header
                  _
                $region134: #{causal_self_attention.4} parent=124 // loop_header
                  %s391 = sphi 0, %s395
                  %p392 = scmp.ge.s32.totalorder %s391, 1
                  %s396 = sphi %s345, %s345
                  %s397 = sphi %s337, %s337
                $region135: #{causal_self_attention.4} parent=124 // loop_header_branch
                  %394 = sbr.rel (%p392) target = $region139
                $region136: #{causal_self_attention.4} parent=124 // loop_body
                  %v398 = vld [vmem:[%s396] sm:%s389]
                  %399 = vst [vmem:[%s397] sm:%s389] %v398
                  %v400 = vld [vmem:[%s396 + $0x6] sm:%s389]
                  %401 = vst [vmem:[%s397 + $0x2] sm:%s389] %v400
                  %v402 = vld [vmem:[%s396 + $0xc] sm:%s389]
                  %403 = vst [vmem:[%s397 + $0x4] sm:%s389] %v402
                  %v404 = vld [vmem:[%s396 + $0x12] sm:%s389]
                  %405 = vst [vmem:[%s397 + $0x6] sm:%s389] %v404
                  %v406 = vld [vmem:[%s396 + $0x18] sm:%s389]
                  %407 = vst [vmem:[%s397 + $0x8] sm:%s389] %v406
                  %v408 = vld [vmem:[%s396 + $0x1e] sm:%s389]
                  %409 = vst [vmem:[%s397 + $0xa] sm:%s389] %v408
                  %v410 = vld [vmem:[%s396 + $0x24] sm:%s389]
                  %411 = vst [vmem:[%s397 + $0xc] sm:%s389] %v410
                  %v412 = vld [vmem:[%s396 + $0x2a] sm:%s389]
                  %413 = vst [vmem:[%s397 + $0xe] sm:%s389] %v412
                $region137: #{causal_self_attention.4} parent=124 // loop_footer
                  %s395 = sadd.s32 1, %s391
                $region138: #{causal_self_attention.4} parent=124 // loop_footer_branch
                  %390 = sbr.rel target = $region134
                $region139: #{causal_self_attention.4} parent=124 // loop_exit
                  _
              $region125: #{causal_self_attention.4} parent=109 // pred_fallthru
                _
            $region110: #{causal_self_attention.4} parent=105 // pred_fallthru
              _
            // Predicated region
            $region111: #{causal_self_attention.4} parent=105 // pred_check
              _
            $region112: #{causal_self_attention.4} parent=105 // pred_check_branch
              %351 = sbr.rel (0) target = $region114
            $region113: #{causal_self_attention.4} parent=105 // pred_region
              %s353 = ssub.s32 4, 1
              loop: start=0, step=1, limit=1
              $region115: #{causal_self_attention.4} parent=113 // loop_pre_header
                _
              $region116: #{causal_self_attention.4} parent=113 // loop_header
                %s355 = sphi 0, %s359
                %p356 = scmp.ge.s32.totalorder %s355, 1
                %s360 = sphi %s345, %s345
                %s361 = sphi %s337, %s337
              $region117: #{causal_self_attention.4} parent=113 // loop_header_branch
                %358 = sbr.rel (%p356) target = $region121
              $region118: #{causal_self_attention.4} parent=113 // loop_body
                %v362 = vld [vmem:[%s360] sm:%s353]
                %363 = vst [vmem:[%s361] sm:%s353] %v362
                %v364 = vld [vmem:[%s360 + $0x6] sm:%s353]
                %365 = vst [vmem:[%s361 + $0x2] sm:%s353] %v364
                %v366 = vld [vmem:[%s360 + $0xc] sm:%s353]
                %367 = vst [vmem:[%s361 + $0x4] sm:%s353] %v366
                %v368 = vld [vmem:[%s360 + $0x12] sm:%s353]
                %369 = vst [vmem:[%s361 + $0x6] sm:%s353] %v368
                %v370 = vld [vmem:[%s360 + $0x18] sm:%s353]
                %371 = vst [vmem:[%s361 + $0x8] sm:%s353] %v370
                %v372 = vld [vmem:[%s360 + $0x1e] sm:%s353]
                %373 = vst [vmem:[%s361 + $0xa] sm:%s353] %v372
                %v374 = vld [vmem:[%s360 + $0x24] sm:%s353]
                %375 = vst [vmem:[%s361 + $0xc] sm:%s353] %v374
                %v376 = vld [vmem:[%s360 + $0x2a] sm:%s353]
                %377 = vst [vmem:[%s361 + $0xe] sm:%s353] %v376
              $region119: #{causal_self_attention.4} parent=113 // loop_footer
                %s359 = sadd.s32 1, %s355
              $region120: #{causal_self_attention.4} parent=113 // loop_footer_branch
                %354 = sbr.rel target = $region116
              $region121: #{causal_self_attention.4} parent=113 // loop_exit
                _
            $region114: #{causal_self_attention.4} parent=105 // pred_fallthru
              _
          $region106: #{causal_self_attention.4} parent=101 // pred_fallthru
            _
          %414 = vnop
        $region102: #{causal_self_attention.4} parent=15 // pred_fallthru
          _
      $region16: #{causal_self_attention.4} parent=5 // pred_fallthru
        _
      %p415 = scmp.le.s32.totalorder 1, %s13
      %p416 = scmp.lt.s32.totalorder %s13, 3
      %p417 = pnand %p415, %p416
      %p418 = pneg %p417
      // Predicated region
      $region140: #{causal_self_attention.4} parent=5 // pred_check
        _
      $region141: #{causal_self_attention.4} parent=5 // pred_check_branch
        %420 = sbr.rel (%p417) target = $region143
      $region142: #{causal_self_attention.4} parent=5 // pred_region
        %s421 = ssub.s32 %s13, 1
        %s422 = sand.u32 %s42, 1
        %s423 = sand.u32 %s42, 1
        %s424 = smul.addr %s423, 16
        %s425 = scalar_lea.vmem [#allocation8], %s424
        // Predicated region
        $region144: #{causal_self_attention.4} parent=142 // pred_check
          %p426 = pneg %p55
        $region145: #{causal_self_attention.4} parent=142 // pred_check_branch
          %428 = sbr.rel (%p426) target = $region147
        $region146: #{causal_self_attention.4} parent=142 // pred_region
          _
        $region147: #{causal_self_attention.4} parent=142 // pred_fallthru
          _
        %s429 = sand.u32 %s72, 1
        %s430 = sand.u32 %s72, 1
        %s431 = smul.addr %s430, 16
        %s432 = scalar_lea.vmem [#allocation9], %s431
        // Predicated region
        $region148: #{causal_self_attention.4} parent=142 // pred_check
          %p433 = pneg %p85
        $region149: #{causal_self_attention.4} parent=142 // pred_check_branch
          %435 = sbr.rel (%p433) target = $region151
        $region150: #{causal_self_attention.4} parent=142 // pred_region
          _
        $region151: #{causal_self_attention.4} parent=142 // pred_fallthru
          _
        %s436 = sand.u32 %s102, 1
        %s437 = sand.u32 %s102, 1
        %s438 = smul.addr %s437, 16
        %s439 = scalar_lea.vmem [#allocation10], %s438
        // Predicated region
        $region152: #{causal_self_attention.4} parent=142 // pred_check
          %p440 = pneg %p115
        $region153: #{causal_self_attention.4} parent=142 // pred_check_branch
          %442 = sbr.rel (%p440) target = $region155
        $region154: #{causal_self_attention.4} parent=142 // pred_region
          _
        $region155: #{causal_self_attention.4} parent=142 // pred_fallthru
          _
        %s443 = sand.u32 %s42, 1
        %s444 = sand.u32 %s42, 1
        %s445 = smul.addr %s444, 16
        %s446 = scalar_lea.vmem [#allocation8], %s445
        %p447 = pneg %p55
        %p448 = pneg %p52
        %s449 = sand.u32 %s72, 1
        %s450 = sand.u32 %s72, 1
        %s451 = smul.addr %s450, 16
        %s452 = scalar_lea.vmem [#allocation9], %s451
        %p453 = pneg %p85
        %p454 = pneg %p82
        %s455 = sand.u32 %s102, 1
        %s456 = sand.u32 %s102, 1
        %s457 = smul.addr %s456, 16
        %s458 = scalar_lea.vmem [#allocation10], %s457
        %p459 = pneg %p115
        %p460 = pneg %p112
        %p461 = pneg %p145
        %p462 = pneg %p142
        %s463 = sld [smem:[#allocation6 + %s23]]
        %p464 = scmp.lt.s32.totalorder %s22, 1
        %s465 = scalar_select %p464, %s22, 1
        %p466 = scmp.lt.s32.totalorder %s463, 0
        %s467 = scalar_select %p466, %s463, 0
        %s468 = sadd.s32 %s467, %s465
        %s469 = smul.addr %s468, 4
        %s470 = scalar_lea.vmem %s5, %s469
        %s471 = sld [smem:[#allocation6 + %s23]]
        %s472 = smul.u32 8, %s471
        %s473 = sld [smem:[#allocation7 + %s23]]
        %s474 = smul.u32 8, %s473
        %s475 = sld [smem:[#allocation7 + %s23]]
        %s476 = smul.u32 8, %s475
        %s477 = sld [smem:[#allocation6 + %s23]]
        %p478 = scmp.lt.s32.totalorder %s22, 1
        %s479 = scalar_select %p478, %s22, 1
        %p480 = scmp.lt.s32.totalorder %s477, 0
        %s481 = scalar_select %p480, %s477, 0
        %s482 = sadd.s32 %s481, %s479
        %s483 = smul.addr %s482, 4
        %s484 = scalar_lea.vmem %s5, %s483
        %s485 = sld [smem:[#allocation6 + %s23]]
        %s487 = sld [smem:[#allocation6 + %s23]]
        %s488 = sld [smem:[#allocation7 + %s23]]
        %s489 = smul.u32 %s487, 8
        %s490 = smul.u32 %s488, 8
        %p491 = scmp.eq.s32.totalorder %s488, 0
        // Predicated region
        $region156: #{causal_self_attention.4} parent=142 // pred_check
          %p492 = pneg %p491
        $region157: #{causal_self_attention.4} parent=142 // pred_check_branch
          %494 = sbr.rel (%p492) target = $region159
        $region158: #{causal_self_attention.4} parent=142 // pred_region
          %vm495 = vcmask 7168
          %496 = vst.msk [vmem:[#allocation2] sm:$0xff] %vm495, -2.3819763e+38
          %497 = vst.msk [vmem:[#allocation2 + $0x8] sm:$0xff] %vm495, -2.3819763e+38
          %498 = vst.msk [vmem:[#allocation2 + $0x10] sm:$0xff] %vm495, -2.3819763e+38
          %499 = vst.msk [vmem:[#allocation2 + $0x18] sm:$0xff] %vm495, -2.3819763e+38
          %500 = vst.msk [vmem:[#allocation3] sm:$0xff] %vm495, 0.0
          %501 = vst.msk [vmem:[#allocation3 + $0x8] sm:$0xff] %vm495, 0.0
          %502 = vst.msk [vmem:[#allocation3 + $0x10] sm:$0xff] %vm495, 0.0
          %503 = vst.msk [vmem:[#allocation3 + $0x18] sm:$0xff] %vm495, 0.0
          %vm504 = vcmask 261120
          %505 = vst.msk [vmem:[#allocation4] sm:$0xff] %vm504, 0.0
        $region159: #{causal_self_attention.4} parent=142 // pred_fallthru
          _
        %s506 = sadd.s32 %s490, 7
        %p507 = scmp.gt.s32.totalorder %s506, %s489
        // Predicated region
        $region160: #{causal_self_attention.4} parent=142 // pred_check
          %p508 = pneg %p507
        $region161: #{causal_self_attention.4} parent=142 // pred_check_branch
          %510 = sbr.rel (%p508) target = $region163
        $region162: #{causal_self_attention.4} parent=142 // pred_region
          %v511 = vlaneseq
          %v512 = vshrl.u32 %v511, 7
          %v513 = vstv %s489
          %v514 = vadd.s32 %v513, %v512
          %v515 = vlaneseq
          %v516 = vand.u32 %v515, 127
          %v517 = vstv %s490
          %v518 = vadd.s32 %v517, %v516
          %vm519 = vcmp.le.s32.totalorder %v518, %v514
          %v520 = vld [vmem:[%s425] sm:$0x1]
          %v521 = vld [vmem:[%s425 + $0x2] sm:$0x1]
          %v522 = vld [vmem:[%s425 + $0x4] sm:$0x1]
          %v523 = vld [vmem:[%s425 + $0x6] sm:$0x1]
          %v524 = vld [vmem:[%s425 + $0x8] sm:$0x1]
          %v525 = vld [vmem:[%s425 + $0xa] sm:$0x1]
          %v526 = vld [vmem:[%s425 + $0xc] sm:$0x1]
          %v527 = vld [vmem:[%s425 + $0xe] sm:$0x1]
          %v528 = vld [vmem:[%s432] sm:$0x1]
          %v529 = vld [vmem:[%s432 + $0x2] sm:$0x1]
          %v530 = vld [vmem:[%s432 + $0x4] sm:$0x1]
          %v531 = vld [vmem:[%s432 + $0x6] sm:$0x1]
          %v532 = vld [vmem:[%s432 + $0x8] sm:$0x1]
          %v533 = vld [vmem:[%s432 + $0xa] sm:$0x1]
          %v534 = vld [vmem:[%s432 + $0xc] sm:$0x1]
          %v535 = vld [vmem:[%s432 + $0xe] sm:$0x1]
          %v536 = vld [vmem:[%s439] sm:$0x1]
          %v537 = vld [vmem:[%s439 + $0x2] sm:$0x1]
          %v538 = vld [vmem:[%s439 + $0x4] sm:$0x1]
          %v539 = vld [vmem:[%s439 + $0x6] sm:$0x1]
          %v540 = vld [vmem:[%s439 + $0x8] sm:$0x1]
          %v541 = vld [vmem:[%s439 + $0xa] sm:$0x1]
          %v542 = vld [vmem:[%s439 + $0xc] sm:$0x1]
          %v543 = vld [vmem:[%s439 + $0xe] sm:$0x1]
          %545 = vst [vmem:[#allocation1] ss:$4 sm:$0xff] %v520
          %v546 = vld.sshfl [vmem:[#allocation1] sm:$0xff pattern:$0x73625140]
          %s549 = scalar_lea.vmem [#allocation1], 32
          %550 = vst [vmem:[%s549] ss:$4 sm:$0xff] %v521
          %v551 = vld.sshfl [vmem:[#allocation1 + $0x20] sm:$0xff pattern:$0x73625140]
          %554 = vst [vmem:[#allocation1] ss:$4 sm:$0xff] %v522
          %v555 = vld.sshfl [vmem:[#allocation1] sm:$0xff pattern:$0x73625140]
          %558 = vst [vmem:[%s549] ss:$4 sm:$0xff] %v523
          %v559 = vld.sshfl [vmem:[#allocation1 + $0x20] sm:$0xff pattern:$0x73625140]
          %562 = vst [vmem:[#allocation1] ss:$4 sm:$0xff] %v524
          %v563 = vld.sshfl [vmem:[#allocation1] sm:$0xff pattern:$0x73625140]
          %566 = vst [vmem:[%s549] ss:$4 sm:$0xff] %v525
          %v567 = vld.sshfl [vmem:[#allocation1 + $0x20] sm:$0xff pattern:$0x73625140]
          %570 = vst [vmem:[#allocation1] ss:$4 sm:$0xff] %v526
          %v571 = vld.sshfl [vmem:[#allocation1] sm:$0xff pattern:$0x73625140]
          %574 = vst [vmem:[%s549] ss:$4 sm:$0xff] %v527
          %v575 = vld.sshfl [vmem:[#allocation1 + $0x20] sm:$0xff pattern:$0x73625140]
          %v577 = vunpack.c.l.b16 %v546
          %v578 = vunpack.c.l.b16 %v551
          %v579 = vunpack.c.l.b16 %v555
          %v580 = vunpack.c.l.b16 %v559
          %v581 = vunpack.c.l.b16 %v563
          %v582 = vunpack.c.l.b16 %v567
          %v583 = vunpack.c.l.b16 %v571
          %v584 = vunpack.c.l.b16 %v575
          %v585 = vrot.slane %v578, 7
          %vm586 = vcmask 1041409
          %v587 = vsel %vm586, %v585, %v577
          %v588 = vrot.slane %v579, 6
          %vm589 = vcmask 1042434
          %v590 = vsel %vm589, %v588, %v587
          %v591 = vrot.slane %v580, 5
          %vm592 = vcmask 1043459
          %v593 = vsel %vm592, %v591, %v590
          %v594 = vrot.slane %v581, 4
          %vm595 = vcmask 1044484
          %v596 = vsel %vm595, %v594, %v593
          %v597 = vrot.slane %v582, 3
          %vm598 = vcmask 1045509
          %v599 = vsel %vm598, %v597, %v596
          %v600 = vrot.slane %v583, 2
          %vm601 = vcmask 1046534
          %v602 = vsel %vm601, %v600, %v599
          %v603 = vrot.slane %v584, 1
          %vm604 = vcmask 1047559
          %v605 = vsel %vm604, %v603, %v602
          %v606 = vpack.c.b16 %v605, %v605
          %608 = vst [vmem:[#allocation1] ss:$4 sm:$0xff] %v528
          %v609 = vld.sshfl [vmem:[#allocation1] sm:$0xff pattern:$0x73625140]
          %s612 = scalar_lea.vmem [#allocation1], 32
          %613 = vst [vmem:[%s612] ss:$4 sm:$0xff] %v529
          %v614 = vld.sshfl [vmem:[#allocation1 + $0x20] sm:$0xff pattern:$0x73625140]
          %617 = vst [vmem:[#allocation1] ss:$4 sm:$0xff] %v530
          %v618 = vld.sshfl [vmem:[#allocation1] sm:$0xff pattern:$0x73625140]
          %621 = vst [vmem:[%s612] ss:$4 sm:$0xff] %v531
          %v622 = vld.sshfl [vmem:[#allocation1 + $0x20] sm:$0xff pattern:$0x73625140]
          %625 = vst [vmem:[#allocation1] ss:$4 sm:$0xff] %v532
          %v626 = vld.sshfl [vmem:[#allocation1] sm:$0xff pattern:$0x73625140]
          %629 = vst [vmem:[%s612] ss:$4 sm:$0xff] %v533
          %v630 = vld.sshfl [vmem:[#allocation1 + $0x20] sm:$0xff pattern:$0x73625140]
          %633 = vst [vmem:[#allocation1] ss:$4 sm:$0xff] %v534
          %v634 = vld.sshfl [vmem:[#allocation1] sm:$0xff pattern:$0x73625140]
          %637 = vst [vmem:[%s612] ss:$4 sm:$0xff] %v535
          %v638 = vld.sshfl [vmem:[#allocation1 + $0x20] sm:$0xff pattern:$0x73625140]
          %v640 = vunpack.c.l.b16 %v609
          %v641 = vunpack.c.l.b16 %v614
          %v642 = vunpack.c.l.b16 %v618
          %v643 = vunpack.c.l.b16 %v622
          %v644 = vunpack.c.l.b16 %v626
          %v645 = vunpack.c.l.b16 %v630
          %v646 = vunpack.c.l.b16 %v634
          %v647 = vunpack.c.l.b16 %v638
          %v648 = vrot.slane %v641, 7
          %v649 = vsel %vm586, %v648, %v640
          %v650 = vrot.slane %v642, 6
          %v651 = vsel %vm589, %v650, %v649
          %v652 = vrot.slane %v643, 5
          %v653 = vsel %vm592, %v652, %v651
          %v654 = vrot.slane %v644, 4
          %v655 = vsel %vm595, %v654, %v653
          %v656 = vrot.slane %v645, 3
          %v657 = vsel %vm598, %v656, %v655
          %v658 = vrot.slane %v646, 2
          %v659 = vsel %vm601, %v658, %v657
          %v660 = vrot.slane %v647, 1
          %v661 = vsel %vm604, %v660, %v659
          %v662 = vpack.c.b16 %v661, %v661
          %vm663 = vcmask 64512
          %v665 = vsel %vm663, %v606, 0
          %v668 = vsel %vm663, %v662, 0
          %670 = vmatpush.bf16.xpose.msra.mxu0 0
          %671 = vmatpush.bf16.xpose.msra.mxu0 0
          %672 = vmatpush.bf16.xpose.msra.mxu0 0
          %673 = vmatpush.bf16.xpose.msra.mxu0 0
          %674 = vmatpush.bf16.xpose.msra.mxu0 0
          %675 = vmatpush.bf16.xpose.msra.mxu0 0
          %676 = vmatpush.bf16.xpose.msra.mxu0 0
          %677 = vmatpush.bf16.xpose.msra.mxu0 %v668
          %678 = vmatmul.bf16.gmra.mxu0 %v665
          %v679 = vpop.f32.mrf.mxu0
          %v680 = vadd.f32 0.0, %v679
          %v681 = vpop.f32.mrf.mxu0
          %682 = vdwg.mxu0
          %v683 = vsel %vm519, %v680, -2.3819763e+38
          %v684 = vld [vmem:[#allocation2] sm:$0xff]
          %v685 = vsel %vm663, %v683, -inf
          %686 = vmax.xlane.f32.xlu0 %v685
          %v687 = vpop.xlane.xlu0 %686
          %v688 = vmax.f32 %v684, %v687
          %v689 = vsub.f32 %v684, %v688
          %v690 = vmul.f32 %v689, 1.442695
          %v691 = vpow.pop %v690
          %693 = vset.pattern.permute.xlu0 0
          %694 = vperm.xlu0 %693, %v688
          %v695 = vpop.permute.xlu0 %694
          %v697 = vsub.f32 %v683, %v695
          %v698 = vmul.f32 %v697, 1.442695
          %v699 = vpow.pop %v698
          %v700 = vld [vmem:[#allocation3] sm:$0xff]
          %v701 = vmul.f32 %v691, %v700
          %v702 = vsel %vm663, %v699, 0.0
          %703 = vadd.xlane.f32.xlu0 %v702
          %v704 = vpop.xlane.xlu0 %703
          %v705 = vadd.f32 %v701, %v704
          %vm706 = vcmask 7168
          %707 = vst.msk [vmem:[#allocation3] sm:$0xff] %vm706, %v705
          %v708 = vld [vmem:[#allocation4] sm:$0xff]
          %710 = vset.pattern.permute.xlu0 0
          %711 = vperm.xlu0 %710, %v691
          %v712 = vpop.permute.xlu0 %711
          %v714 = vmul.f32 %v712, %v708
          %v715 = vpack.c.bf16 %v699, %v699
          %717 = vst [vmem:[#allocation1] ss:$4 sm:$0xff] %v536
          %v718 = vld.sshfl [vmem:[#allocation1] sm:$0xff pattern:$0x73625140]
          %s721 = scalar_lea.vmem [#allocation1], 32
          %722 = vst [vmem:[%s721] ss:$4 sm:$0xff] %v537
          %v723 = vld.sshfl [vmem:[#allocation1 + $0x20] sm:$0xff pattern:$0x73625140]
          %726 = vst [vmem:[#allocation1] ss:$4 sm:$0xff] %v538
          %v727 = vld.sshfl [vmem:[#allocation1] sm:$0xff pattern:$0x73625140]
          %730 = vst [vmem:[%s721] ss:$4 sm:$0xff] %v539
          %v731 = vld.sshfl [vmem:[#allocation1 + $0x20] sm:$0xff pattern:$0x73625140]
          %734 = vst [vmem:[#allocation1] ss:$4 sm:$0xff] %v540
          %v735 = vld.sshfl [vmem:[#allocation1] sm:$0xff pattern:$0x73625140]
          %738 = vst [vmem:[%s721] ss:$4 sm:$0xff] %v541
          %v739 = vld.sshfl [vmem:[#allocation1 + $0x20] sm:$0xff pattern:$0x73625140]
          %742 = vst [vmem:[#allocation1] ss:$4 sm:$0xff] %v542
          %v743 = vld.sshfl [vmem:[#allocation1] sm:$0xff pattern:$0x73625140]
          %746 = vst [vmem:[%s721] ss:$4 sm:$0xff] %v543
          %v747 = vld.sshfl [vmem:[#allocation1 + $0x20] sm:$0xff pattern:$0x73625140]
          %v749 = vunpack.c.l.b16 %v718
          %v750 = vunpack.c.l.b16 %v723
          %v751 = vunpack.c.l.b16 %v727
          %v752 = vunpack.c.l.b16 %v731
          %v753 = vunpack.c.l.b16 %v735
          %v754 = vunpack.c.l.b16 %v739
          %v755 = vunpack.c.l.b16 %v743
          %v756 = vunpack.c.l.b16 %v747
          %v757 = vrot.slane %v750, 7
          %v758 = vsel %vm586, %v757, %v749
          %v759 = vrot.slane %v751, 6
          %v760 = vsel %vm589, %v759, %v758
          %v761 = vrot.slane %v752, 5
          %v762 = vsel %vm592, %v761, %v760
          %v763 = vrot.slane %v753, 4
          %v764 = vsel %vm595, %v763, %v762
          %v765 = vrot.slane %v754, 3
          %v766 = vsel %vm598, %v765, %v764
          %v767 = vrot.slane %v755, 2
          %v768 = vsel %vm601, %v767, %v766
          %v769 = vrot.slane %v756, 1
          %v770 = vsel %vm604, %v769, %v768
          %v771 = vpack.c.b16 %v770, %v770
          %v773 = vsel %vm663, %v715, 0
          %vm775 = vcmask 1043456
          %v777 = vsel %vm775, %v771, 0
          %779 = vmatpush.bf16.msra.mxu0 0
          %780 = vmatpush.bf16.msra.mxu0 0
          %781 = vmatpush.bf16.msra.mxu0 0
          %782 = vmatpush.bf16.msra.mxu0 0
          %783 = vmatpush.bf16.msra.mxu0 0
          %784 = vmatpush.bf16.msra.mxu0 0
          %785 = vmatpush.bf16.msra.mxu0 0
          %786 = vmatpush.bf16.msra.mxu0 %v777
          %787 = vmatmul.bf16.gmra.mxu0 %v773
          %v788 = vpop.f32.mrf.mxu0
          %v789 = vadd.f32 0.0, %v788
          %v790 = vpop.f32.mrf.mxu0
          %791 = vdwg.mxu0
          %v792 = vadd.f32 %v714, %v789
          %793 = vst.msk [vmem:[#allocation4] sm:$0xff] %vm663, %v792
          %794 = vst.msk [vmem:[#allocation2] sm:$0xff] %vm706, %v688
          %v795 = vld [vmem:[%s425] sm:$0x1]
          %v796 = vld [vmem:[%s425 + $0x2] sm:$0x1]
          %v797 = vld [vmem:[%s425 + $0x4] sm:$0x1]
          %v798 = vld [vmem:[%s425 + $0x6] sm:$0x1]
          %v799 = vld [vmem:[%s425 + $0x8] sm:$0x1]
          %v800 = vld [vmem:[%s425 + $0xa] sm:$0x1]
          %v801 = vld [vmem:[%s425 + $0xc] sm:$0x1]
          %v802 = vld [vmem:[%s425 + $0xe] sm:$0x1]
          %v803 = vld [vmem:[%s432] sm:$0x1]
          %v804 = vld [vmem:[%s432 + $0x2] sm:$0x1]
          %v805 = vld [vmem:[%s432 + $0x4] sm:$0x1]
          %v806 = vld [vmem:[%s432 + $0x6] sm:$0x1]
          %v807 = vld [vmem:[%s432 + $0x8] sm:$0x1]
          %v808 = vld [vmem:[%s432 + $0xa] sm:$0x1]
          %v809 = vld [vmem:[%s432 + $0xc] sm:$0x1]
          %v810 = vld [vmem:[%s432 + $0xe] sm:$0x1]
          %v811 = vld [vmem:[%s439] sm:$0x1]
          %v812 = vld [vmem:[%s439 + $0x2] sm:$0x1]
          %v813 = vld [vmem:[%s439 + $0x4] sm:$0x1]
          %v814 = vld [vmem:[%s439 + $0x6] sm:$0x1]
          %v815 = vld [vmem:[%s439 + $0x8] sm:$0x1]
          %v816 = vld [vmem:[%s439 + $0xa] sm:$0x1]
          %v817 = vld [vmem:[%s439 + $0xc] sm:$0x1]
          %v818 = vld [vmem:[%s439 + $0xe] sm:$0x1]
          %820 = vst [vmem:[#allocation1] ss:$4 sm:$0xff] %v795
          %v821 = vld.sshfl [vmem:[#allocation1] sm:$0xff pattern:$0x73625140]
          %s824 = scalar_lea.vmem [#allocation1], 32
          %825 = vst [vmem:[%s824] ss:$4 sm:$0xff] %v796
          %v826 = vld.sshfl [vmem:[#allocation1 + $0x20] sm:$0xff pattern:$0x73625140]
          %829 = vst [vmem:[#allocation1] ss:$4 sm:$0xff] %v797
          %v830 = vld.sshfl [vmem:[#allocation1] sm:$0xff pattern:$0x73625140]
          %833 = vst [vmem:[%s824] ss:$4 sm:$0xff] %v798
          %v834 = vld.sshfl [vmem:[#allocation1 + $0x20] sm:$0xff pattern:$0x73625140]
          %837 = vst [vmem:[#allocation1] ss:$4 sm:$0xff] %v799
          %v838 = vld.sshfl [vmem:[#allocation1] sm:$0xff pattern:$0x73625140]
          %841 = vst [vmem:[%s824] ss:$4 sm:$0xff] %v800
          %v842 = vld.sshfl [vmem:[#allocation1 + $0x20] sm:$0xff pattern:$0x73625140]
          %845 = vst [vmem:[#allocation1] ss:$4 sm:$0xff] %v801
          %v846 = vld.sshfl [vmem:[#allocation1] sm:$0xff pattern:$0x73625140]
          %849 = vst [vmem:[%s824] ss:$4 sm:$0xff] %v802
          %v850 = vld.sshfl [vmem:[#allocation1 + $0x20] sm:$0xff pattern:$0x73625140]
          %v852 = vunpack.c.l.b16 %v821
          %v853 = vunpack.c.l.b16 %v826
          %v854 = vunpack.c.l.b16 %v830
          %v855 = vunpack.c.l.b16 %v834
          %v856 = vunpack.c.l.b16 %v838
          %v857 = vunpack.c.l.b16 %v842
          %v858 = vunpack.c.l.b16 %v846
          %v859 = vunpack.c.l.b16 %v850
          %v860 = vrot.slane %v852, 1
          %v861 = vsel %vm586, %v853, %v860
          %v862 = vrot.slane %v854, 7
          %v863 = vsel %vm589, %v862, %v861
          %v864 = vrot.slane %v855, 6
          %v865 = vsel %vm592, %v864, %v863
          %v866 = vrot.slane %v856, 5
          %v867 = vsel %vm595, %v866, %v865
          %v868 = vrot.slane %v857, 4
          %v869 = vsel %vm598, %v868, %v867
          %v870 = vrot.slane %v858, 3
          %v871 = vsel %vm601, %v870, %v869
          %v872 = vrot.slane %v859, 2
          %v873 = vsel %vm604, %v872, %v871
          %v874 = vpack.c.b16 %v873, %v873
          %876 = vst [vmem:[#allocation1] ss:$4 sm:$0xff] %v803
          %v877 = vld.sshfl [vmem:[#allocation1] sm:$0xff pattern:$0x73625140]
          %s880 = scalar_lea.vmem [#allocation1], 32
          %881 = vst [vmem:[%s880] ss:$4 sm:$0xff] %v804
          %v882 = vld.sshfl [vmem:[#allocation1 + $0x20] sm:$0xff pattern:$0x73625140]
          %885 = vst [vmem:[#allocation1] ss:$4 sm:$0xff] %v805
          %v886 = vld.sshfl [vmem:[#allocation1] sm:$0xff pattern:$0x73625140]
          %889 = vst [vmem:[%s880] ss:$4 sm:$0xff] %v806
          %v890 = vld.sshfl [vmem:[#allocation1 + $0x20] sm:$0xff pattern:$0x73625140]
          %893 = vst [vmem:[#allocation1] ss:$4 sm:$0xff] %v807
          %v894 = vld.sshfl [vmem:[#allocation1] sm:$0xff pattern:$0x73625140]
          %897 = vst [vmem:[%s880] ss:$4 sm:$0xff] %v808
          %v898 = vld.sshfl [vmem:[#allocation1 + $0x20] sm:$0xff pattern:$0x73625140]
          %901 = vst [vmem:[#allocation1] ss:$4 sm:$0xff] %v809
          %v902 = vld.sshfl [vmem:[#allocation1] sm:$0xff pattern:$0x73625140]
          %905 = vst [vmem:[%s880] ss:$4 sm:$0xff] %v810
          %v906 = vld.sshfl [vmem:[#allocation1 + $0x20] sm:$0xff pattern:$0x73625140]
          %v908 = vunpack.c.l.b16 %v877
          %v909 = vunpack.c.l.b16 %v882
          %v910 = vunpack.c.l.b16 %v886
          %v911 = vunpack.c.l.b16 %v890
          %v912 = vunpack.c.l.b16 %v894
          %v913 = vunpack.c.l.b16 %v898
          %v914 = vunpack.c.l.b16 %v902
          %v915 = vunpack.c.l.b16 %v906
          %v916 = vrot.slane %v908, 1
          %v917 = vsel %vm586, %v909, %v916
          %v918 = vrot.slane %v910, 7
          %v919 = vsel %vm589, %v918, %v917
          %v920 = vrot.slane %v911, 6
          %v921 = vsel %vm592, %v920, %v919
          %v922 = vrot.slane %v912, 5
          %v923 = vsel %vm595, %v922, %v921
          %v924 = vrot.slane %v913, 4
          %v925 = vsel %vm598, %v924, %v923
          %v926 = vrot.slane %v914, 3
          %v927 = vsel %vm601, %v926, %v925
          %v928 = vrot.slane %v915, 2
          %v929 = vsel %vm604, %v928, %v927
          %v930 = vpack.c.b16 %v929, %v929
          %v932 = vsel %vm663, %v874, 0
          %v935 = vsel %vm663, %v930, 0
          %937 = vmatpush.bf16.xpose.msra.mxu0 0
          %938 = vmatpush.bf16.xpose.msra.mxu0 0
          %939 = vmatpush.bf16.xpose.msra.mxu0 0
          %940 = vmatpush.bf16.xpose.msra.mxu0 0
          %941 = vmatpush.bf16.xpose.msra.mxu0 0
          %942 = vmatpush.bf16.xpose.msra.mxu0 0
          %943 = vmatpush.bf16.xpose.msra.mxu0 0
          %944 = vmatpush.bf16.xpose.msra.mxu0 %v935
          %945 = vmatmul.bf16.gmra.mxu0 %v932
          %v946 = vpop.f32.mrf.mxu0
          %v947 = vadd.f32 0.0, %v946
          %v948 = vpop.f32.mrf.mxu0
          %949 = vdwg.mxu0
          %v950 = vsel %vm519, %v947, -2.3819763e+38
          %s951 = scalar_lea.vmem [#allocation2], 8
          %v952 = vld [vmem:[%s951] sm:$0xff]
          %v953 = vsel %vm663, %v950, -inf
          %954 = vmax.xlane.f32.xlu0 %v953
          %v955 = vpop.xlane.xlu0 %954
          %v956 = vmax.f32 %v952, %v955
          %v957 = vsub.f32 %v952, %v956
          %v958 = vmul.f32 %v957, 1.442695
          %v959 = vpow.pop %v958
          %961 = vset.pattern.permute.xlu0 0
          %962 = vperm.xlu0 %961, %v956
          %v963 = vpop.permute.xlu0 %962
          %v965 = vsub.f32 %v950, %v963
          %v966 = vmul.f32 %v965, 1.442695
          %v967 = vpow.pop %v966
          %s968 = scalar_lea.vmem [#allocation3], 8
          %v969 = vld [vmem:[%s968] sm:$0xff]
          %v970 = vmul.f32 %v959, %v969
          %v971 = vsel %vm663, %v967, 0.0
          %972 = vadd.xlane.f32.xlu0 %v971
          %v973 = vpop.xlane.xlu0 %972
          %v974 = vadd.f32 %v970, %v973
          %975 = vst.msk [vmem:[%s968] sm:$0xff] %vm706, %v974
          %v976 = vld [vmem:[#allocation4] sm:$0xff]
          %978 = vset.pattern.permute.xlu0 0
          %979 = vperm.xlu0 %978, %v959
          %v980 = vpop.permute.xlu0 %979
          %v982 = vmul.f32 %v980, %v976
          %v983 = vpack.c.bf16 %v967, %v967
          %985 = vst [vmem:[#allocation1] ss:$4 sm:$0xff] %v811
          %v986 = vld.sshfl [vmem:[#allocation1] sm:$0xff pattern:$0x73625140]
          %s989 = scalar_lea.vmem [#allocation1], 32
          %990 = vst [vmem:[%s989] ss:$4 sm:$0xff] %v812
          %v991 = vld.sshfl [vmem:[#allocation1 + $0x20] sm:$0xff pattern:$0x73625140]
          %994 = vst [vmem:[#allocation1] ss:$4 sm:$0xff] %v813
          %v995 = vld.sshfl [vmem:[#allocation1] sm:$0xff pattern:$0x73625140]
          %998 = vst [vmem:[%s989] ss:$4 sm:$0xff] %v814
          %v999 = vld.sshfl [vmem:[#allocation1 + $0x20] sm:$0xff pattern:$0x73625140]
          %1002 = vst [vmem:[#allocation1] ss:$4 sm:$0xff] %v815
          %v1003 = vld.sshfl [vmem:[#allocation1] sm:$0xff pattern:$0x73625140]
          %1006 = vst [vmem:[%s989] ss:$4 sm:$0xff] %v816
          %v1007 = vld.sshfl [vmem:[#allocation1 + $0x20] sm:$0xff pattern:$0x73625140]
          %1010 = vst [vmem:[#allocation1] ss:$4 sm:$0xff] %v817
          %v1011 = vld.sshfl [vmem:[#allocation1] sm:$0xff pattern:$0x73625140]
          %1014 = vst [vmem:[%s989] ss:$4 sm:$0xff] %v818
          %v1015 = vld.sshfl [vmem:[#allocation1 + $0x20] sm:$0xff pattern:$0x73625140]
          %v1017 = vunpack.c.l.b16 %v986
          %v1018 = vunpack.c.l.b16 %v991
          %v1019 = vunpack.c.l.b16 %v995
          %v1020 = vunpack.c.l.b16 %v999
          %v1021 = vunpack.c.l.b16 %v1003
          %v1022 = vunpack.c.l.b16 %v1007
          %v1023 = vunpack.c.l.b16 %v1011
          %v1024 = vunpack.c.l.b16 %v1015
          %v1025 = vrot.slane %v1017, 1
          %v1026 = vsel %vm586, %v1018, %v1025
          %v1027 = vrot.slane %v1019, 7
          %v1028 = vsel %vm589, %v1027, %v1026
          %v1029 = vrot.slane %v1020, 6
          %v1030 = vsel %vm592, %v1029, %v1028
          %v1031 = vrot.slane %v1021, 5
          %v1032 = vsel %vm595, %v1031, %v1030
          %v1033 = vrot.slane %v1022, 4
          %v1034 = vsel %vm598, %v1033, %v1032
          %v1035 = vrot.slane %v1023, 3
          %v1036 = vsel %vm601, %v1035, %v1034
          %v1037 = vrot.slane %v1024, 2
          %v1038 = vsel %vm604, %v1037, %v1036
          %v1039 = vpack.c.b16 %v1038, %v1038
          %v1041 = vsel %vm663, %v983, 0
          %v1044 = vsel %vm775, %v1039, 0
          %1046 = vmatpush.bf16.msra.mxu0 0
          %1047 = vmatpush.bf16.msra.mxu0 0
          %1048 = vmatpush.bf16.msra.mxu0 0
          %1049 = vmatpush.bf16.msra.mxu0 0
          %1050 = vmatpush.bf16.msra.mxu0 0
          %1051 = vmatpush.bf16.msra.mxu0 0
          %1052 = vmatpush.bf16.msra.mxu0 0
          %1053 = vmatpush.bf16.msra.mxu0 %v1044
          %1054 = vmatmul.bf16.gmra.mxu0 %v1041
          %v1055 = vpop.f32.mrf.mxu0
          %v1056 = vadd.f32 0.0, %v1055
          %v1057 = vpop.f32.mrf.mxu0
          %1058 = vdwg.mxu0
          %1060 = vrot.lane.b32.xlu0 %v1056, 8
          %v1061 = vpop.permute.xlu0 %1060
          %v1063 = vadd.f32 %v982, %v1061
          %vm1064 = vcmask 130112
          %1065 = vst.msk [vmem:[#allocation4] sm:$0xff] %vm1064, %v1063
          %1066 = vst.msk [vmem:[%s951] sm:$0xff] %vm706, %v956
          %v1067 = vld [vmem:[%s425] sm:$0x2]
          %v1068 = vld [vmem:[%s425 + $0x2] sm:$0x2]
          %v1069 = vld [vmem:[%s425 + $0x4] sm:$0x2]
          %v1070 = vld [vmem:[%s425 + $0x6] sm:$0x2]
          %v1071 = vld [vmem:[%s425 + $0x8] sm:$0x2]
          %v1072 = vld [vmem:[%s425 + $0xa] sm:$0x2]
          %v1073 = vld [vmem:[%s425 + $0xc] sm:$0x2]
          %v1074 = vld [vmem:[%s425 + $0xe] sm:$0x2]
          %v1075 = vld [vmem:[%s432] sm:$0x2]
          %v1076 = vld [vmem:[%s432 + $0x2] sm:$0x2]
          %v1077 = vld [vmem:[%s432 + $0x4] sm:$0x2]
          %v1078 = vld [vmem:[%s432 + $0x6] sm:$0x2]
          %v1079 = vld [vmem:[%s432 + $0x8] sm:$0x2]
          %v1080 = vld [vmem:[%s432 + $0xa] sm:$0x2]
          %v1081 = vld [vmem:[%s432 + $0xc] sm:$0x2]
          %v1082 = vld [vmem:[%s432 + $0xe] sm:$0x2]
          %v1083 = vld [vmem:[%s439] sm:$0x2]
          %v1084 = vld [vmem:[%s439 + $0x2] sm:$0x2]
          %v1085 = vld [vmem:[%s439 + $0x4] sm:$0x2]
          %v1086 = vld [vmem:[%s439 + $0x6] sm:$0x2]
          %v1087 = vld [vmem:[%s439 + $0x8] sm:$0x2]
          %v1088 = vld [vmem:[%s439 + $0xa] sm:$0x2]
          %v1089 = vld [vmem:[%s439 + $0xc] sm:$0x2]
          %v1090 = vld [vmem:[%s439 + $0xe] sm:$0x2]
          %1092 = vst [vmem:[#allocation1] ss:$4 sm:$0xff] %v1067
          %v1093 = vld.sshfl [vmem:[#allocation1] sm:$0xff pattern:$0x73625140]
          %s1096 = scalar_lea.vmem [#allocation1], 32
          %1097 = vst [vmem:[%s1096] ss:$4 sm:$0xff] %v1068
          %v1098 = vld.sshfl [vmem:[#allocation1 + $0x20] sm:$0xff pattern:$0x73625140]
          %1101 = vst [vmem:[#allocation1] ss:$4 sm:$0xff] %v1069
          %v1102 = vld.sshfl [vmem:[#allocation1] sm:$0xff pattern:$0x73625140]
          %1105 = vst [vmem:[%s1096] ss:$4 sm:$0xff] %v1070
          %v1106 = vld.sshfl [vmem:[#allocation1 + $0x20] sm:$0xff pattern:$0x73625140]
          %1109 = vst [vmem:[#allocation1] ss:$4 sm:$0xff] %v1071
          %v1110 = vld.sshfl [vmem:[#allocation1] sm:$0xff pattern:$0x73625140]
          %1113 = vst [vmem:[%s1096] ss:$4 sm:$0xff] %v1072
          %v1114 = vld.sshfl [vmem:[#allocation1 + $0x20] sm:$0xff pattern:$0x73625140]
          %1117 = vst [vmem:[#allocation1] ss:$4 sm:$0xff] %v1073
          %v1118 = vld.sshfl [vmem:[#allocation1] sm:$0xff pattern:$0x73625140]
          %1121 = vst [vmem:[%s1096] ss:$4 sm:$0xff] %v1074
          %v1122 = vld.sshfl [vmem:[#allocation1 + $0x20] sm:$0xff pattern:$0x73625140]
          %v1124 = vunpack.c.l.b16 %v1093
          %v1125 = vunpack.c.l.b16 %v1098
          %v1126 = vunpack.c.l.b16 %v1102
          %v1127 = vunpack.c.l.b16 %v1106
          %v1128 = vunpack.c.l.b16 %v1110
          %v1129 = vunpack.c.l.b16 %v1114
          %v1130 = vunpack.c.l.b16 %v1118
          %v1131 = vunpack.c.l.b16 %v1122
          %v1132 = vrot.slane %v1124, 2
          %v1133 = vrot.slane %v1125, 1
          %v1134 = vsel %vm586, %v1133, %v1132
          %v1135 = vsel %vm589, %v1126, %v1134
          %v1136 = vrot.slane %v1127, 7
          %v1137 = vsel %vm592, %v1136, %v1135
          %v1138 = vrot.slane %v1128, 6
          %v1139 = vsel %vm595, %v1138, %v1137
          %v1140 = vrot.slane %v1129, 5
          %v1141 = vsel %vm598, %v1140, %v1139
          %v1142 = vrot.slane %v1130, 4
          %v1143 = vsel %vm601, %v1142, %v1141
          %v1144 = vrot.slane %v1131, 3
          %v1145 = vsel %vm604, %v1144, %v1143
          %v1146 = vpack.c.b16 %v1145, %v1145
          %1148 = vst [vmem:[#allocation1] ss:$4 sm:$0xff] %v1075
          %v1149 = vld.sshfl [vmem:[#allocation1] sm:$0xff pattern:$0x73625140]
          %s1152 = scalar_lea.vmem [#allocation1], 32
          %1153 = vst [vmem:[%s1152] ss:$4 sm:$0xff] %v1076
          %v1154 = vld.sshfl [vmem:[#allocation1 + $0x20] sm:$0xff pattern:$0x73625140]
          %1157 = vst [vmem:[#allocation1] ss:$4 sm:$0xff] %v1077
          %v1158 = vld.sshfl [vmem:[#allocation1] sm:$0xff pattern:$0x73625140]
          %1161 = vst [vmem:[%s1152] ss:$4 sm:$0xff] %v1078
          %v1162 = vld.sshfl [vmem:[#allocation1 + $0x20] sm:$0xff pattern:$0x73625140]
          %1165 = vst [vmem:[#allocation1] ss:$4 sm:$0xff] %v1079
          %v1166 = vld.sshfl [vmem:[#allocation1] sm:$0xff pattern:$0x73625140]
          %1169 = vst [vmem:[%s1152] ss:$4 sm:$0xff] %v1080
          %v1170 = vld.sshfl [vmem:[#allocation1 + $0x20] sm:$0xff pattern:$0x73625140]
          %1173 = vst [vmem:[#allocation1] ss:$4 sm:$0xff] %v1081
          %v1174 = vld.sshfl [vmem:[#allocation1] sm:$0xff pattern:$0x73625140]
          %1177 = vst [vmem:[%s1152] ss:$4 sm:$0xff] %v1082
          %v1178 = vld.sshfl [vmem:[#allocation1 + $0x20] sm:$0xff pattern:$0x73625140]
          %v1180 = vunpack.c.l.b16 %v1149
          %v1181 = vunpack.c.l.b16 %v1154
          %v1182 = vunpack.c.l.b16 %v1158
          %v1183 = vunpack.c.l.b16 %v1162
          %v1184 = vunpack.c.l.b16 %v1166
          %v1185 = vunpack.c.l.b16 %v1170
          %v1186 = vunpack.c.l.b16 %v1174
          %v1187 = vunpack.c.l.b16 %v1178
          %v1188 = vrot.slane %v1180, 2
          %v1189 = vrot.slane %v1181, 1
          %v1190 = vsel %vm586, %v1189, %v1188
          %v1191 = vsel %vm589, %v1182, %v1190
          %v1192 = vrot.slane %v1183, 7
          %v1193 = vsel %vm592, %v1192, %v1191
          %v1194 = vrot.slane %v1184, 6
          %v1195 = vsel %vm595, %v1194, %v1193
          %v1196 = vrot.slane %v1185, 5
          %v1197 = vsel %vm598, %v1196, %v1195
          %v1198 = vrot.slane %v1186, 4
          %v1199 = vsel %vm601, %v1198, %v1197
          %v1200 = vrot.slane %v1187, 3
          %v1201 = vsel %vm604, %v1200, %v1199
          %v1202 = vpack.c.b16 %v1201, %v1201
          %v1204 = vsel %vm663, %v1146, 0
          %v1207 = vsel %vm663, %v1202, 0
          %1209 = vmatpush.bf16.xpose.msra.mxu0 0
          %1210 = vmatpush.bf16.xpose.msra.mxu0 0
          %1211 = vmatpush.bf16.xpose.msra.mxu0 0
          %1212 = vmatpush.bf16.xpose.msra.mxu0 0
          %1213 = vmatpush.bf16.xpose.msra.mxu0 0
          %1214 = vmatpush.bf16.xpose.msra.mxu0 0
          %1215 = vmatpush.bf16.xpose.msra.mxu0 0
          %1216 = vmatpush.bf16.xpose.msra.mxu0 %v1207
          %1217 = vmatmul.bf16.gmra.mxu0 %v1204
          %v1218 = vpop.f32.mrf.mxu0
          %v1219 = vadd.f32 0.0, %v1218
          %v1220 = vpop.f32.mrf.mxu0
          %1221 = vdwg.mxu0
          %v1222 = vsel %vm519, %v1219, -2.3819763e+38
          %s1223 = scalar_lea.vmem [#allocation2], 16
          %v1224 = vld [vmem:[%s1223] sm:$0xff]
          %v1225 = vsel %vm663, %v1222, -inf
          %1226 = vmax.xlane.f32.xlu0 %v1225
          %v1227 = vpop.xlane.xlu0 %1226
          %v1228 = vmax.f32 %v1224, %v1227
          %v1229 = vsub.f32 %v1224, %v1228
          %v1230 = vmul.f32 %v1229, 1.442695
          %v1231 = vpow.pop %v1230
          %1233 = vset.pattern.permute.xlu0 0
          %1234 = vperm.xlu0 %1233, %v1228
          %v1235 = vpop.permute.xlu0 %1234
          %v1237 = vsub.f32 %v1222, %v1235
          %v1238 = vmul.f32 %v1237, 1.442695
          %v1239 = vpow.pop %v1238
          %s1240 = scalar_lea.vmem [#allocation3], 16
          %v1241 = vld [vmem:[%s1240] sm:$0xff]
          %v1242 = vmul.f32 %v1231, %v1241
          %v1243 = vsel %vm663, %v1239, 0.0
          %1244 = vadd.xlane.f32.xlu0 %v1243
          %v1245 = vpop.xlane.xlu0 %1244
          %v1246 = vadd.f32 %v1242, %v1245
          %1247 = vst.msk [vmem:[%s1240] sm:$0xff] %vm706, %v1246
          %v1248 = vld [vmem:[#allocation4] sm:$0xff]
          %1250 = vset.pattern.permute.xlu0 0
          %1251 = vperm.xlu0 %1250, %v1231
          %v1252 = vpop.permute.xlu0 %1251
          %v1254 = vmul.f32 %v1252, %v1248
          %v1255 = vpack.c.bf16 %v1239, %v1239
          %1257 = vst [vmem:[#allocation1] ss:$4 sm:$0xff] %v1083
          %v1258 = vld.sshfl [vmem:[#allocation1] sm:$0xff pattern:$0x73625140]
          %s1261 = scalar_lea.vmem [#allocation1], 32
          %1262 = vst [vmem:[%s1261] ss:$4 sm:$0xff] %v1084
          %v1263 = vld.sshfl [vmem:[#allocation1 + $0x20] sm:$0xff pattern:$0x73625140]
          %1266 = vst [vmem:[#allocation1] ss:$4 sm:$0xff] %v1085
          %v1267 = vld.sshfl [vmem:[#allocation1] sm:$0xff pattern:$0x73625140]
          %1270 = vst [vmem:[%s1261] ss:$4 sm:$0xff] %v1086
          %v1271 = vld.sshfl [vmem:[#allocation1 + $0x20] sm:$0xff pattern:$0x73625140]
          %1274 = vst [vmem:[#allocation1] ss:$4 sm:$0xff] %v1087
          %v1275 = vld.sshfl [vmem:[#allocation1] sm:$0xff pattern:$0x73625140]
          %1278 = vst [vmem:[%s1261] ss:$4 sm:$0xff] %v1088
          %v1279 = vld.sshfl [vmem:[#allocation1 + $0x20] sm:$0xff pattern:$0x73625140]
          %1282 = vst [vmem:[#allocation1] ss:$4 sm:$0xff] %v1089
          %v1283 = vld.sshfl [vmem:[#allocation1] sm:$0xff pattern:$0x73625140]
          %1286 = vst [vmem:[%s1261] ss:$4 sm:$0xff] %v1090
          %v1287 = vld.sshfl [vmem:[#allocation1 + $0x20] sm:$0xff pattern:$0x73625140]
          %v1289 = vunpack.c.l.b16 %v1258
          %v1290 = vunpack.c.l.b16 %v1263
          %v1291 = vunpack.c.l.b16 %v1267
          %v1292 = vunpack.c.l.b16 %v1271
          %v1293 = vunpack.c.l.b16 %v1275
          %v1294 = vunpack.c.l.b16 %v1279
          %v1295 = vunpack.c.l.b16 %v1283
          %v1296 = vunpack.c.l.b16 %v1287
          %v1297 = vrot.slane %v1289, 2
          %v1298 = vrot.slane %v1290, 1
          %v1299 = vsel %vm586, %v1298, %v1297
          %v1300 = vsel %vm589, %v1291, %v1299
          %v1301 = vrot.slane %v1292, 7
          %v1302 = vsel %vm592, %v1301, %v1300
          %v1303 = vrot.slane %v1293, 6
          %v1304 = vsel %vm595, %v1303, %v1302
          %v1305 = vrot.slane %v1294, 5
          %v1306 = vsel %vm598, %v1305, %v1304
          %v1307 = vrot.slane %v1295, 4
          %v1308 = vsel %vm601, %v1307, %v1306
          %v1309 = vrot.slane %v1296, 3
          %v1310 = vsel %vm604, %v1309, %v1308
          %v1311 = vpack.c.b16 %v1310, %v1310
          %v1313 = vsel %vm663, %v1255, 0
          %v1316 = vsel %vm775, %v1311, 0
          %1318 = vmatpush.bf16.msra.mxu0 0
          %1319 = vmatpush.bf16.msra.mxu0 0
          %1320 = vmatpush.bf16.msra.mxu0 0
          %1321 = vmatpush.bf16.msra.mxu0 0
          %1322 = vmatpush.bf16.msra.mxu0 0
          %1323 = vmatpush.bf16.msra.mxu0 0
          %1324 = vmatpush.bf16.msra.mxu0 0
          %1325 = vmatpush.bf16.msra.mxu0 %v1316
          %1326 = vmatmul.bf16.gmra.mxu0 %v1313
          %v1327 = vpop.f32.mrf.mxu0
          %v1328 = vadd.f32 0.0, %v1327
          %v1329 = vpop.f32.mrf.mxu0
          %1330 = vdwg.mxu0
          %1332 = vrot.lane.b32.xlu0 %v1328, 16
          %v1333 = vpop.permute.xlu0 %1332
          %v1335 = vadd.f32 %v1254, %v1333
          %vm1336 = vcmask 195712
          %1337 = vst.msk [vmem:[#allocation4] sm:$0xff] %vm1336, %v1335
          %1338 = vst.msk [vmem:[%s1223] sm:$0xff] %vm706, %v1228
          %v1339 = vld [vmem:[%s425] sm:$0x2]
          %v1340 = vld [vmem:[%s425 + $0x2] sm:$0x2]
          %v1341 = vld [vmem:[%s425 + $0x4] sm:$0x2]
          %v1342 = vld [vmem:[%s425 + $0x6] sm:$0x2]
          %v1343 = vld [vmem:[%s425 + $0x8] sm:$0x2]
          %v1344 = vld [vmem:[%s425 + $0xa] sm:$0x2]
          %v1345 = vld [vmem:[%s425 + $0xc] sm:$0x2]
          %v1346 = vld [vmem:[%s425 + $0xe] sm:$0x2]
          %v1347 = vld [vmem:[%s432] sm:$0x2]
          %v1348 = vld [vmem:[%s432 + $0x2] sm:$0x2]
          %v1349 = vld [vmem:[%s432 + $0x4] sm:$0x2]
          %v1350 = vld [vmem:[%s432 + $0x6] sm:$0x2]
          %v1351 = vld [vmem:[%s432 + $0x8] sm:$0x2]
          %v1352 = vld [vmem:[%s432 + $0xa] sm:$0x2]
          %v1353 = vld [vmem:[%s432 + $0xc] sm:$0x2]
          %v1354 = vld [vmem:[%s432 + $0xe] sm:$0x2]
          %v1355 = vld [vmem:[%s439] sm:$0x2]
          %v1356 = vld [vmem:[%s439 + $0x2] sm:$0x2]
          %v1357 = vld [vmem:[%s439 + $0x4] sm:$0x2]
          %v1358 = vld [vmem:[%s439 + $0x6] sm:$0x2]
          %v1359 = vld [vmem:[%s439 + $0x8] sm:$0x2]
          %v1360 = vld [vmem:[%s439 + $0xa] sm:$0x2]
          %v1361 = vld [vmem:[%s439 + $0xc] sm:$0x2]
          %v1362 = vld [vmem:[%s439 + $0xe] sm:$0x2]
          %1364 = vst [vmem:[#allocation1] ss:$4 sm:$0xff] %v1339
          %v1365 = vld.sshfl [vmem:[#allocation1] sm:$0xff pattern:$0x73625140]
          %s1368 = scalar_lea.vmem [#allocation1], 32
          %1369 = vst [vmem:[%s1368] ss:$4 sm:$0xff] %v1340
          %v1370 = vld.sshfl [vmem:[#allocation1 + $0x20] sm:$0xff pattern:$0x73625140]
          %1373 = vst [vmem:[#allocation1] ss:$4 sm:$0xff] %v1341
          %v1374 = vld.sshfl [vmem:[#allocation1] sm:$0xff pattern:$0x73625140]
          %1377 = vst [vmem:[%s1368] ss:$4 sm:$0xff] %v1342
          %v1378 = vld.sshfl [vmem:[#allocation1 + $0x20] sm:$0xff pattern:$0x73625140]
          %1381 = vst [vmem:[#allocation1] ss:$4 sm:$0xff] %v1343
          %v1382 = vld.sshfl [vmem:[#allocation1] sm:$0xff pattern:$0x73625140]
          %1385 = vst [vmem:[%s1368] ss:$4 sm:$0xff] %v1344
          %v1386 = vld.sshfl [vmem:[#allocation1 + $0x20] sm:$0xff pattern:$0x73625140]
          %1389 = vst [vmem:[#allocation1] ss:$4 sm:$0xff] %v1345
          %v1390 = vld.sshfl [vmem:[#allocation1] sm:$0xff pattern:$0x73625140]
          %1393 = vst [vmem:[%s1368] ss:$4 sm:$0xff] %v1346
          %v1394 = vld.sshfl [vmem:[#allocation1 + $0x20] sm:$0xff pattern:$0x73625140]
          %v1396 = vunpack.c.l.b16 %v1365
          %v1397 = vunpack.c.l.b16 %v1370
          %v1398 = vunpack.c.l.b16 %v1374
          %v1399 = vunpack.c.l.b16 %v1378
          %v1400 = vunpack.c.l.b16 %v1382
          %v1401 = vunpack.c.l.b16 %v1386
          %v1402 = vunpack.c.l.b16 %v1390
          %v1403 = vunpack.c.l.b16 %v1394
          %v1404 = vrot.slane %v1396, 3
          %v1405 = vrot.slane %v1397, 2
          %v1406 = vsel %vm586, %v1405, %v1404
          %v1407 = vrot.slane %v1398, 1
          %v1408 = vsel %vm589, %v1407, %v1406
          %v1409 = vsel %vm592, %v1399, %v1408
          %v1410 = vrot.slane %v1400, 7
          %v1411 = vsel %vm595, %v1410, %v1409
          %v1412 = vrot.slane %v1401, 6
          %v1413 = vsel %vm598, %v1412, %v1411
          %v1414 = vrot.slane %v1402, 5
          %v1415 = vsel %vm601, %v1414, %v1413
          %v1416 = vrot.slane %v1403, 4
          %v1417 = vsel %vm604, %v1416, %v1415
          %v1418 = vpack.c.b16 %v1417, %v1417
          %1420 = vst [vmem:[#allocation1] ss:$4 sm:$0xff] %v1347
          %v1421 = vld.sshfl [vmem:[#allocation1] sm:$0xff pattern:$0x73625140]
          %s1424 = scalar_lea.vmem [#allocation1], 32
          %1425 = vst [vmem:[%s1424] ss:$4 sm:$0xff] %v1348
          %v1426 = vld.sshfl [vmem:[#allocation1 + $0x20] sm:$0xff pattern:$0x73625140]
          %1429 = vst [vmem:[#allocation1] ss:$4 sm:$0xff] %v1349
          %v1430 = vld.sshfl [vmem:[#allocation1] sm:$0xff pattern:$0x73625140]
          %1433 = vst [vmem:[%s1424] ss:$4 sm:$0xff] %v1350
          %v1434 = vld.sshfl [vmem:[#allocation1 + $0x20] sm:$0xff pattern:$0x73625140]
          %1437 = vst [vmem:[#allocation1] ss:$4 sm:$0xff] %v1351
          %v1438 = vld.sshfl [vmem:[#allocation1] sm:$0xff pattern:$0x73625140]
          %1441 = vst [vmem:[%s1424] ss:$4 sm:$0xff] %v1352
          %v1442 = vld.sshfl [vmem:[#allocation1 + $0x20] sm:$0xff pattern:$0x73625140]
          %1445 = vst [vmem:[#allocation1] ss:$4 sm:$0xff] %v1353
          %v1446 = vld.sshfl [vmem:[#allocation1] sm:$0xff pattern:$0x73625140]
          %1449 = vst [vmem:[%s1424] ss:$4 sm:$0xff] %v1354
          %v1450 = vld.sshfl [vmem:[#allocation1 + $0x20] sm:$0xff pattern:$0x73625140]
          %v1452 = vunpack.c.l.b16 %v1421
          %v1453 = vunpack.c.l.b16 %v1426
          %v1454 = vunpack.c.l.b16 %v1430
          %v1455 = vunpack.c.l.b16 %v1434
          %v1456 = vunpack.c.l.b16 %v1438
          %v1457 = vunpack.c.l.b16 %v1442
          %v1458 = vunpack.c.l.b16 %v1446
          %v1459 = vunpack.c.l.b16 %v1450
          %v1460 = vrot.slane %v1452, 3
          %v1461 = vrot.slane %v1453, 2
          %v1462 = vsel %vm586, %v1461, %v1460
          %v1463 = vrot.slane %v1454, 1
          %v1464 = vsel %vm589, %v1463, %v1462
          %v1465 = vsel %vm592, %v1455, %v1464
          %v1466 = vrot.slane %v1456, 7
          %v1467 = vsel %vm595, %v1466, %v1465
          %v1468 = vrot.slane %v1457, 6
          %v1469 = vsel %vm598, %v1468, %v1467
          %v1470 = vrot.slane %v1458, 5
          %v1471 = vsel %vm601, %v1470, %v1469
          %v1472 = vrot.slane %v1459, 4
          %v1473 = vsel %vm604, %v1472, %v1471
          %v1474 = vpack.c.b16 %v1473, %v1473
          %v1476 = vsel %vm663, %v1418, 0
          %v1479 = vsel %vm663, %v1474, 0
          %1481 = vmatpush.bf16.xpose.msra.mxu0 0
          %1482 = vmatpush.bf16.xpose.msra.mxu0 0
          %1483 = vmatpush.bf16.xpose.msra.mxu0 0
          %1484 = vmatpush.bf16.xpose.msra.mxu0 0
          %1485 = vmatpush.bf16.xpose.msra.mxu0 0
          %1486 = vmatpush.bf16.xpose.msra.mxu0 0
          %1487 = vmatpush.bf16.xpose.msra.mxu0 0
          %1488 = vmatpush.bf16.xpose.msra.mxu0 %v1479
          %1489 = vmatmul.bf16.gmra.mxu0 %v1476
          %v1490 = vpop.f32.mrf.mxu0
          %v1491 = vadd.f32 0.0, %v1490
          %v1492 = vpop.f32.mrf.mxu0
          %1493 = vdwg.mxu0
          %v1494 = vsel %vm519, %v1491, -2.3819763e+38
          %s1495 = scalar_lea.vmem [#allocation2], 24
          %v1496 = vld [vmem:[%s1495] sm:$0xff]
          %v1497 = vsel %vm663, %v1494, -inf
          %1498 = vmax.xlane.f32.xlu0 %v1497
          %v1499 = vpop.xlane.xlu0 %1498
          %v1500 = vmax.f32 %v1496, %v1499
          %v1501 = vsub.f32 %v1496, %v1500
          %v1502 = vmul.f32 %v1501, 1.442695
          %v1503 = vpow.pop %v1502
          %1505 = vset.pattern.permute.xlu0 0
          %1506 = vperm.xlu0 %1505, %v1500
          %v1507 = vpop.permute.xlu0 %1506
          %v1509 = vsub.f32 %v1494, %v1507
          %v1510 = vmul.f32 %v1509, 1.442695
          %v1511 = vpow.pop %v1510
          %s1512 = scalar_lea.vmem [#allocation3], 24
          %v1513 = vld [vmem:[%s1512] sm:$0xff]
          %v1514 = vmul.f32 %v1503, %v1513
          %v1515 = vsel %vm663, %v1511, 0.0
          %1516 = vadd.xlane.f32.xlu0 %v1515
          %v1517 = vpop.xlane.xlu0 %1516
          %v1518 = vadd.f32 %v1514, %v1517
          %1519 = vst.msk [vmem:[%s1512] sm:$0xff] %vm706, %v1518
          %v1520 = vld [vmem:[#allocation4] sm:$0xff]
          %1522 = vset.pattern.permute.xlu0 0
          %1523 = vperm.xlu0 %1522, %v1503
          %v1524 = vpop.permute.xlu0 %1523
          %v1526 = vmul.f32 %v1524, %v1520
          %v1527 = vpack.c.bf16 %v1511, %v1511
          %1529 = vst [vmem:[#allocation1] ss:$4 sm:$0xff] %v1355
          %v1530 = vld.sshfl [vmem:[#allocation1] sm:$0xff pattern:$0x73625140]
          %s1533 = scalar_lea.vmem [#allocation1], 32
          %1534 = vst [vmem:[%s1533] ss:$4 sm:$0xff] %v1356
          %v1535 = vld.sshfl [vmem:[#allocation1 + $0x20] sm:$0xff pattern:$0x73625140]
          %1538 = vst [vmem:[#allocation1] ss:$4 sm:$0xff] %v1357
          %v1539 = vld.sshfl [vmem:[#allocation1] sm:$0xff pattern:$0x73625140]
          %1542 = vst [vmem:[%s1533] ss:$4 sm:$0xff] %v1358
          %v1543 = vld.sshfl [vmem:[#allocation1 + $0x20] sm:$0xff pattern:$0x73625140]
          %1546 = vst [vmem:[#allocation1] ss:$4 sm:$0xff] %v1359
          %v1547 = vld.sshfl [vmem:[#allocation1] sm:$0xff pattern:$0x73625140]
          %1550 = vst [vmem:[%s1533] ss:$4 sm:$0xff] %v1360
          %v1551 = vld.sshfl [vmem:[#allocation1 + $0x20] sm:$0xff pattern:$0x73625140]
          %1554 = vst [vmem:[#allocation1] ss:$4 sm:$0xff] %v1361
          %v1555 = vld.sshfl [vmem:[#allocation1] sm:$0xff pattern:$0x73625140]
          %1558 = vst [vmem:[%s1533] ss:$4 sm:$0xff] %v1362
          %v1559 = vld.sshfl [vmem:[#allocation1 + $0x20] sm:$0xff pattern:$0x73625140]
          %v1561 = vunpack.c.l.b16 %v1530
          %v1562 = vunpack.c.l.b16 %v1535
          %v1563 = vunpack.c.l.b16 %v1539
          %v1564 = vunpack.c.l.b16 %v1543
          %v1565 = vunpack.c.l.b16 %v1547
          %v1566 = vunpack.c.l.b16 %v1551
          %v1567 = vunpack.c.l.b16 %v1555
          %v1568 = vunpack.c.l.b16 %v1559
          %v1569 = vrot.slane %v1561, 3
          %v1570 = vrot.slane %v1562, 2
          %v1571 = vsel %vm586, %v1570, %v1569
          %v1572 = vrot.slane %v1563, 1
          %v1573 = vsel %vm589, %v1572, %v1571
          %v1574 = vsel %vm592, %v1564, %v1573
          %v1575 = vrot.slane %v1565, 7
          %v1576 = vsel %vm595, %v1575, %v1574
          %v1577 = vrot.slane %v1566, 6
          %v1578 = vsel %vm598, %v1577, %v1576
          %v1579 = vrot.slane %v1567, 5
          %v1580 = vsel %vm601, %v1579, %v1578
          %v1581 = vrot.slane %v1568, 4
          %v1582 = vsel %vm604, %v1581, %v1580
          %v1583 = vpack.c.b16 %v1582, %v1582
          %v1585 = vsel %vm663, %v1527, 0
          %v1588 = vsel %vm775, %v1583, 0
          %1590 = vmatpush.bf16.msra.mxu0 0
          %1591 = vmatpush.bf16.msra.mxu0 0
          %1592 = vmatpush.bf16.msra.mxu0 0
          %1593 = vmatpush.bf16.msra.mxu0 0
          %1594 = vmatpush.bf16.msra.mxu0 0
          %1595 = vmatpush.bf16.msra.mxu0 0
          %1596 = vmatpush.bf16.msra.mxu0 0
          %1597 = vmatpush.bf16.msra.mxu0 %v1588
          %1598 = vmatmul.bf16.gmra.mxu0 %v1585
          %v1599 = vpop.f32.mrf.mxu0
          %v1600 = vadd.f32 0.0, %v1599
          %v1601 = vpop.f32.mrf.mxu0
          %1602 = vdwg.mxu0
          %1604 = vrot.lane.b32.xlu0 %v1600, 24
          %v1605 = vpop.permute.xlu0 %1604
          %v1607 = vadd.f32 %v1526, %v1605
          %vm1608 = vcmask 261312
          %1609 = vst.msk [vmem:[#allocation4] sm:$0xff] %vm1608, %v1607
          %1610 = vst.msk [vmem:[%s1495] sm:$0xff] %vm706, %v1500
        $region163: #{causal_self_attention.4} parent=142 // pred_fallthru
          _
        %p1611 = scmp.le.s32.totalorder %s506, %s489
        // Predicated region
        $region164: #{causal_self_attention.4} parent=142 // pred_check
          %p1612 = pneg %p1611
        $region165: #{causal_self_attention.4} parent=142 // pred_check_branch
          %1614 = sbr.rel (%p1612) target = $region167
        $region166: #{causal_self_attention.4} parent=142 // pred_region
          %v1615 = vld [vmem:[%s425] sm:$0x1]
          %v1616 = vld [vmem:[%s425 + $0x2] sm:$0x1]
          %v1617 = vld [vmem:[%s425 + $0x4] sm:$0x1]
          %v1618 = vld [vmem:[%s425 + $0x6] sm:$0x1]
          %v1619 = vld [vmem:[%s425 + $0x8] sm:$0x1]
          %v1620 = vld [vmem:[%s425 + $0xa] sm:$0x1]
          %v1621 = vld [vmem:[%s425 + $0xc] sm:$0x1]
          %v1622 = vld [vmem:[%s425 + $0xe] sm:$0x1]
          %v1623 = vld [vmem:[%s432] sm:$0x1]
          %v1624 = vld [vmem:[%s432 + $0x2] sm:$0x1]
          %v1625 = vld [vmem:[%s432 + $0x4] sm:$0x1]
          %v1626 = vld [vmem:[%s432 + $0x6] sm:$0x1]
          %v1627 = vld [vmem:[%s432 + $0x8] sm:$0x1]
          %v1628 = vld [vmem:[%s432 + $0xa] sm:$0x1]
          %v1629 = vld [vmem:[%s432 + $0xc] sm:$0x1]
          %v1630 = vld [vmem:[%s432 + $0xe] sm:$0x1]
          %v1631 = vld [vmem:[%s439] sm:$0x1]
          %v1632 = vld [vmem:[%s439 + $0x2] sm:$0x1]
          %v1633 = vld [vmem:[%s439 + $0x4] sm:$0x1]
          %v1634 = vld [vmem:[%s439 + $0x6] sm:$0x1]
          %v1635 = vld [vmem:[%s439 + $0x8] sm:$0x1]
          %v1636 = vld [vmem:[%s439 + $0xa] sm:$0x1]
          %v1637 = vld [vmem:[%s439 + $0xc] sm:$0x1]
          %v1638 = vld [vmem:[%s439 + $0xe] sm:$0x1]
          %1640 = vst [vmem:[#allocation1] ss:$4 sm:$0xff] %v1615
          %v1641 = vld.sshfl [vmem:[#allocation1] sm:$0xff pattern:$0x73625140]
          %s1644 = scalar_lea.vmem [#allocation1], 32
          %1645 = vst [vmem:[%s1644] ss:$4 sm:$0xff] %v1616
          %v1646 = vld.sshfl [vmem:[#allocation1 + $0x20] sm:$0xff pattern:$0x73625140]
          %1649 = vst [vmem:[#allocation1] ss:$4 sm:$0xff] %v1617
          %v1650 = vld.sshfl [vmem:[#allocation1] sm:$0xff pattern:$0x73625140]
          %1653 = vst [vmem:[%s1644] ss:$4 sm:$0xff] %v1618
          %v1654 = vld.sshfl [vmem:[#allocation1 + $0x20] sm:$0xff pattern:$0x73625140]
          %1657 = vst [vmem:[#allocation1] ss:$4 sm:$0xff] %v1619
          %v1658 = vld.sshfl [vmem:[#allocation1] sm:$0xff pattern:$0x73625140]
          %1661 = vst [vmem:[%s1644] ss:$4 sm:$0xff] %v1620
          %v1662 = vld.sshfl [vmem:[#allocation1 + $0x20] sm:$0xff pattern:$0x73625140]
          %1665 = vst [vmem:[#allocation1] ss:$4 sm:$0xff] %v1621
          %v1666 = vld.sshfl [vmem:[#allocation1] sm:$0xff pattern:$0x73625140]
          %1669 = vst [vmem:[%s1644] ss:$4 sm:$0xff] %v1622
          %v1670 = vld.sshfl [vmem:[#allocation1 + $0x20] sm:$0xff pattern:$0x73625140]
          %v1672 = vunpack.c.l.b16 %v1641
          %v1673 = vunpack.c.l.b16 %v1646
          %v1674 = vunpack.c.l.b16 %v1650
          %v1675 = vunpack.c.l.b16 %v1654
          %v1676 = vunpack.c.l.b16 %v1658
          %v1677 = vunpack.c.l.b16 %v1662
          %v1678 = vunpack.c.l.b16 %v1666
          %v1679 = vunpack.c.l.b16 %v1670
          %v1680 = vrot.slane %v1673, 7
          %vm1681 = vcmask 1041409
          %v1682 = vsel %vm1681, %v1680, %v1672
          %v1683 = vrot.slane %v1674, 6
          %vm1684 = vcmask 1042434
          %v1685 = vsel %vm1684, %v1683, %v1682
          %v1686 = vrot.slane %v1675, 5
          %vm1687 = vcmask 1043459
          %v1688 = vsel %vm1687, %v1686, %v1685
          %v1689 = vrot.slane %v1676, 4
          %vm1690 = vcmask 1044484
          %v1691 = vsel %vm1690, %v1689, %v1688
          %v1692 = vrot.slane %v1677, 3
          %vm1693 = vcmask 1045509
          %v1694 = vsel %vm1693, %v1692, %v1691
          %v1695 = vrot.slane %v1678, 2
          %vm1696 = vcmask 1046534
          %v1697 = vsel %vm1696, %v1695, %v1694
          %v1698 = vrot.slane %v1679, 1
          %vm1699 = vcmask 1047559
          %v1700 = vsel %vm1699, %v1698, %v1697
          %v1701 = vpack.c.b16 %v1700, %v1700
          %1703 = vst [vmem:[#allocation1] ss:$4 sm:$0xff] %v1623
          %v1704 = vld.sshfl [vmem:[#allocation1] sm:$0xff pattern:$0x73625140]
          %s1707 = scalar_lea.vmem [#allocation1], 32
          %1708 = vst [vmem:[%s1707] ss:$4 sm:$0xff] %v1624
          %v1709 = vld.sshfl [vmem:[#allocation1 + $0x20] sm:$0xff pattern:$0x73625140]
          %1712 = vst [vmem:[#allocation1] ss:$4 sm:$0xff] %v1625
          %v1713 = vld.sshfl [vmem:[#allocation1] sm:$0xff pattern:$0x73625140]
          %1716 = vst [vmem:[%s1707] ss:$4 sm:$0xff] %v1626
          %v1717 = vld.sshfl [vmem:[#allocation1 + $0x20] sm:$0xff pattern:$0x73625140]
          %1720 = vst [vmem:[#allocation1] ss:$4 sm:$0xff] %v1627
          %v1721 = vld.sshfl [vmem:[#allocation1] sm:$0xff pattern:$0x73625140]
          %1724 = vst [vmem:[%s1707] ss:$4 sm:$0xff] %v1628
          %v1725 = vld.sshfl [vmem:[#allocation1 + $0x20] sm:$0xff pattern:$0x73625140]
          %1728 = vst [vmem:[#allocation1] ss:$4 sm:$0xff] %v1629
          %v1729 = vld.sshfl [vmem:[#allocation1] sm:$0xff pattern:$0x73625140]
          %1732 = vst [vmem:[%s1707] ss:$4 sm:$0xff] %v1630
          %v1733 = vld.sshfl [vmem:[#allocation1 + $0x20] sm:$0xff pattern:$0x73625140]
          %v1735 = vunpack.c.l.b16 %v1704
          %v1736 = vunpack.c.l.b16 %v1709
          %v1737 = vunpack.c.l.b16 %v1713
          %v1738 = vunpack.c.l.b16 %v1717
          %v1739 = vunpack.c.l.b16 %v1721
          %v1740 = vunpack.c.l.b16 %v1725
          %v1741 = vunpack.c.l.b16 %v1729
          %v1742 = vunpack.c.l.b16 %v1733
          %v1743 = vrot.slane %v1736, 7
          %v1744 = vsel %vm1681, %v1743, %v1735
          %v1745 = vrot.slane %v1737, 6
          %v1746 = vsel %vm1684, %v1745, %v1744
          %v1747 = vrot.slane %v1738, 5
          %v1748 = vsel %vm1687, %v1747, %v1746
          %v1749 = vrot.slane %v1739, 4
          %v1750 = vsel %vm1690, %v1749, %v1748
          %v1751 = vrot.slane %v1740, 3
          %v1752 = vsel %vm1693, %v1751, %v1750
          %v1753 = vrot.slane %v1741, 2
          %v1754 = vsel %vm1696, %v1753, %v1752
          %v1755 = vrot.slane %v1742, 1
          %v1756 = vsel %vm1699, %v1755, %v1754
          %v1757 = vpack.c.b16 %v1756, %v1756
          %vm1758 = vcmask 64512
          %v1760 = vsel %vm1758, %v1701, 0
          %v1763 = vsel %vm1758, %v1757, 0
          %1765 = vmatpush.bf16.xpose.msra.mxu0 0
          %1766 = vmatpush.bf16.xpose.msra.mxu0 0
          %1767 = vmatpush.bf16.xpose.msra.mxu0 0
          %1768 = vmatpush.bf16.xpose.msra.mxu0 0
          %1769 = vmatpush.bf16.xpose.msra.mxu0 0
          %1770 = vmatpush.bf16.xpose.msra.mxu0 0
          %1771 = vmatpush.bf16.xpose.msra.mxu0 0
          %1772 = vmatpush.bf16.xpose.msra.mxu0 %v1763
          %1773 = vmatmul.bf16.gmra.mxu0 %v1760
          %v1774 = vpop.f32.mrf.mxu0
          %v1775 = vadd.f32 0.0, %v1774
          %v1776 = vpop.f32.mrf.mxu0
          %1777 = vdwg.mxu0
          %v1778 = vld [vmem:[#allocation2] sm:$0xff]
          %v1779 = vsel %vm1758, %v1775, -inf
          %1780 = vmax.xlane.f32.xlu0 %v1779
          %v1781 = vpop.xlane.xlu0 %1780
          %v1782 = vmax.f32 %v1778, %v1781
          %v1783 = vsub.f32 %v1778, %v1782
          %v1784 = vmul.f32 %v1783, 1.442695
          %v1785 = vpow.pop %v1784
          %1787 = vset.pattern.permute.xlu0 0
          %1788 = vperm.xlu0 %1787, %v1782
          %v1789 = vpop.permute.xlu0 %1788
          %v1791 = vsub.f32 %v1775, %v1789
          %v1792 = vmul.f32 %v1791, 1.442695
          %v1793 = vpow.pop %v1792
          %v1794 = vld [vmem:[#allocation3] sm:$0xff]
          %v1795 = vmul.f32 %v1785, %v1794
          %v1796 = vsel %vm1758, %v1793, 0.0
          %1797 = vadd.xlane.f32.xlu0 %v1796
          %v1798 = vpop.xlane.xlu0 %1797
          %v1799 = vadd.f32 %v1795, %v1798
          %vm1800 = vcmask 7168
          %1801 = vst.msk [vmem:[#allocation3] sm:$0xff] %vm1800, %v1799
          %v1802 = vld [vmem:[#allocation4] sm:$0xff]
          %1804 = vset.pattern.permute.xlu0 0
          %1805 = vperm.xlu0 %1804, %v1785
          %v1806 = vpop.permute.xlu0 %1805
          %v1808 = vmul.f32 %v1806, %v1802
          %v1809 = vpack.c.bf16 %v1793, %v1793
          %1811 = vst [vmem:[#allocation1] ss:$4 sm:$0xff] %v1631
          %v1812 = vld.sshfl [vmem:[#allocation1] sm:$0xff pattern:$0x73625140]
          %s1815 = scalar_lea.vmem [#allocation1], 32
          %1816 = vst [vmem:[%s1815] ss:$4 sm:$0xff] %v1632
          %v1817 = vld.sshfl [vmem:[#allocation1 + $0x20] sm:$0xff pattern:$0x73625140]
          %1820 = vst [vmem:[#allocation1] ss:$4 sm:$0xff] %v1633
          %v1821 = vld.sshfl [vmem:[#allocation1] sm:$0xff pattern:$0x73625140]
          %1824 = vst [vmem:[%s1815] ss:$4 sm:$0xff] %v1634
          %v1825 = vld.sshfl [vmem:[#allocation1 + $0x20] sm:$0xff pattern:$0x73625140]
          %1828 = vst [vmem:[#allocation1] ss:$4 sm:$0xff] %v1635
          %v1829 = vld.sshfl [vmem:[#allocation1] sm:$0xff pattern:$0x73625140]
          %1832 = vst [vmem:[%s1815] ss:$4 sm:$0xff] %v1636
          %v1833 = vld.sshfl [vmem:[#allocation1 + $0x20] sm:$0xff pattern:$0x73625140]
          %1836 = vst [vmem:[#allocation1] ss:$4 sm:$0xff] %v1637
          %v1837 = vld.sshfl [vmem:[#allocation1] sm:$0xff pattern:$0x73625140]
          %1840 = vst [vmem:[%s1815] ss:$4 sm:$0xff] %v1638
          %v1841 = vld.sshfl [vmem:[#allocation1 + $0x20] sm:$0xff pattern:$0x73625140]
          %v1843 = vunpack.c.l.b16 %v1812
          %v1844 = vunpack.c.l.b16 %v1817
          %v1845 = vunpack.c.l.b16 %v1821
          %v1846 = vunpack.c.l.b16 %v1825
          %v1847 = vunpack.c.l.b16 %v1829
          %v1848 = vunpack.c.l.b16 %v1833
          %v1849 = vunpack.c.l.b16 %v1837
          %v1850 = vunpack.c.l.b16 %v1841
          %v1851 = vrot.slane %v1844, 7
          %v1852 = vsel %vm1681, %v1851, %v1843
          %v1853 = vrot.slane %v1845, 6
          %v1854 = vsel %vm1684, %v1853, %v1852
          %v1855 = vrot.slane %v1846, 5
          %v1856 = vsel %vm1687, %v1855, %v1854
          %v1857 = vrot.slane %v1847, 4
          %v1858 = vsel %vm1690, %v1857, %v1856
          %v1859 = vrot.slane %v1848, 3
          %v1860 = vsel %vm1693, %v1859, %v1858
          %v1861 = vrot.slane %v1849, 2
          %v1862 = vsel %vm1696, %v1861, %v1860
          %v1863 = vrot.slane %v1850, 1
          %v1864 = vsel %vm1699, %v1863, %v1862
          %v1865 = vpack.c.b16 %v1864, %v1864
          %v1867 = vsel %vm1758, %v1809, 0
          %vm1869 = vcmask 1043456
          %v1871 = vsel %vm1869, %v1865, 0
          %1873 = vmatpush.bf16.msra.mxu0 0
          %1874 = vmatpush.bf16.msra.mxu0 0
          %1875 = vmatpush.bf16.msra.mxu0 0
          %1876 = vmatpush.bf16.msra.mxu0 0
          %1877 = vmatpush.bf16.msra.mxu0 0
          %1878 = vmatpush.bf16.msra.mxu0 0
          %1879 = vmatpush.bf16.msra.mxu0 0
          %1880 = vmatpush.bf16.msra.mxu0 %v1871
          %1881 = vmatmul.bf16.gmra.mxu0 %v1867
          %v1882 = vpop.f32.mrf.mxu0
          %v1883 = vadd.f32 0.0, %v1882
          %v1884 = vpop.f32.mrf.mxu0
          %1885 = vdwg.mxu0
          %v1886 = vadd.f32 %v1808, %v1883
          %1887 = vst.msk [vmem:[#allocation4] sm:$0xff] %vm1758, %v1886
          %1888 = vst.msk [vmem:[#allocation2] sm:$0xff] %vm1800, %v1782
          %v1889 = vld [vmem:[%s425] sm:$0x1]
          %v1890 = vld [vmem:[%s425 + $0x2] sm:$0x1]
          %v1891 = vld [vmem:[%s425 + $0x4] sm:$0x1]
          %v1892 = vld [vmem:[%s425 + $0x6] sm:$0x1]
          %v1893 = vld [vmem:[%s425 + $0x8] sm:$0x1]
          %v1894 = vld [vmem:[%s425 + $0xa] sm:$0x1]
          %v1895 = vld [vmem:[%s425 + $0xc] sm:$0x1]
          %v1896 = vld [vmem:[%s425 + $0xe] sm:$0x1]
          %v1897 = vld [vmem:[%s432] sm:$0x1]
          %v1898 = vld [vmem:[%s432 + $0x2] sm:$0x1]
          %v1899 = vld [vmem:[%s432 + $0x4] sm:$0x1]
          %v1900 = vld [vmem:[%s432 + $0x6] sm:$0x1]
          %v1901 = vld [vmem:[%s432 + $0x8] sm:$0x1]
          %v1902 = vld [vmem:[%s432 + $0xa] sm:$0x1]
          %v1903 = vld [vmem:[%s432 + $0xc] sm:$0x1]
          %v1904 = vld [vmem:[%s432 + $0xe] sm:$0x1]
          %v1905 = vld [vmem:[%s439] sm:$0x1]
          %v1906 = vld [vmem:[%s439 + $0x2] sm:$0x1]
          %v1907 = vld [vmem:[%s439 + $0x4] sm:$0x1]
          %v1908 = vld [vmem:[%s439 + $0x6] sm:$0x1]
          %v1909 = vld [vmem:[%s439 + $0x8] sm:$0x1]
          %v1910 = vld [vmem:[%s439 + $0xa] sm:$0x1]
          %v1911 = vld [vmem:[%s439 + $0xc] sm:$0x1]
          %v1912 = vld [vmem:[%s439 + $0xe] sm:$0x1]
          %1914 = vst [vmem:[#allocation1] ss:$4 sm:$0xff] %v1889
          %v1915 = vld.sshfl [vmem:[#allocation1] sm:$0xff pattern:$0x73625140]
          %s1918 = scalar_lea.vmem [#allocation1], 32
          %1919 = vst [vmem:[%s1918] ss:$4 sm:$0xff] %v1890
          %v1920 = vld.sshfl [vmem:[#allocation1 + $0x20] sm:$0xff pattern:$0x73625140]
          %1923 = vst [vmem:[#allocation1] ss:$4 sm:$0xff] %v1891
          %v1924 = vld.sshfl [vmem:[#allocation1] sm:$0xff pattern:$0x73625140]
          %1927 = vst [vmem:[%s1918] ss:$4 sm:$0xff] %v1892
          %v1928 = vld.sshfl [vmem:[#allocation1 + $0x20] sm:$0xff pattern:$0x73625140]
          %1931 = vst [vmem:[#allocation1] ss:$4 sm:$0xff] %v1893
          %v1932 = vld.sshfl [vmem:[#allocation1] sm:$0xff pattern:$0x73625140]
          %1935 = vst [vmem:[%s1918] ss:$4 sm:$0xff] %v1894
          %v1936 = vld.sshfl [vmem:[#allocation1 + $0x20] sm:$0xff pattern:$0x73625140]
          %1939 = vst [vmem:[#allocation1] ss:$4 sm:$0xff] %v1895
          %v1940 = vld.sshfl [vmem:[#allocation1] sm:$0xff pattern:$0x73625140]
          %1943 = vst [vmem:[%s1918] ss:$4 sm:$0xff] %v1896
          %v1944 = vld.sshfl [vmem:[#allocation1 + $0x20] sm:$0xff pattern:$0x73625140]
          %v1946 = vunpack.c.l.b16 %v1915
          %v1947 = vunpack.c.l.b16 %v1920
          %v1948 = vunpack.c.l.b16 %v1924
          %v1949 = vunpack.c.l.b16 %v1928
          %v1950 = vunpack.c.l.b16 %v1932
          %v1951 = vunpack.c.l.b16 %v1936
          %v1952 = vunpack.c.l.b16 %v1940
          %v1953 = vunpack.c.l.b16 %v1944
          %v1954 = vrot.slane %v1946, 1
          %v1955 = vsel %vm1681, %v1947, %v1954
          %v1956 = vrot.slane %v1948, 7
          %v1957 = vsel %vm1684, %v1956, %v1955
          %v1958 = vrot.slane %v1949, 6
          %v1959 = vsel %vm1687, %v1958, %v1957
          %v1960 = vrot.slane %v1950, 5
          %v1961 = vsel %vm1690, %v1960, %v1959
          %v1962 = vrot.slane %v1951, 4
          %v1963 = vsel %vm1693, %v1962, %v1961
          %v1964 = vrot.slane %v1952, 3
          %v1965 = vsel %vm1696, %v1964, %v1963
          %v1966 = vrot.slane %v1953, 2
          %v1967 = vsel %vm1699, %v1966, %v1965
          %v1968 = vpack.c.b16 %v1967, %v1967
          %1970 = vst [vmem:[#allocation1] ss:$4 sm:$0xff] %v1897
          %v1971 = vld.sshfl [vmem:[#allocation1] sm:$0xff pattern:$0x73625140]
          %s1974 = scalar_lea.vmem [#allocation1], 32
          %1975 = vst [vmem:[%s1974] ss:$4 sm:$0xff] %v1898
          %v1976 = vld.sshfl [vmem:[#allocation1 + $0x20] sm:$0xff pattern:$0x73625140]
          %1979 = vst [vmem:[#allocation1] ss:$4 sm:$0xff] %v1899
          %v1980 = vld.sshfl [vmem:[#allocation1] sm:$0xff pattern:$0x73625140]
          %1983 = vst [vmem:[%s1974] ss:$4 sm:$0xff] %v1900
          %v1984 = vld.sshfl [vmem:[#allocation1 + $0x20] sm:$0xff pattern:$0x73625140]
          %1987 = vst [vmem:[#allocation1] ss:$4 sm:$0xff] %v1901
          %v1988 = vld.sshfl [vmem:[#allocation1] sm:$0xff pattern:$0x73625140]
          %1991 = vst [vmem:[%s1974] ss:$4 sm:$0xff] %v1902
          %v1992 = vld.sshfl [vmem:[#allocation1 + $0x20] sm:$0xff pattern:$0x73625140]
          %1995 = vst [vmem:[#allocation1] ss:$4 sm:$0xff] %v1903
          %v1996 = vld.sshfl [vmem:[#allocation1] sm:$0xff pattern:$0x73625140]
          %1999 = vst [vmem:[%s1974] ss:$4 sm:$0xff] %v1904
          %v2000 = vld.sshfl [vmem:[#allocation1 + $0x20] sm:$0xff pattern:$0x73625140]
          %v2002 = vunpack.c.l.b16 %v1971
          %v2003 = vunpack.c.l.b16 %v1976
          %v2004 = vunpack.c.l.b16 %v1980
          %v2005 = vunpack.c.l.b16 %v1984
          %v2006 = vunpack.c.l.b16 %v1988
          %v2007 = vunpack.c.l.b16 %v1992
          %v2008 = vunpack.c.l.b16 %v1996
          %v2009 = vunpack.c.l.b16 %v2000
          %v2010 = vrot.slane %v2002, 1
          %v2011 = vsel %vm1681, %v2003, %v2010
          %v2012 = vrot.slane %v2004, 7
          %v2013 = vsel %vm1684, %v2012, %v2011
          %v2014 = vrot.slane %v2005, 6
          %v2015 = vsel %vm1687, %v2014, %v2013
          %v2016 = vrot.slane %v2006, 5
          %v2017 = vsel %vm1690, %v2016, %v2015
          %v2018 = vrot.slane %v2007, 4
          %v2019 = vsel %vm1693, %v2018, %v2017
          %v2020 = vrot.slane %v2008, 3
          %v2021 = vsel %vm1696, %v2020, %v2019
          %v2022 = vrot.slane %v2009, 2
          %v2023 = vsel %vm1699, %v2022, %v2021
          %v2024 = vpack.c.b16 %v2023, %v2023
          %v2026 = vsel %vm1758, %v1968, 0
          %v2029 = vsel %vm1758, %v2024, 0
          %2031 = vmatpush.bf16.xpose.msra.mxu0 0
          %2032 = vmatpush.bf16.xpose.msra.mxu0 0
          %2033 = vmatpush.bf16.xpose.msra.mxu0 0
          %2034 = vmatpush.bf16.xpose.msra.mxu0 0
          %2035 = vmatpush.bf16.xpose.msra.mxu0 0
          %2036 = vmatpush.bf16.xpose.msra.mxu0 0
          %2037 = vmatpush.bf16.xpose.msra.mxu0 0
          %2038 = vmatpush.bf16.xpose.msra.mxu0 %v2029
          %2039 = vmatmul.bf16.gmra.mxu0 %v2026
          %v2040 = vpop.f32.mrf.mxu0
          %v2041 = vadd.f32 0.0, %v2040
          %v2042 = vpop.f32.mrf.mxu0
          %2043 = vdwg.mxu0
          %s2044 = scalar_lea.vmem [#allocation2], 8
          %v2045 = vld [vmem:[%s2044] sm:$0xff]
          %v2046 = vsel %vm1758, %v2041, -inf
          %2047 = vmax.xlane.f32.xlu0 %v2046
          %v2048 = vpop.xlane.xlu0 %2047
          %v2049 = vmax.f32 %v2045, %v2048
          %v2050 = vsub.f32 %v2045, %v2049
          %v2051 = vmul.f32 %v2050, 1.442695
          %v2052 = vpow.pop %v2051
          %2054 = vset.pattern.permute.xlu0 0
          %2055 = vperm.xlu0 %2054, %v2049
          %v2056 = vpop.permute.xlu0 %2055
          %v2058 = vsub.f32 %v2041, %v2056
          %v2059 = vmul.f32 %v2058, 1.442695
          %v2060 = vpow.pop %v2059
          %s2061 = scalar_lea.vmem [#allocation3], 8
          %v2062 = vld [vmem:[%s2061] sm:$0xff]
          %v2063 = vmul.f32 %v2052, %v2062
          %v2064 = vsel %vm1758, %v2060, 0.0
          %2065 = vadd.xlane.f32.xlu0 %v2064
          %v2066 = vpop.xlane.xlu0 %2065
          %v2067 = vadd.f32 %v2063, %v2066
          %2068 = vst.msk [vmem:[%s2061] sm:$0xff] %vm1800, %v2067
          %v2069 = vld [vmem:[#allocation4] sm:$0xff]
          %2071 = vset.pattern.permute.xlu0 0
          %2072 = vperm.xlu0 %2071, %v2052
          %v2073 = vpop.permute.xlu0 %2072
          %v2075 = vmul.f32 %v2073, %v2069
          %v2076 = vpack.c.bf16 %v2060, %v2060
          %2078 = vst [vmem:[#allocation1] ss:$4 sm:$0xff] %v1905
          %v2079 = vld.sshfl [vmem:[#allocation1] sm:$0xff pattern:$0x73625140]
          %s2082 = scalar_lea.vmem [#allocation1], 32
          %2083 = vst [vmem:[%s2082] ss:$4 sm:$0xff] %v1906
          %v2084 = vld.sshfl [vmem:[#allocation1 + $0x20] sm:$0xff pattern:$0x73625140]
          %2087 = vst [vmem:[#allocation1] ss:$4 sm:$0xff] %v1907
          %v2088 = vld.sshfl [vmem:[#allocation1] sm:$0xff pattern:$0x73625140]
          %2091 = vst [vmem:[%s2082] ss:$4 sm:$0xff] %v1908
          %v2092 = vld.sshfl [vmem:[#allocation1 + $0x20] sm:$0xff pattern:$0x73625140]
          %2095 = vst [vmem:[#allocation1] ss:$4 sm:$0xff] %v1909
          %v2096 = vld.sshfl [vmem:[#allocation1] sm:$0xff pattern:$0x73625140]
          %2099 = vst [vmem:[%s2082] ss:$4 sm:$0xff] %v1910
          %v2100 = vld.sshfl [vmem:[#allocation1 + $0x20] sm:$0xff pattern:$0x73625140]
          %2103 = vst [vmem:[#allocation1] ss:$4 sm:$0xff] %v1911
          %v2104 = vld.sshfl [vmem:[#allocation1] sm:$0xff pattern:$0x73625140]
          %2107 = vst [vmem:[%s2082] ss:$4 sm:$0xff] %v1912
          %v2108 = vld.sshfl [vmem:[#allocation1 + $0x20] sm:$0xff pattern:$0x73625140]
          %v2110 = vunpack.c.l.b16 %v2079
          %v2111 = vunpack.c.l.b16 %v2084
          %v2112 = vunpack.c.l.b16 %v2088
          %v2113 = vunpack.c.l.b16 %v2092
          %v2114 = vunpack.c.l.b16 %v2096
          %v2115 = vunpack.c.l.b16 %v2100
          %v2116 = vunpack.c.l.b16 %v2104
          %v2117 = vunpack.c.l.b16 %v2108
          %v2118 = vrot.slane %v2110, 1
          %v2119 = vsel %vm1681, %v2111, %v2118
          %v2120 = vrot.slane %v2112, 7
          %v2121 = vsel %vm1684, %v2120, %v2119
          %v2122 = vrot.slane %v2113, 6
          %v2123 = vsel %vm1687, %v2122, %v2121
          %v2124 = vrot.slane %v2114, 5
          %v2125 = vsel %vm1690, %v2124, %v2123
          %v2126 = vrot.slane %v2115, 4
          %v2127 = vsel %vm1693, %v2126, %v2125
          %v2128 = vrot.slane %v2116, 3
          %v2129 = vsel %vm1696, %v2128, %v2127
          %v2130 = vrot.slane %v2117, 2
          %v2131 = vsel %vm1699, %v2130, %v2129
          %v2132 = vpack.c.b16 %v2131, %v2131
          %v2134 = vsel %vm1758, %v2076, 0
          %v2137 = vsel %vm1869, %v2132, 0
          %2139 = vmatpush.bf16.msra.mxu0 0
          %2140 = vmatpush.bf16.msra.mxu0 0
          %2141 = vmatpush.bf16.msra.mxu0 0
          %2142 = vmatpush.bf16.msra.mxu0 0
          %2143 = vmatpush.bf16.msra.mxu0 0
          %2144 = vmatpush.bf16.msra.mxu0 0
          %2145 = vmatpush.bf16.msra.mxu0 0
          %2146 = vmatpush.bf16.msra.mxu0 %v2137
          %2147 = vmatmul.bf16.gmra.mxu0 %v2134
          %v2148 = vpop.f32.mrf.mxu0
          %v2149 = vadd.f32 0.0, %v2148
          %v2150 = vpop.f32.mrf.mxu0
          %2151 = vdwg.mxu0
          %2153 = vrot.lane.b32.xlu0 %v2149, 8
          %v2154 = vpop.permute.xlu0 %2153
          %v2156 = vadd.f32 %v2075, %v2154
          %vm2157 = vcmask 130112
          %2158 = vst.msk [vmem:[#allocation4] sm:$0xff] %vm2157, %v2156
          %2159 = vst.msk [vmem:[%s2044] sm:$0xff] %vm1800, %v2049
          %v2160 = vld [vmem:[%s425] sm:$0x2]
          %v2161 = vld [vmem:[%s425 + $0x2] sm:$0x2]
          %v2162 = vld [vmem:[%s425 + $0x4] sm:$0x2]
          %v2163 = vld [vmem:[%s425 + $0x6] sm:$0x2]
          %v2164 = vld [vmem:[%s425 + $0x8] sm:$0x2]
          %v2165 = vld [vmem:[%s425 + $0xa] sm:$0x2]
          %v2166 = vld [vmem:[%s425 + $0xc] sm:$0x2]
          %v2167 = vld [vmem:[%s425 + $0xe] sm:$0x2]
          %v2168 = vld [vmem:[%s432] sm:$0x2]
          %v2169 = vld [vmem:[%s432 + $0x2] sm:$0x2]
          %v2170 = vld [vmem:[%s432 + $0x4] sm:$0x2]
          %v2171 = vld [vmem:[%s432 + $0x6] sm:$0x2]
          %v2172 = vld [vmem:[%s432 + $0x8] sm:$0x2]
          %v2173 = vld [vmem:[%s432 + $0xa] sm:$0x2]
          %v2174 = vld [vmem:[%s432 + $0xc] sm:$0x2]
          %v2175 = vld [vmem:[%s432 + $0xe] sm:$0x2]
          %v2176 = vld [vmem:[%s439] sm:$0x2]
          %v2177 = vld [vmem:[%s439 + $0x2] sm:$0x2]
          %v2178 = vld [vmem:[%s439 + $0x4] sm:$0x2]
          %v2179 = vld [vmem:[%s439 + $0x6] sm:$0x2]
          %v2180 = vld [vmem:[%s439 + $0x8] sm:$0x2]
          %v2181 = vld [vmem:[%s439 + $0xa] sm:$0x2]
          %v2182 = vld [vmem:[%s439 + $0xc] sm:$0x2]
          %v2183 = vld [vmem:[%s439 + $0xe] sm:$0x2]
          %2185 = vst [vmem:[#allocation1] ss:$4 sm:$0xff] %v2160
          %v2186 = vld.sshfl [vmem:[#allocation1] sm:$0xff pattern:$0x73625140]
          %s2189 = scalar_lea.vmem [#allocation1], 32
          %2190 = vst [vmem:[%s2189] ss:$4 sm:$0xff] %v2161
          %v2191 = vld.sshfl [vmem:[#allocation1 + $0x20] sm:$0xff pattern:$0x73625140]
          %2194 = vst [vmem:[#allocation1] ss:$4 sm:$0xff] %v2162
          %v2195 = vld.sshfl [vmem:[#allocation1] sm:$0xff pattern:$0x73625140]
          %2198 = vst [vmem:[%s2189] ss:$4 sm:$0xff] %v2163
          %v2199 = vld.sshfl [vmem:[#allocation1 + $0x20] sm:$0xff pattern:$0x73625140]
          %2202 = vst [vmem:[#allocation1] ss:$4 sm:$0xff] %v2164
          %v2203 = vld.sshfl [vmem:[#allocation1] sm:$0xff pattern:$0x73625140]
          %2206 = vst [vmem:[%s2189] ss:$4 sm:$0xff] %v2165
          %v2207 = vld.sshfl [vmem:[#allocation1 + $0x20] sm:$0xff pattern:$0x73625140]
          %2210 = vst [vmem:[#allocation1] ss:$4 sm:$0xff] %v2166
          %v2211 = vld.sshfl [vmem:[#allocation1] sm:$0xff pattern:$0x73625140]
          %2214 = vst [vmem:[%s2189] ss:$4 sm:$0xff] %v2167
          %v2215 = vld.sshfl [vmem:[#allocation1 + $0x20] sm:$0xff pattern:$0x73625140]
          %v2217 = vunpack.c.l.b16 %v2186
          %v2218 = vunpack.c.l.b16 %v2191
          %v2219 = vunpack.c.l.b16 %v2195
          %v2220 = vunpack.c.l.b16 %v2199
          %v2221 = vunpack.c.l.b16 %v2203
          %v2222 = vunpack.c.l.b16 %v2207
          %v2223 = vunpack.c.l.b16 %v2211
          %v2224 = vunpack.c.l.b16 %v2215
          %v2225 = vrot.slane %v2217, 2
          %v2226 = vrot.slane %v2218, 1
          %v2227 = vsel %vm1681, %v2226, %v2225
          %v2228 = vsel %vm1684, %v2219, %v2227
          %v2229 = vrot.slane %v2220, 7
          %v2230 = vsel %vm1687, %v2229, %v2228
          %v2231 = vrot.slane %v2221, 6
          %v2232 = vsel %vm1690, %v2231, %v2230
          %v2233 = vrot.slane %v2222, 5
          %v2234 = vsel %vm1693, %v2233, %v2232
          %v2235 = vrot.slane %v2223, 4
          %v2236 = vsel %vm1696, %v2235, %v2234
          %v2237 = vrot.slane %v2224, 3
          %v2238 = vsel %vm1699, %v2237, %v2236
          %v2239 = vpack.c.b16 %v2238, %v2238
          %2241 = vst [vmem:[#allocation1] ss:$4 sm:$0xff] %v2168
          %v2242 = vld.sshfl [vmem:[#allocation1] sm:$0xff pattern:$0x73625140]
          %s2245 = scalar_lea.vmem [#allocation1], 32
          %2246 = vst [vmem:[%s2245] ss:$4 sm:$0xff] %v2169
          %v2247 = vld.sshfl [vmem:[#allocation1 + $0x20] sm:$0xff pattern:$0x73625140]
          %2250 = vst [vmem:[#allocation1] ss:$4 sm:$0xff] %v2170
          %v2251 = vld.sshfl [vmem:[#allocation1] sm:$0xff pattern:$0x73625140]
          %2254 = vst [vmem:[%s2245] ss:$4 sm:$0xff] %v2171
          %v2255 = vld.sshfl [vmem:[#allocation1 + $0x20] sm:$0xff pattern:$0x73625140]
          %2258 = vst [vmem:[#allocation1] ss:$4 sm:$0xff] %v2172
          %v2259 = vld.sshfl [vmem:[#allocation1] sm:$0xff pattern:$0x73625140]
          %2262 = vst [vmem:[%s2245] ss:$4 sm:$0xff] %v2173
          %v2263 = vld.sshfl [vmem:[#allocation1 + $0x20] sm:$0xff pattern:$0x73625140]
          %2266 = vst [vmem:[#allocation1] ss:$4 sm:$0xff] %v2174
          %v2267 = vld.sshfl [vmem:[#allocation1] sm:$0xff pattern:$0x73625140]
          %2270 = vst [vmem:[%s2245] ss:$4 sm:$0xff] %v2175
          %v2271 = vld.sshfl [vmem:[#allocation1 + $0x20] sm:$0xff pattern:$0x73625140]
          %v2273 = vunpack.c.l.b16 %v2242
          %v2274 = vunpack.c.l.b16 %v2247
          %v2275 = vunpack.c.l.b16 %v2251
          %v2276 = vunpack.c.l.b16 %v2255
          %v2277 = vunpack.c.l.b16 %v2259
          %v2278 = vunpack.c.l.b16 %v2263
          %v2279 = vunpack.c.l.b16 %v2267
          %v2280 = vunpack.c.l.b16 %v2271
          %v2281 = vrot.slane %v2273, 2
          %v2282 = vrot.slane %v2274, 1
          %v2283 = vsel %vm1681, %v2282, %v2281
          %v2284 = vsel %vm1684, %v2275, %v2283
          %v2285 = vrot.slane %v2276, 7
          %v2286 = vsel %vm1687, %v2285, %v2284
          %v2287 = vrot.slane %v2277, 6
          %v2288 = vsel %vm1690, %v2287, %v2286
          %v2289 = vrot.slane %v2278, 5
          %v2290 = vsel %vm1693, %v2289, %v2288
          %v2291 = vrot.slane %v2279, 4
          %v2292 = vsel %vm1696, %v2291, %v2290
          %v2293 = vrot.slane %v2280, 3
          %v2294 = vsel %vm1699, %v2293, %v2292
          %v2295 = vpack.c.b16 %v2294, %v2294
          %v2297 = vsel %vm1758, %v2239, 0
          %v2300 = vsel %vm1758, %v2295, 0
          %2302 = vmatpush.bf16.xpose.msra.mxu0 0
          %2303 = vmatpush.bf16.xpose.msra.mxu0 0
          %2304 = vmatpush.bf16.xpose.msra.mxu0 0
          %2305 = vmatpush.bf16.xpose.msra.mxu0 0
          %2306 = vmatpush.bf16.xpose.msra.mxu0 0
          %2307 = vmatpush.bf16.xpose.msra.mxu0 0
          %2308 = vmatpush.bf16.xpose.msra.mxu0 0
          %2309 = vmatpush.bf16.xpose.msra.mxu0 %v2300
          %2310 = vmatmul.bf16.gmra.mxu0 %v2297
          %v2311 = vpop.f32.mrf.mxu0
          %v2312 = vadd.f32 0.0, %v2311
          %v2313 = vpop.f32.mrf.mxu0
          %2314 = vdwg.mxu0
          %s2315 = scalar_lea.vmem [#allocation2], 16
          %v2316 = vld [vmem:[%s2315] sm:$0xff]
          %v2317 = vsel %vm1758, %v2312, -inf
          %2318 = vmax.xlane.f32.xlu0 %v2317
          %v2319 = vpop.xlane.xlu0 %2318
          %v2320 = vmax.f32 %v2316, %v2319
          %v2321 = vsub.f32 %v2316, %v2320
          %v2322 = vmul.f32 %v2321, 1.442695
          %v2323 = vpow.pop %v2322
          %2325 = vset.pattern.permute.xlu0 0
          %2326 = vperm.xlu0 %2325, %v2320
          %v2327 = vpop.permute.xlu0 %2326
          %v2329 = vsub.f32 %v2312, %v2327
          %v2330 = vmul.f32 %v2329, 1.442695
          %v2331 = vpow.pop %v2330
          %s2332 = scalar_lea.vmem [#allocation3], 16
          %v2333 = vld [vmem:[%s2332] sm:$0xff]
          %v2334 = vmul.f32 %v2323, %v2333
          %v2335 = vsel %vm1758, %v2331, 0.0
          %2336 = vadd.xlane.f32.xlu0 %v2335
          %v2337 = vpop.xlane.xlu0 %2336
          %v2338 = vadd.f32 %v2334, %v2337
          %2339 = vst.msk [vmem:[%s2332] sm:$0xff] %vm1800, %v2338
          %v2340 = vld [vmem:[#allocation4] sm:$0xff]
          %2342 = vset.pattern.permute.xlu0 0
          %2343 = vperm.xlu0 %2342, %v2323
          %v2344 = vpop.permute.xlu0 %2343
          %v2346 = vmul.f32 %v2344, %v2340
          %v2347 = vpack.c.bf16 %v2331, %v2331
          %2349 = vst [vmem:[#allocation1] ss:$4 sm:$0xff] %v2176
          %v2350 = vld.sshfl [vmem:[#allocation1] sm:$0xff pattern:$0x73625140]
          %s2353 = scalar_lea.vmem [#allocation1], 32
          %2354 = vst [vmem:[%s2353] ss:$4 sm:$0xff] %v2177
          %v2355 = vld.sshfl [vmem:[#allocation1 + $0x20] sm:$0xff pattern:$0x73625140]
          %2358 = vst [vmem:[#allocation1] ss:$4 sm:$0xff] %v2178
          %v2359 = vld.sshfl [vmem:[#allocation1] sm:$0xff pattern:$0x73625140]
          %2362 = vst [vmem:[%s2353] ss:$4 sm:$0xff] %v2179
          %v2363 = vld.sshfl [vmem:[#allocation1 + $0x20] sm:$0xff pattern:$0x73625140]
          %2366 = vst [vmem:[#allocation1] ss:$4 sm:$0xff] %v2180
          %v2367 = vld.sshfl [vmem:[#allocation1] sm:$0xff pattern:$0x73625140]
          %2370 = vst [vmem:[%s2353] ss:$4 sm:$0xff] %v2181
          %v2371 = vld.sshfl [vmem:[#allocation1 + $0x20] sm:$0xff pattern:$0x73625140]
          %2374 = vst [vmem:[#allocation1] ss:$4 sm:$0xff] %v2182
          %v2375 = vld.sshfl [vmem:[#allocation1] sm:$0xff pattern:$0x73625140]
          %2378 = vst [vmem:[%s2353] ss:$4 sm:$0xff] %v2183
          %v2379 = vld.sshfl [vmem:[#allocation1 + $0x20] sm:$0xff pattern:$0x73625140]
          %v2381 = vunpack.c.l.b16 %v2350
          %v2382 = vunpack.c.l.b16 %v2355
          %v2383 = vunpack.c.l.b16 %v2359
          %v2384 = vunpack.c.l.b16 %v2363
          %v2385 = vunpack.c.l.b16 %v2367
          %v2386 = vunpack.c.l.b16 %v2371
          %v2387 = vunpack.c.l.b16 %v2375
          %v2388 = vunpack.c.l.b16 %v2379
          %v2389 = vrot.slane %v2381, 2
          %v2390 = vrot.slane %v2382, 1
          %v2391 = vsel %vm1681, %v2390, %v2389
          %v2392 = vsel %vm1684, %v2383, %v2391
          %v2393 = vrot.slane %v2384, 7
          %v2394 = vsel %vm1687, %v2393, %v2392
          %v2395 = vrot.slane %v2385, 6
          %v2396 = vsel %vm1690, %v2395, %v2394
          %v2397 = vrot.slane %v2386, 5
          %v2398 = vsel %vm1693, %v2397, %v2396
          %v2399 = vrot.slane %v2387, 4
          %v2400 = vsel %vm1696, %v2399, %v2398
          %v2401 = vrot.slane %v2388, 3
          %v2402 = vsel %vm1699, %v2401, %v2400
          %v2403 = vpack.c.b16 %v2402, %v2402
          %v2405 = vsel %vm1758, %v2347, 0
          %v2408 = vsel %vm1869, %v2403, 0
          %2410 = vmatpush.bf16.msra.mxu0 0
          %2411 = vmatpush.bf16.msra.mxu0 0
          %2412 = vmatpush.bf16.msra.mxu0 0
          %2413 = vmatpush.bf16.msra.mxu0 0
          %2414 = vmatpush.bf16.msra.mxu0 0
          %2415 = vmatpush.bf16.msra.mxu0 0
          %2416 = vmatpush.bf16.msra.mxu0 0
          %2417 = vmatpush.bf16.msra.mxu0 %v2408
          %2418 = vmatmul.bf16.gmra.mxu0 %v2405
          %v2419 = vpop.f32.mrf.mxu0
          %v2420 = vadd.f32 0.0, %v2419
          %v2421 = vpop.f32.mrf.mxu0
          %2422 = vdwg.mxu0
          %2424 = vrot.lane.b32.xlu0 %v2420, 16
          %v2425 = vpop.permute.xlu0 %2424
          %v2427 = vadd.f32 %v2346, %v2425
          %vm2428 = vcmask 195712
          %2429 = vst.msk [vmem:[#allocation4] sm:$0xff] %vm2428, %v2427
          %2430 = vst.msk [vmem:[%s2315] sm:$0xff] %vm1800, %v2320
          %v2431 = vld [vmem:[%s425] sm:$0x2]
          %v2432 = vld [vmem:[%s425 + $0x2] sm:$0x2]
          %v2433 = vld [vmem:[%s425 + $0x4] sm:$0x2]
          %v2434 = vld [vmem:[%s425 + $0x6] sm:$0x2]
          %v2435 = vld [vmem:[%s425 + $0x8] sm:$0x2]
          %v2436 = vld [vmem:[%s425 + $0xa] sm:$0x2]
          %v2437 = vld [vmem:[%s425 + $0xc] sm:$0x2]
          %v2438 = vld [vmem:[%s425 + $0xe] sm:$0x2]
          %v2439 = vld [vmem:[%s432] sm:$0x2]
          %v2440 = vld [vmem:[%s432 + $0x2] sm:$0x2]
          %v2441 = vld [vmem:[%s432 + $0x4] sm:$0x2]
          %v2442 = vld [vmem:[%s432 + $0x6] sm:$0x2]
          %v2443 = vld [vmem:[%s432 + $0x8] sm:$0x2]
          %v2444 = vld [vmem:[%s432 + $0xa] sm:$0x2]
          %v2445 = vld [vmem:[%s432 + $0xc] sm:$0x2]
          %v2446 = vld [vmem:[%s432 + $0xe] sm:$0x2]
          %v2447 = vld [vmem:[%s439] sm:$0x2]
          %v2448 = vld [vmem:[%s439 + $0x2] sm:$0x2]
          %v2449 = vld [vmem:[%s439 + $0x4] sm:$0x2]
          %v2450 = vld [vmem:[%s439 + $0x6] sm:$0x2]
          %v2451 = vld [vmem:[%s439 + $0x8] sm:$0x2]
          %v2452 = vld [vmem:[%s439 + $0xa] sm:$0x2]
          %v2453 = vld [vmem:[%s439 + $0xc] sm:$0x2]
          %v2454 = vld [vmem:[%s439 + $0xe] sm:$0x2]
          %2456 = vst [vmem:[#allocation1] ss:$4 sm:$0xff] %v2431
          %v2457 = vld.sshfl [vmem:[#allocation1] sm:$0xff pattern:$0x73625140]
          %s2460 = scalar_lea.vmem [#allocation1], 32
          %2461 = vst [vmem:[%s2460] ss:$4 sm:$0xff] %v2432
          %v2462 = vld.sshfl [vmem:[#allocation1 + $0x20] sm:$0xff pattern:$0x73625140]
          %2465 = vst [vmem:[#allocation1] ss:$4 sm:$0xff] %v2433
          %v2466 = vld.sshfl [vmem:[#allocation1] sm:$0xff pattern:$0x73625140]
          %2469 = vst [vmem:[%s2460] ss:$4 sm:$0xff] %v2434
          %v2470 = vld.sshfl [vmem:[#allocation1 + $0x20] sm:$0xff pattern:$0x73625140]
          %2473 = vst [vmem:[#allocation1] ss:$4 sm:$0xff] %v2435
          %v2474 = vld.sshfl [vmem:[#allocation1] sm:$0xff pattern:$0x73625140]
          %2477 = vst [vmem:[%s2460] ss:$4 sm:$0xff] %v2436
          %v2478 = vld.sshfl [vmem:[#allocation1 + $0x20] sm:$0xff pattern:$0x73625140]
          %2481 = vst [vmem:[#allocation1] ss:$4 sm:$0xff] %v2437
          %v2482 = vld.sshfl [vmem:[#allocation1] sm:$0xff pattern:$0x73625140]
          %2485 = vst [vmem:[%s2460] ss:$4 sm:$0xff] %v2438
          %v2486 = vld.sshfl [vmem:[#allocation1 + $0x20] sm:$0xff pattern:$0x73625140]
          %v2488 = vunpack.c.l.b16 %v2457
          %v2489 = vunpack.c.l.b16 %v2462
          %v2490 = vunpack.c.l.b16 %v2466
          %v2491 = vunpack.c.l.b16 %v2470
          %v2492 = vunpack.c.l.b16 %v2474
          %v2493 = vunpack.c.l.b16 %v2478
          %v2494 = vunpack.c.l.b16 %v2482
          %v2495 = vunpack.c.l.b16 %v2486
          %v2496 = vrot.slane %v2488, 3
          %v2497 = vrot.slane %v2489, 2
          %v2498 = vsel %vm1681, %v2497, %v2496
          %v2499 = vrot.slane %v2490, 1
          %v2500 = vsel %vm1684, %v2499, %v2498
          %v2501 = vsel %vm1687, %v2491, %v2500
          %v2502 = vrot.slane %v2492, 7
          %v2503 = vsel %vm1690, %v2502, %v2501
          %v2504 = vrot.slane %v2493, 6
          %v2505 = vsel %vm1693, %v2504, %v2503
          %v2506 = vrot.slane %v2494, 5
          %v2507 = vsel %vm1696, %v2506, %v2505
          %v2508 = vrot.slane %v2495, 4
          %v2509 = vsel %vm1699, %v2508, %v2507
          %v2510 = vpack.c.b16 %v2509, %v2509
          %2512 = vst [vmem:[#allocation1] ss:$4 sm:$0xff] %v2439
          %v2513 = vld.sshfl [vmem:[#allocation1] sm:$0xff pattern:$0x73625140]
          %s2516 = scalar_lea.vmem [#allocation1], 32
          %2517 = vst [vmem:[%s2516] ss:$4 sm:$0xff] %v2440
          %v2518 = vld.sshfl [vmem:[#allocation1 + $0x20] sm:$0xff pattern:$0x73625140]
          %2521 = vst [vmem:[#allocation1] ss:$4 sm:$0xff] %v2441
          %v2522 = vld.sshfl [vmem:[#allocation1] sm:$0xff pattern:$0x73625140]
          %2525 = vst [vmem:[%s2516] ss:$4 sm:$0xff] %v2442
          %v2526 = vld.sshfl [vmem:[#allocation1 + $0x20] sm:$0xff pattern:$0x73625140]
          %2529 = vst [vmem:[#allocation1] ss:$4 sm:$0xff] %v2443
          %v2530 = vld.sshfl [vmem:[#allocation1] sm:$0xff pattern:$0x73625140]
          %2533 = vst [vmem:[%s2516] ss:$4 sm:$0xff] %v2444
          %v2534 = vld.sshfl [vmem:[#allocation1 + $0x20] sm:$0xff pattern:$0x73625140]
          %2537 = vst [vmem:[#allocation1] ss:$4 sm:$0xff] %v2445
          %v2538 = vld.sshfl [vmem:[#allocation1] sm:$0xff pattern:$0x73625140]
          %2541 = vst [vmem:[%s2516] ss:$4 sm:$0xff] %v2446
          %v2542 = vld.sshfl [vmem:[#allocation1 + $0x20] sm:$0xff pattern:$0x73625140]
          %v2544 = vunpack.c.l.b16 %v2513
          %v2545 = vunpack.c.l.b16 %v2518
          %v2546 = vunpack.c.l.b16 %v2522
          %v2547 = vunpack.c.l.b16 %v2526
          %v2548 = vunpack.c.l.b16 %v2530
          %v2549 = vunpack.c.l.b16 %v2534
          %v2550 = vunpack.c.l.b16 %v2538
          %v2551 = vunpack.c.l.b16 %v2542
          %v2552 = vrot.slane %v2544, 3
          %v2553 = vrot.slane %v2545, 2
          %v2554 = vsel %vm1681, %v2553, %v2552
          %v2555 = vrot.slane %v2546, 1
          %v2556 = vsel %vm1684, %v2555, %v2554
          %v2557 = vsel %vm1687, %v2547, %v2556
          %v2558 = vrot.slane %v2548, 7
          %v2559 = vsel %vm1690, %v2558, %v2557
          %v2560 = vrot.slane %v2549, 6
          %v2561 = vsel %vm1693, %v2560, %v2559
          %v2562 = vrot.slane %v2550, 5
          %v2563 = vsel %vm1696, %v2562, %v2561
          %v2564 = vrot.slane %v2551, 4
          %v2565 = vsel %vm1699, %v2564, %v2563
          %v2566 = vpack.c.b16 %v2565, %v2565
          %v2568 = vsel %vm1758, %v2510, 0
          %v2571 = vsel %vm1758, %v2566, 0
          %2573 = vmatpush.bf16.xpose.msra.mxu0 0
          %2574 = vmatpush.bf16.xpose.msra.mxu0 0
          %2575 = vmatpush.bf16.xpose.msra.mxu0 0
          %2576 = vmatpush.bf16.xpose.msra.mxu0 0
          %2577 = vmatpush.bf16.xpose.msra.mxu0 0
          %2578 = vmatpush.bf16.xpose.msra.mxu0 0
          %2579 = vmatpush.bf16.xpose.msra.mxu0 0
          %2580 = vmatpush.bf16.xpose.msra.mxu0 %v2571
          %2581 = vmatmul.bf16.gmra.mxu0 %v2568
          %v2582 = vpop.f32.mrf.mxu0
          %v2583 = vadd.f32 0.0, %v2582
          %v2584 = vpop.f32.mrf.mxu0
          %2585 = vdwg.mxu0
          %s2586 = scalar_lea.vmem [#allocation2], 24
          %v2587 = vld [vmem:[%s2586] sm:$0xff]
          %v2588 = vsel %vm1758, %v2583, -inf
          %2589 = vmax.xlane.f32.xlu0 %v2588
          %v2590 = vpop.xlane.xlu0 %2589
          %v2591 = vmax.f32 %v2587, %v2590
          %v2592 = vsub.f32 %v2587, %v2591
          %v2593 = vmul.f32 %v2592, 1.442695
          %v2594 = vpow.pop %v2593
          %2596 = vset.pattern.permute.xlu0 0
          %2597 = vperm.xlu0 %2596, %v2591
          %v2598 = vpop.permute.xlu0 %2597
          %v2600 = vsub.f32 %v2583, %v2598
          %v2601 = vmul.f32 %v2600, 1.442695
          %v2602 = vpow.pop %v2601
          %s2603 = scalar_lea.vmem [#allocation3], 24
          %v2604 = vld [vmem:[%s2603] sm:$0xff]
          %v2605 = vmul.f32 %v2594, %v2604
          %v2606 = vsel %vm1758, %v2602, 0.0
          %2607 = vadd.xlane.f32.xlu0 %v2606
          %v2608 = vpop.xlane.xlu0 %2607
          %v2609 = vadd.f32 %v2605, %v2608
          %2610 = vst.msk [vmem:[%s2603] sm:$0xff] %vm1800, %v2609
          %v2611 = vld [vmem:[#allocation4] sm:$0xff]
          %2613 = vset.pattern.permute.xlu0 0
          %2614 = vperm.xlu0 %2613, %v2594
          %v2615 = vpop.permute.xlu0 %2614
          %v2617 = vmul.f32 %v2615, %v2611
          %v2618 = vpack.c.bf16 %v2602, %v2602
          %2620 = vst [vmem:[#allocation1] ss:$4 sm:$0xff] %v2447
          %v2621 = vld.sshfl [vmem:[#allocation1] sm:$0xff pattern:$0x73625140]
          %s2624 = scalar_lea.vmem [#allocation1], 32
          %2625 = vst [vmem:[%s2624] ss:$4 sm:$0xff] %v2448
          %v2626 = vld.sshfl [vmem:[#allocation1 + $0x20] sm:$0xff pattern:$0x73625140]
          %2629 = vst [vmem:[#allocation1] ss:$4 sm:$0xff] %v2449
          %v2630 = vld.sshfl [vmem:[#allocation1] sm:$0xff pattern:$0x73625140]
          %2633 = vst [vmem:[%s2624] ss:$4 sm:$0xff] %v2450
          %v2634 = vld.sshfl [vmem:[#allocation1 + $0x20] sm:$0xff pattern:$0x73625140]
          %2637 = vst [vmem:[#allocation1] ss:$4 sm:$0xff] %v2451
          %v2638 = vld.sshfl [vmem:[#allocation1] sm:$0xff pattern:$0x73625140]
          %2641 = vst [vmem:[%s2624] ss:$4 sm:$0xff] %v2452
          %v2642 = vld.sshfl [vmem:[#allocation1 + $0x20] sm:$0xff pattern:$0x73625140]
          %2645 = vst [vmem:[#allocation1] ss:$4 sm:$0xff] %v2453
          %v2646 = vld.sshfl [vmem:[#allocation1] sm:$0xff pattern:$0x73625140]
          %2649 = vst [vmem:[%s2624] ss:$4 sm:$0xff] %v2454
          %v2650 = vld.sshfl [vmem:[#allocation1 + $0x20] sm:$0xff pattern:$0x73625140]
          %v2652 = vunpack.c.l.b16 %v2621
          %v2653 = vunpack.c.l.b16 %v2626
          %v2654 = vunpack.c.l.b16 %v2630
          %v2655 = vunpack.c.l.b16 %v2634
          %v2656 = vunpack.c.l.b16 %v2638
          %v2657 = vunpack.c.l.b16 %v2642
          %v2658 = vunpack.c.l.b16 %v2646
          %v2659 = vunpack.c.l.b16 %v2650
          %v2660 = vrot.slane %v2652, 3
          %v2661 = vrot.slane %v2653, 2
          %v2662 = vsel %vm1681, %v2661, %v2660
          %v2663 = vrot.slane %v2654, 1
          %v2664 = vsel %vm1684, %v2663, %v2662
          %v2665 = vsel %vm1687, %v2655, %v2664
          %v2666 = vrot.slane %v2656, 7
          %v2667 = vsel %vm1690, %v2666, %v2665
          %v2668 = vrot.slane %v2657, 6
          %v2669 = vsel %vm1693, %v2668, %v2667
          %v2670 = vrot.slane %v2658, 5
          %v2671 = vsel %vm1696, %v2670, %v2669
          %v2672 = vrot.slane %v2659, 4
          %v2673 = vsel %vm1699, %v2672, %v2671
          %v2674 = vpack.c.b16 %v2673, %v2673
          %v2676 = vsel %vm1758, %v2618, 0
          %v2679 = vsel %vm1869, %v2674, 0
          %2681 = vmatpush.bf16.msra.mxu0 0
          %2682 = vmatpush.bf16.msra.mxu0 0
          %2683 = vmatpush.bf16.msra.mxu0 0
          %2684 = vmatpush.bf16.msra.mxu0 0
          %2685 = vmatpush.bf16.msra.mxu0 0
          %2686 = vmatpush.bf16.msra.mxu0 0
          %2687 = vmatpush.bf16.msra.mxu0 0
          %2688 = vmatpush.bf16.msra.mxu0 %v2679
          %2689 = vmatmul.bf16.gmra.mxu0 %v2676
          %v2690 = vpop.f32.mrf.mxu0
          %v2691 = vadd.f32 0.0, %v2690
          %v2692 = vpop.f32.mrf.mxu0
          %2693 = vdwg.mxu0
          %2695 = vrot.lane.b32.xlu0 %v2691, 24
          %v2696 = vpop.permute.xlu0 %2695
          %v2698 = vadd.f32 %v2617, %v2696
          %vm2699 = vcmask 261312
          %2700 = vst.msk [vmem:[#allocation4] sm:$0xff] %vm2699, %v2698
          %2701 = vst.msk [vmem:[%s2586] sm:$0xff] %vm1800, %v2591
        $region167: #{causal_self_attention.4} parent=142 // pred_fallthru
          _
        %s2702 = sadd.s32 %s490, 8
        %s2703 = sadd.s32 %s489, 8
        %p2704 = scmp.ge.s32.totalorder %s2702, %s2703
        // Predicated region
        $region168: #{causal_self_attention.4} parent=142 // pred_check
          %p2705 = pneg %p2704
        $region169: #{causal_self_attention.4} parent=142 // pred_check_branch
          %2707 = sbr.rel (%p2705) target = $region171
        $region170: #{causal_self_attention.4} parent=142 // pred_region
          %v2708 = vld [vmem:[#allocation4] sm:$0xff]
          %v2709 = vld [vmem:[#allocation3] sm:$0xff]
          %v2710 = vrcp.pop %v2709
          %2712 = vset.pattern.permute.xlu0 0
          %2713 = vperm.xlu0 %2712, %v2710
          %v2714 = vpop.permute.xlu0 %2713
          %v2716 = vmul.f32 %v2708, %v2714
          %vm2717 = vcmask 64512
          %2718 = vst.msk [vmem:[#allocation4] sm:$0xff] %vm2717, %v2716
          %v2719 = vld [vmem:[#allocation4] sm:$0xff]
          %s2720 = scalar_lea.vmem [#allocation3], 8
          %v2721 = vld [vmem:[%s2720] sm:$0xff]
          %v2722 = vrcp.pop %v2721
          %2724 = vset.pattern.permute.xlu0 0
          %2725 = vperm.xlu0 %2724, %v2722
          %v2726 = vpop.permute.xlu0 %2725
          %v2728 = vmul.f32 %v2719, %v2726
          %vm2729 = vcmask 130112
          %2730 = vst.msk [vmem:[#allocation4] sm:$0xff] %vm2729, %v2728
          %v2731 = vld [vmem:[#allocation4] sm:$0xff]
          %s2732 = scalar_lea.vmem [#allocation3], 16
          %v2733 = vld [vmem:[%s2732] sm:$0xff]
          %v2734 = vrcp.pop %v2733
          %2736 = vset.pattern.permute.xlu0 0
          %2737 = vperm.xlu0 %2736, %v2734
          %v2738 = vpop.permute.xlu0 %2737
          %v2740 = vmul.f32 %v2731, %v2738
          %vm2741 = vcmask 195712
          %2742 = vst.msk [vmem:[#allocation4] sm:$0xff] %vm2741, %v2740
          %v2743 = vld [vmem:[#allocation4] sm:$0xff]
          %s2744 = scalar_lea.vmem [#allocation3], 24
          %v2745 = vld [vmem:[%s2744] sm:$0xff]
          %v2746 = vrcp.pop %v2745
          %2748 = vset.pattern.permute.xlu0 0
          %2749 = vperm.xlu0 %2748, %v2746
          %v2750 = vpop.permute.xlu0 %2749
          %v2752 = vmul.f32 %v2743, %v2750
          %vm2753 = vcmask 261312
          %2754 = vst.msk [vmem:[#allocation4] sm:$0xff] %vm2753, %v2752
          %v2755 = vld [vmem:[#allocation4] sm:$0xff]
          %v2756 = vpack.c.bf16 %v2755, %v2755
          %vm2757 = vcmask 257024
          %2758 = vst.msk [vmem:[%s484] sm:$0xf] %vm2757, %v2756
        $region171: #{causal_self_attention.4} parent=142 // pred_fallthru
          _
        %s2759 = sld [smem:[#allocation6 + %s23]]
        %p2760 = scmp.lt.s32.totalorder %s22, 1
        %s2761 = scalar_select %p2760, %s22, 1
        %p2762 = scmp.lt.s32.totalorder %s2759, 0
        %s2763 = scalar_select %p2762, %s2759, 0
        %s2764 = sadd.s32 %s2763, %s2761
        %s2765 = smul.addr %s2764, 4
        %s2766 = scalar_lea.vmem %s5, %s2765
        // Predicated region
        $region172: #{causal_self_attention.4} parent=142 // pred_check
          %p2767 = pneg %p142
        $region173: #{causal_self_attention.4} parent=142 // pred_check_branch
          %2769 = sbr.rel (%p2767) target = $region175
        $region174: #{causal_self_attention.4} parent=142 // pred_region
          %s2770 = sld [smem:[#allocation6 + %s23]]
        $region175: #{causal_self_attention.4} parent=142 // pred_fallthru
          _
      $region143: #{causal_self_attention.4} parent=5 // pred_fallthru
        _
      %p2771 = scmp.le.s32.totalorder 2, %s13
      // Predicated region
      $region176: #{causal_self_attention.4} parent=5 // pred_check
        %p2772 = pneg %p2771
      $region177: #{causal_self_attention.4} parent=5 // pred_check_branch
        %2774 = sbr.rel (%p2772) target = $region179
      $region178: #{causal_self_attention.4} parent=5 // pred_region
        %s2775 = ssub.s32 %s13, 2
        // Predicated region
        $region180: #{causal_self_attention.4} parent=178 // pred_check
          %p2776 = pneg %p148
        $region181: #{causal_self_attention.4} parent=178 // pred_check_branch
          %2778 = sbr.rel (%p2776) target = $region183
        $region182: #{causal_self_attention.4} parent=178 // pred_region
          %s2779 = sld [smem:[#allocation6 + %s25]]
          %p2780 = scmp.lt.s32.totalorder %s24, 1
          %s2781 = scalar_select %p2780, %s24, 1
          %p2782 = scmp.lt.s32.totalorder %s2779, 0
          %s2783 = scalar_select %p2782, %s2779, 0
          %s2784 = sadd.s32 %s2783, %s2781
          %s2785 = smul.addr %s2784, 4
          %s2786 = scalar_lea.vmem %s5, %s2785
        $region183: #{causal_self_attention.4} parent=178 // pred_fallthru
          _
      $region179: #{causal_self_attention.4} parent=5 // pred_fallthru
        _
    $region6: #{causal_self_attention.4} parent=1 // loop_footer
      %s17 = sadd.s32 1, %s13
    $region7: #{causal_self_attention.4} parent=1 // loop_footer_branch
      %12 = sbr.rel target = $region3
    $region8: #{causal_self_attention.4} parent=1 // loop_exit
      _

</llo_original>
